<compile_context>
chip_gen: v6e
topology: v6e:2x2x1
jax: 0.10.0
libtpu: 0.0.40
codegen_flags: <defaults>
</compile_context>

<pallas_src>
import functools

import jax
import jax.numpy as jnp
from jax.experimental import pallas as pl
from jax.experimental.pallas import tpu as pltpu

KERNEL_SIZES = (3, 5, 7)
NB = len(KERNEL_SIZES)
MAX_K = max(KERNEL_SIZES)
NTAP = MAX_K * MAX_K
PAD = MAX_K // 2
BN_EPS = 1e-5
N_ACC = 4          # independent accumulators in the 49-tap loop


def _msa_kernel(hh, ww, n_img,
                x_ref, w1t_ref, b1_ref, g1_ref, be1_ref,
                tapw_ref, dwb_ref, w2_ref, b2_ref, g2_ref, be2_ref,
                out_ref):
    """Whole-problem kernel (no grid): everything resident in VMEM.

    x_ref    : (C, N*HW)         NCHW input with batch*spatial folded onto lanes
    w1t_ref  : (3M, C)           fused 1x1 conv #1 weights (branch-major rows)
    tapw_ref : (49, 3M, N*HW)    depthwise taps pre-folded with boundary masks
    w2_ref   : (3C, 3M)          block-diagonal fused 1x1 conv #2 weights
    """
    f32 = jnp.float32
    hw = hh * ww
    nhw = n_img * hw
    c = x_ref.shape[0]
    r1 = w1t_ref.shape[0]          # 3*M
    r2 = w2_ref.shape[0]           # 3*C
    inv_cnt = 1.0 / float(nhw)

    x = x_ref[...].astype(f32)                                    # (C, NHW)

    # ---- stage 1: fused branch 1x1 convs — one whole-batch MXU matmul ------
    h1 = jnp.dot(w1t_ref[...], x, preferred_element_type=f32) + b1_ref[...]

    # ---- BatchNorm #1 (training batch stats, two-pass centered) + ReLU -----
    mean1 = jnp.sum(h1, axis=1, keepdims=True) * inv_cnt          # (3M, 1)
    d1 = h1 - mean1
    var1 = jnp.sum(d1 * d1, axis=1, keepdims=True) * inv_cnt
    scale1 = g1_ref[...] * jax.lax.rsqrt(var1 + BN_EPS)
    h1 = jnp.maximum(d1 * scale1 + be1_ref[...], 0.0)             # (3M, NHW)

    # ---- depthwise kxk for all branches via lane rolls + pre-folded taps ----
    accs = [jnp.zeros((r1, nhw), f32) for _ in range(N_ACC)]
    for i in range(MAX_K):
        for j in range(MAX_K):
            k = i * MAX_K + j
            off = (i - PAD) * ww + (j - PAD)
            rolled = h1 if off == 0 else pltpu.roll(
                h1, shift=(-off) % nhw, axis=1)
            accs[k % N_ACC] = accs[k % N_ACC] + rolled * tapw_ref[k]
    acc = (accs[0] + accs[1]) + (accs[2] + accs[3])
    acc = acc + dwb_ref[...]                                      # (3M, NHW)

    # ---- stage 2: fused (block-diagonal) 1x1 convs back to 3*C channels ----
    a = jnp.dot(w2_ref[...], acc, preferred_element_type=f32) + b2_ref[...]

    # ---- BatchNorm #2 + ReLU + sigmoid, sum branches, apply to x -----------
    mean2 = jnp.sum(a, axis=1, keepdims=True) * inv_cnt           # (3C, 1)
    d2 = a - mean2
    var2 = jnp.sum(d2 * d2, axis=1, keepdims=True) * inv_cnt
    scale2 = g2_ref[...] * jax.lax.rsqrt(var2 + BN_EPS)
    att = jax.nn.sigmoid(jnp.maximum(d2 * scale2 + be2_ref[...], 0.0))

    combined = att[0:c, :]
    for b in range(1, r2 // c):
        combined = combined + att[b * c:(b + 1) * c, :]
    out_ref[...] = (x * combined).astype(out_ref.dtype)


def lightweight_msa(x_nchw, params):
    """Wrapper: NCHW in / NCHW out, matching the torch module."""
    n, c, hh, ww = x_nchw.shape
    nb, _, m = params["w1"].shape
    hw = hh * ww
    nhw = n * hw

    # Fold batch onto lanes: (N, C, HW) -> (C, N*HW)  (tiny wrapper transpose).
    x_cn = jnp.transpose(x_nchw.reshape(n, c, hw), (1, 0, 2)).reshape(c, nhw)

    # Fused / transposed parameter layouts (rows are branch-major).
    w1t = jnp.transpose(params["w1"], (0, 2, 1)).reshape(nb * m, c)
    dw2 = jnp.transpose(params["dw"], (0, 3, 1, 2)).reshape(nb * m, NTAP)
    w2big = jnp.zeros((nb * c, nb * m), jnp.float32)
    for b in range(nb):
        w2big = w2big.at[b * c:(b + 1) * c, b * m:(b + 1) * m].set(params["w2"][b].T)

    col = lambda a: a.reshape(-1, 1).astype(jnp.float32)
    b1, g1, be1, dwb = (col(params["b1"]), col(params["g1"]),
                        col(params["be1"]), col(params["dwb"]))
    b2, g2, be2 = col(params["b2"]), col(params["g2"]), col(params["be2"])

    # Per-tap spatial boundary masks (49, HW), tiled N times along lanes and
    # pre-folded into the depthwise taps: tapw[k] = dw[:,k] (outer) mask[k].
    hh_idx = (jnp.arange(hw, dtype=jnp.int32) // ww).reshape(1, hw)
    ww_idx = (jnp.arange(hw, dtype=jnp.int32) % ww).reshape(1, hw)
    rows = []
    for i in range(MAX_K):
        for j in range(MAX_K):
            dh, dv = i - PAD, j - PAD
            rows.append(((hh_idx + dh >= 0) & (hh_idx + dh < hh) &
                         (ww_idx + dv >= 0) & (ww_idx + dv < ww)).astype(jnp.float32))
    masks = jnp.concatenate(rows, axis=0)                    # (49, HW)
    masks_tiled = jnp.tile(masks, (1, n))                    # (49, N*HW)
    tapw = dw2.T[:, :, None] * masks_tiled[:, None, :]       # (49, 3M, N*HW)

    kernel = functools.partial(_msa_kernel, hh, ww, n)
    vmem = pl.BlockSpec(memory_space=pltpu.MemorySpace.VMEM)
    # TODO(synk): for large N*H*W, tile over lane-blocks of the N*HW axis with a
    # "parallel" grid (dual-TC on v7x, pipelined HBM loads, tiles sized for
    # v7x's 64 MiB VMEM) and a two-pass / cross-tile-reduced BatchNorm; at this
    # test scale the whole problem fits comfortably in VMEM on one TensorCore.
    out_cn = pl.pallas_call(
        kernel,
        out_shape=jax.ShapeDtypeStruct((c, nhw), x_nchw.dtype),
        in_specs=[vmem] * 11,
        out_specs=vmem,
    )(x_cn, w1t.astype(jnp.float32), b1, g1, be1,
      tapw.astype(jnp.float32), dwb, w2big, b2, g2, be2)

    return jnp.transpose(out_cn.reshape(c, n, hw), (1, 0, 2)).reshape(n, c, hh, ww)


def reference(x_nchw, params):
    """Pure-JAX reference with identical math (for verification)."""
    n, c, hh, ww = x_nchw.shape
    m = params["w1"].shape[2]
    x2d = jnp.transpose(x_nchw, (0, 2, 3, 1)).reshape(-1, c).astype(jnp.float32)
    combined = jnp.zeros_like(x2d)
    hi = jax.lax.Precision.HIGHEST
    for b, ksize in enumerate(KERNEL_SIZES):
        h1 = jnp.dot(x2d, params["w1"][b], precision=hi) + params["b1"][b]
        mu, vr = h1.mean(0), jnp.mean((h1 - h1.mean(0)) ** 2, 0)
        h1 = (h1 - mu) * jax.lax.rsqrt(vr + BN_EPS) * params["g1"][b] + params["be1"][b]
        h1 = jnp.maximum(h1, 0.0).reshape(n, hh, ww, m)
        hp = jnp.pad(h1, ((0, 0), (PAD, PAD), (PAD, PAD), (0, 0)))
        acc = jnp.zeros((n, hh, ww, m), jnp.float32)
        off = (MAX_K - ksize) // 2
        for u in range(off, off + ksize):
            for v in range(off, off + ksize):
                acc = acc + params["dw"][b, u, v] * hp[:, u:u + hh, v:v + ww, :]
        acc = acc + params["dwb"][b]
        a = jnp.dot(acc.reshape(-1, m), params["w2"][b], precision=hi) + params["b2"][b]
        mu, vr = a.mean(0), jnp.mean((a - a.mean(0)) ** 2, 0)
        a = (a - mu) * jax.lax.rsqrt(vr + BN_EPS) * params["g2"][b] + params["be2"][b]
        combined = combined + jax.nn.sigmoid(jnp.maximum(a, 0.0))
    out = (x2d * combined).reshape(n, hh, ww, c)
    return jnp.transpose(out, (0, 3, 1, 2))


if __name__ == "__main__":
    N, C, H, W = 2, 32, 16, 16          # in_channels=32, reduction_ratio=16 -> mid=2
    RED = 16
    M = C // RED

    key = jax.random.PRNGKey(0)
    keys = jax.random.split(key, 12)
    x = jax.random.normal(keys[0], (N, C, H, W), jnp.float32)

    params = {
        "w1": 0.1 * jax.random.normal(keys[1], (NB, C, M), jnp.float32),
        "b1": 0.1 * jax.random.normal(keys[2], (NB, M), jnp.float32),
        "g1": 1.0 + 0.1 * jax.random.normal(keys[3], (NB, M), jnp.float32),
        "be1": 0.1 * jax.random.normal(keys[4], (NB, M), jnp.float32),
        "dwb": 0.1 * jax.random.normal(keys[6], (NB, M), jnp.float32),
        "w2": 0.1 * jax.random.normal(keys[7], (NB, M, C), jnp.float32),
        "b2": 0.1 * jax.random.normal(keys[8], (NB, C), jnp.float32),
        "g2": 1.0 + 0.1 * jax.random.normal(keys[9], (NB, C), jnp.float32),
        "be2": 0.1 * jax.random.normal(keys[10], (NB, C), jnp.float32),
    }
    # Depthwise weights for kernel sizes (3,5,7), stored zero-padded to 7x7
    # (zero taps over a 3-pad window reproduce the original kxk conv, pad k//2).
    dw = jnp.zeros((NB, MAX_K, MAX_K, M), jnp.float32)
    dkeys = jax.random.split(keys[5], NB)
    for b, k in enumerate(KERNEL_SIZES):
        o = (MAX_K - k) // 2
        filt = 0.2 * jax.random.normal(dkeys[b], (k, k, M), jnp.float32)
        dw = dw.at[b, o:o + k, o:o + k, :].set(filt)
    params["dw"] = dw

    out = jax.block_until_ready(lightweight_msa(x, params))
    ref = jax.block_until_ready(reference(x, params))

    assert out.shape == (N, C, H, W), out.shape
    err = float(jnp.max(jnp.abs(out - ref)))
    if err > 2e-2:
        raise AssertionError(f"kernel/reference mismatch, max abs err = {err}")
    print("KERNEL_OK")
</pallas_src>

<mosaic_0001>
module attributes {stable_mosaic.version = 11 : i64} {
  func.func @_msa_kernel(%arg0: memref<32x512xf32, #tpu.memory_space<vmem>>, %arg1: memref<6x32xf32, #tpu.memory_space<vmem>>, %arg2: memref<6x1xf32, #tpu.memory_space<vmem>>, %arg3: memref<6x1xf32, #tpu.memory_space<vmem>>, %arg4: memref<6x1xf32, #tpu.memory_space<vmem>>, %arg5: memref<49x6x512xf32, #tpu.memory_space<vmem>>, %arg6: memref<6x1xf32, #tpu.memory_space<vmem>>, %arg7: memref<96x6xf32, #tpu.memory_space<vmem>>, %arg8: memref<96x1xf32, #tpu.memory_space<vmem>>, %arg9: memref<96x1xf32, #tpu.memory_space<vmem>>, %arg10: memref<96x1xf32, #tpu.memory_space<vmem>>, %arg11: memref<32x512xf32, #tpu.memory_space<vmem>>) attributes {dimension_semantics = [], scalar_prefetch = 0 : i64, scratch_operands = 0 : i64, tpu.core_type = #tpu.core_type<tc>} {
    %c0 = arith.constant 0 : index
    %c0_0 = arith.constant 0 : index
    %0 = vector.load %arg0[%c0, %c0_0] : memref<32x512xf32, #tpu.memory_space<vmem>>, vector<32x512xf32>
    %c0_1 = arith.constant 0 : index
    %c0_2 = arith.constant 0 : index
    %1 = vector.load %arg1[%c0_1, %c0_2] : memref<6x32xf32, #tpu.memory_space<vmem>>, vector<6x32xf32>
    %cst = arith.constant dense<0.000000e+00> : vector<6x512xf32>
    %2 = tpu.matmul %1, %0, %cst {dimension_numbers = #tpu.dot_dimension_numbers<[1], [0], [0], [1], [0, 0, 1, 1], [], []>} : vector<6x32xf32>, vector<32x512xf32>, vector<6x512xf32> -> vector<6x512xf32>
    %c0_3 = arith.constant 0 : index
    %c0_4 = arith.constant 0 : index
    %3 = vector.load %arg2[%c0_3, %c0_4] : memref<6x1xf32, #tpu.memory_space<vmem>>, vector<6x1xf32>
    %4 = vector.broadcast %3 : vector<6x1xf32> to vector<6x512xf32>
    %5 = arith.addf %2, %4 : vector<6x512xf32>
    %cst_5 = arith.constant dense<0.000000e+00> : vector<6xf32>
    %6 = vector.multi_reduction <add>, %5, %cst_5 [1] : vector<6x512xf32> to vector<6xf32>
    %7 = vector.shape_cast %6 : vector<6xf32> to vector<6x1xf32>
    %cst_6 = arith.constant 0.001953125 : f32
    %8 = vector.broadcast %cst_6 : f32 to vector<6x1xf32>
    %9 = arith.mulf %7, %8 : vector<6x1xf32>
    %10 = vector.broadcast %9 : vector<6x1xf32> to vector<6x512xf32>
    %11 = arith.subf %5, %10 : vector<6x512xf32>
    %12 = arith.mulf %11, %11 : vector<6x512xf32>
    %cst_7 = arith.constant dense<0.000000e+00> : vector<6xf32>
    %13 = vector.multi_reduction <add>, %12, %cst_7 [1] : vector<6x512xf32> to vector<6xf32>
    %14 = vector.shape_cast %13 : vector<6xf32> to vector<6x1xf32>
    %cst_8 = arith.constant 0.001953125 : f32
    %15 = vector.broadcast %cst_8 : f32 to vector<6x1xf32>
    %16 = arith.mulf %14, %15 : vector<6x1xf32>
    %c0_9 = arith.constant 0 : index
    %c0_10 = arith.constant 0 : index
    %17 = vector.load %arg3[%c0_9, %c0_10] : memref<6x1xf32, #tpu.memory_space<vmem>>, vector<6x1xf32>
    %cst_11 = arith.constant 9.99999974E-6 : f32
    %18 = vector.broadcast %cst_11 : f32 to vector<6x1xf32>
    %19 = arith.addf %16, %18 : vector<6x1xf32>
    %20 = math.rsqrt %19 : vector<6x1xf32>
    %21 = arith.mulf %17, %20 : vector<6x1xf32>
    %22 = vector.broadcast %21 : vector<6x1xf32> to vector<6x512xf32>
    %23 = arith.mulf %11, %22 : vector<6x512xf32>
    %c0_12 = arith.constant 0 : index
    %c0_13 = arith.constant 0 : index
    %24 = vector.load %arg4[%c0_12, %c0_13] : memref<6x1xf32, #tpu.memory_space<vmem>>, vector<6x1xf32>
    %25 = vector.broadcast %24 : vector<6x1xf32> to vector<6x512xf32>
    %26 = arith.addf %23, %25 : vector<6x512xf32>
    %cst_14 = arith.constant 0.000000e+00 : f32
    %27 = vector.broadcast %cst_14 : f32 to vector<6x512xf32>
    %28 = arith.maximumf %26, %27 : vector<6x512xf32>
    %cst_15 = arith.constant 0.000000e+00 : f32
    %29 = vector.broadcast %cst_15 : f32 to vector<6x512xf32>
    %cst_16 = arith.constant 0.000000e+00 : f32
    %30 = vector.broadcast %cst_16 : f32 to vector<6x512xf32>
    %cst_17 = arith.constant 0.000000e+00 : f32
    %31 = vector.broadcast %cst_17 : f32 to vector<6x512xf32>
    %cst_18 = arith.constant 0.000000e+00 : f32
    %32 = vector.broadcast %cst_18 : f32 to vector<6x512xf32>
    %c51_i32 = arith.constant 51 : i32
    %33 = tpu.dynamic_rotate %28 by %c51_i32 dim 1 : vector<6x512xf32>, i32 -> vector<6x512xf32>
    %c0_19 = arith.constant 0 : index
    %c0_20 = arith.constant 0 : index
    %c0_21 = arith.constant 0 : index
    %34 = vector.load %arg5[%c0_19, %c0_20, %c0_21] : memref<49x6x512xf32, #tpu.memory_space<vmem>>, vector<1x6x512xf32>
    %35 = vector.shape_cast %34 : vector<1x6x512xf32> to vector<6x512xf32>
    %36 = arith.mulf %33, %35 : vector<6x512xf32>
    %37 = arith.addf %29, %36 : vector<6x512xf32>
    %c50_i32 = arith.constant 50 : i32
    %38 = tpu.dynamic_rotate %28 by %c50_i32 dim 1 : vector<6x512xf32>, i32 -> vector<6x512xf32>
    %c1 = arith.constant 1 : index
    %c0_22 = arith.constant 0 : index
    %c0_23 = arith.constant 0 : index
    %39 = vector.load %arg5[%c1, %c0_22, %c0_23] : memref<49x6x512xf32, #tpu.memory_space<vmem>>, vector<1x6x512xf32>
    %40 = vector.shape_cast %39 : vector<1x6x512xf32> to vector<6x512xf32>
    %41 = arith.mulf %38, %40 : vector<6x512xf32>
    %42 = arith.addf %30, %41 : vector<6x512xf32>
    %c49_i32 = arith.constant 49 : i32
    %43 = tpu.dynamic_rotate %28 by %c49_i32 dim 1 : vector<6x512xf32>, i32 -> vector<6x512xf32>
    %c2 = arith.constant 2 : index
    %c0_24 = arith.constant 0 : index
    %c0_25 = arith.constant 0 : index
    %44 = vector.load %arg5[%c2, %c0_24, %c0_25] : memref<49x6x512xf32, #tpu.memory_space<vmem>>, vector<1x6x512xf32>
    %45 = vector.shape_cast %44 : vector<1x6x512xf32> to vector<6x512xf32>
    %46 = arith.mulf %43, %45 : vector<6x512xf32>
    %47 = arith.addf %31, %46 : vector<6x512xf32>
    %c48_i32 = arith.constant 48 : i32
    %48 = tpu.dynamic_rotate %28 by %c48_i32 dim 1 : vector<6x512xf32>, i32 -> vector<6x512xf32>
    %c3 = arith.constant 3 : index
    %c0_26 = arith.constant 0 : index
    %c0_27 = arith.constant 0 : index
    %49 = vector.load %arg5[%c3, %c0_26, %c0_27] : memref<49x6x512xf32, #tpu.memory_space<vmem>>, vector<1x6x512xf32>
    %50 = vector.shape_cast %49 : vector<1x6x512xf32> to vector<6x512xf32>
    %51 = arith.mulf %48, %50 : vector<6x512xf32>
    %52 = arith.addf %32, %51 : vector<6x512xf32>
    %c47_i32 = arith.constant 47 : i32
    %53 = tpu.dynamic_rotate %28 by %c47_i32 dim 1 : vector<6x512xf32>, i32 -> vector<6x512xf32>
    %c4 = arith.constant 4 : index
    %c0_28 = arith.constant 0 : index
    %c0_29 = arith.constant 0 : index
    %54 = vector.load %arg5[%c4, %c0_28, %c0_29] : memref<49x6x512xf32, #tpu.memory_space<vmem>>, vector<1x6x512xf32>
    %55 = vector.shape_cast %54 : vector<1x6x512xf32> to vector<6x512xf32>
    %56 = arith.mulf %53, %55 : vector<6x512xf32>
    %57 = arith.addf %37, %56 : vector<6x512xf32>
    %c46_i32 = arith.constant 46 : i32
    %58 = tpu.dynamic_rotate %28 by %c46_i32 dim 1 : vector<6x512xf32>, i32 -> vector<6x512xf32>
    %c5 = arith.constant 5 : index
    %c0_30 = arith.constant 0 : index
    %c0_31 = arith.constant 0 : index
    %59 = vector.load %arg5[%c5, %c0_30, %c0_31] : memref<49x6x512xf32, #tpu.memory_space<vmem>>, vector<1x6x512xf32>
    %60 = vector.shape_cast %59 : vector<1x6x512xf32> to vector<6x512xf32>
    %61 = arith.mulf %58, %60 : vector<6x512xf32>
    %62 = arith.addf %42, %61 : vector<6x512xf32>
    %c45_i32 = arith.constant 45 : i32
    %63 = tpu.dynamic_rotate %28 by %c45_i32 dim 1 : vector<6x512xf32>, i32 -> vector<6x512xf32>
    %c6 = arith.constant 6 : index
    %c0_32 = arith.constant 0 : index
    %c0_33 = arith.constant 0 : index
    %64 = vector.load %arg5[%c6, %c0_32, %c0_33] : memref<49x6x512xf32, #tpu.memory_space<vmem>>, vector<1x6x512xf32>
    %65 = vector.shape_cast %64 : vector<1x6x512xf32> to vector<6x512xf32>
    %66 = arith.mulf %63, %65 : vector<6x512xf32>
    %67 = arith.addf %47, %66 : vector<6x512xf32>
    %c35_i32 = arith.constant 35 : i32
    %68 = tpu.dynamic_rotate %28 by %c35_i32 dim 1 : vector<6x512xf32>, i32 -> vector<6x512xf32>
    %c7 = arith.constant 7 : index
    %c0_34 = arith.constant 0 : index
    %c0_35 = arith.constant 0 : index
    %69 = vector.load %arg5[%c7, %c0_34, %c0_35] : memref<49x6x512xf32, #tpu.memory_space<vmem>>, vector<1x6x512xf32>
    %70 = vector.shape_cast %69 : vector<1x6x512xf32> to vector<6x512xf32>
    %71 = arith.mulf %68, %70 : vector<6x512xf32>
    %72 = arith.addf %52, %71 : vector<6x512xf32>
    %c34_i32 = arith.constant 34 : i32
    %73 = tpu.dynamic_rotate %28 by %c34_i32 dim 1 : vector<6x512xf32>, i32 -> vector<6x512xf32>
    %c8 = arith.constant 8 : index
    %c0_36 = arith.constant 0 : index
    %c0_37 = arith.constant 0 : index
    %74 = vector.load %arg5[%c8, %c0_36, %c0_37] : memref<49x6x512xf32, #tpu.memory_space<vmem>>, vector<1x6x512xf32>
    %75 = vector.shape_cast %74 : vector<1x6x512xf32> to vector<6x512xf32>
    %76 = arith.mulf %73, %75 : vector<6x512xf32>
    %77 = arith.addf %57, %76 : vector<6x512xf32>
    %c33_i32 = arith.constant 33 : i32
    %78 = tpu.dynamic_rotate %28 by %c33_i32 dim 1 : vector<6x512xf32>, i32 -> vector<6x512xf32>
    %c9 = arith.constant 9 : index
    %c0_38 = arith.constant 0 : index
    %c0_39 = arith.constant 0 : index
    %79 = vector.load %arg5[%c9, %c0_38, %c0_39] : memref<49x6x512xf32, #tpu.memory_space<vmem>>, vector<1x6x512xf32>
    %80 = vector.shape_cast %79 : vector<1x6x512xf32> to vector<6x512xf32>
    %81 = arith.mulf %78, %80 : vector<6x512xf32>
    %82 = arith.addf %62, %81 : vector<6x512xf32>
    %c32_i32 = arith.constant 32 : i32
    %83 = tpu.dynamic_rotate %28 by %c32_i32 dim 1 : vector<6x512xf32>, i32 -> vector<6x512xf32>
    %c10 = arith.constant 10 : index
    %c0_40 = arith.constant 0 : index
    %c0_41 = arith.constant 0 : index
    %84 = vector.load %arg5[%c10, %c0_40, %c0_41] : memref<49x6x512xf32, #tpu.memory_space<vmem>>, vector<1x6x512xf32>
    %85 = vector.shape_cast %84 : vector<1x6x512xf32> to vector<6x512xf32>
    %86 = arith.mulf %83, %85 : vector<6x512xf32>
    %87 = arith.addf %67, %86 : vector<6x512xf32>
    %c31_i32 = arith.constant 31 : i32
    %88 = tpu.dynamic_rotate %28 by %c31_i32 dim 1 : vector<6x512xf32>, i32 -> vector<6x512xf32>
    %c11 = arith.constant 11 : index
    %c0_42 = arith.constant 0 : index
    %c0_43 = arith.constant 0 : index
    %89 = vector.load %arg5[%c11, %c0_42, %c0_43] : memref<49x6x512xf32, #tpu.memory_space<vmem>>, vector<1x6x512xf32>
    %90 = vector.shape_cast %89 : vector<1x6x512xf32> to vector<6x512xf32>
    %91 = arith.mulf %88, %90 : vector<6x512xf32>
    %92 = arith.addf %72, %91 : vector<6x512xf32>
    %c30_i32 = arith.constant 30 : i32
    %93 = tpu.dynamic_rotate %28 by %c30_i32 dim 1 : vector<6x512xf32>, i32 -> vector<6x512xf32>
    %c12 = arith.constant 12 : index
    %c0_44 = arith.constant 0 : index
    %c0_45 = arith.constant 0 : index
    %94 = vector.load %arg5[%c12, %c0_44, %c0_45] : memref<49x6x512xf32, #tpu.memory_space<vmem>>, vector<1x6x512xf32>
    %95 = vector.shape_cast %94 : vector<1x6x512xf32> to vector<6x512xf32>
    %96 = arith.mulf %93, %95 : vector<6x512xf32>
    %97 = arith.addf %77, %96 : vector<6x512xf32>
    %c29_i32 = arith.constant 29 : i32
    %98 = tpu.dynamic_rotate %28 by %c29_i32 dim 1 : vector<6x512xf32>, i32 -> vector<6x512xf32>
    %c13 = arith.constant 13 : index
    %c0_46 = arith.constant 0 : index
    %c0_47 = arith.constant 0 : index
    %99 = vector.load %arg5[%c13, %c0_46, %c0_47] : memref<49x6x512xf32, #tpu.memory_space<vmem>>, vector<1x6x512xf32>
    %100 = vector.shape_cast %99 : vector<1x6x512xf32> to vector<6x512xf32>
    %101 = arith.mulf %98, %100 : vector<6x512xf32>
    %102 = arith.addf %82, %101 : vector<6x512xf32>
    %c19_i32 = arith.constant 19 : i32
    %103 = tpu.dynamic_rotate %28 by %c19_i32 dim 1 : vector<6x512xf32>, i32 -> vector<6x512xf32>
    %c14 = arith.constant 14 : index
    %c0_48 = arith.constant 0 : index
    %c0_49 = arith.constant 0 : index
    %104 = vector.load %arg5[%c14, %c0_48, %c0_49] : memref<49x6x512xf32, #tpu.memory_space<vmem>>, vector<1x6x512xf32>
    %105 = vector.shape_cast %104 : vector<1x6x512xf32> to vector<6x512xf32>
    %106 = arith.mulf %103, %105 : vector<6x512xf32>
    %107 = arith.addf %87, %106 : vector<6x512xf32>
    %c18_i32 = arith.constant 18 : i32
    %108 = tpu.dynamic_rotate %28 by %c18_i32 dim 1 : vector<6x512xf32>, i32 -> vector<6x512xf32>
    %c15 = arith.constant 15 : index
    %c0_50 = arith.constant 0 : index
    %c0_51 = arith.constant 0 : index
    %109 = vector.load %arg5[%c15, %c0_50, %c0_51] : memref<49x6x512xf32, #tpu.memory_space<vmem>>, vector<1x6x512xf32>
    %110 = vector.shape_cast %109 : vector<1x6x512xf32> to vector<6x512xf32>
    %111 = arith.mulf %108, %110 : vector<6x512xf32>
    %112 = arith.addf %92, %111 : vector<6x512xf32>
    %c17_i32 = arith.constant 17 : i32
    %113 = tpu.dynamic_rotate %28 by %c17_i32 dim 1 : vector<6x512xf32>, i32 -> vector<6x512xf32>
    %c16 = arith.constant 16 : index
    %c0_52 = arith.constant 0 : index
    %c0_53 = arith.constant 0 : index
    %114 = vector.load %arg5[%c16, %c0_52, %c0_53] : memref<49x6x512xf32, #tpu.memory_space<vmem>>, vector<1x6x512xf32>
    %115 = vector.shape_cast %114 : vector<1x6x512xf32> to vector<6x512xf32>
    %116 = arith.mulf %113, %115 : vector<6x512xf32>
    %117 = arith.addf %97, %116 : vector<6x512xf32>
    %c16_i32 = arith.constant 16 : i32
    %118 = tpu.dynamic_rotate %28 by %c16_i32 dim 1 : vector<6x512xf32>, i32 -> vector<6x512xf32>
    %c17 = arith.constant 17 : index
    %c0_54 = arith.constant 0 : index
    %c0_55 = arith.constant 0 : index
    %119 = vector.load %arg5[%c17, %c0_54, %c0_55] : memref<49x6x512xf32, #tpu.memory_space<vmem>>, vector<1x6x512xf32>
    %120 = vector.shape_cast %119 : vector<1x6x512xf32> to vector<6x512xf32>
    %121 = arith.mulf %118, %120 : vector<6x512xf32>
    %122 = arith.addf %102, %121 : vector<6x512xf32>
    %c15_i32 = arith.constant 15 : i32
    %123 = tpu.dynamic_rotate %28 by %c15_i32 dim 1 : vector<6x512xf32>, i32 -> vector<6x512xf32>
    %c18 = arith.constant 18 : index
    %c0_56 = arith.constant 0 : index
    %c0_57 = arith.constant 0 : index
    %124 = vector.load %arg5[%c18, %c0_56, %c0_57] : memref<49x6x512xf32, #tpu.memory_space<vmem>>, vector<1x6x512xf32>
    %125 = vector.shape_cast %124 : vector<1x6x512xf32> to vector<6x512xf32>
    %126 = arith.mulf %123, %125 : vector<6x512xf32>
    %127 = arith.addf %107, %126 : vector<6x512xf32>
    %c14_i32 = arith.constant 14 : i32
    %128 = tpu.dynamic_rotate %28 by %c14_i32 dim 1 : vector<6x512xf32>, i32 -> vector<6x512xf32>
    %c19 = arith.constant 19 : index
    %c0_58 = arith.constant 0 : index
    %c0_59 = arith.constant 0 : index
    %129 = vector.load %arg5[%c19, %c0_58, %c0_59] : memref<49x6x512xf32, #tpu.memory_space<vmem>>, vector<1x6x512xf32>
    %130 = vector.shape_cast %129 : vector<1x6x512xf32> to vector<6x512xf32>
    %131 = arith.mulf %128, %130 : vector<6x512xf32>
    %132 = arith.addf %112, %131 : vector<6x512xf32>
    %c13_i32 = arith.constant 13 : i32
    %133 = tpu.dynamic_rotate %28 by %c13_i32 dim 1 : vector<6x512xf32>, i32 -> vector<6x512xf32>
    %c20 = arith.constant 20 : index
    %c0_60 = arith.constant 0 : index
    %c0_61 = arith.constant 0 : index
    %134 = vector.load %arg5[%c20, %c0_60, %c0_61] : memref<49x6x512xf32, #tpu.memory_space<vmem>>, vector<1x6x512xf32>
    %135 = vector.shape_cast %134 : vector<1x6x512xf32> to vector<6x512xf32>
    %136 = arith.mulf %133, %135 : vector<6x512xf32>
    %137 = arith.addf %117, %136 : vector<6x512xf32>
    %c3_i32 = arith.constant 3 : i32
    %138 = tpu.dynamic_rotate %28 by %c3_i32 dim 1 : vector<6x512xf32>, i32 -> vector<6x512xf32>
    %c21 = arith.constant 21 : index
    %c0_62 = arith.constant 0 : index
    %c0_63 = arith.constant 0 : index
    %139 = vector.load %arg5[%c21, %c0_62, %c0_63] : memref<49x6x512xf32, #tpu.memory_space<vmem>>, vector<1x6x512xf32>
    %140 = vector.shape_cast %139 : vector<1x6x512xf32> to vector<6x512xf32>
    %141 = arith.mulf %138, %140 : vector<6x512xf32>
    %142 = arith.addf %122, %141 : vector<6x512xf32>
    %c2_i32 = arith.constant 2 : i32
    %143 = tpu.dynamic_rotate %28 by %c2_i32 dim 1 : vector<6x512xf32>, i32 -> vector<6x512xf32>
    %c22 = arith.constant 22 : index
    %c0_64 = arith.constant 0 : index
    %c0_65 = arith.constant 0 : index
    %144 = vector.load %arg5[%c22, %c0_64, %c0_65] : memref<49x6x512xf32, #tpu.memory_space<vmem>>, vector<1x6x512xf32>
    %145 = vector.shape_cast %144 : vector<1x6x512xf32> to vector<6x512xf32>
    %146 = arith.mulf %143, %145 : vector<6x512xf32>
    %147 = arith.addf %127, %146 : vector<6x512xf32>
    %c1_i32 = arith.constant 1 : i32
    %148 = tpu.dynamic_rotate %28 by %c1_i32 dim 1 : vector<6x512xf32>, i32 -> vector<6x512xf32>
    %c23 = arith.constant 23 : index
    %c0_66 = arith.constant 0 : index
    %c0_67 = arith.constant 0 : index
    %149 = vector.load %arg5[%c23, %c0_66, %c0_67] : memref<49x6x512xf32, #tpu.memory_space<vmem>>, vector<1x6x512xf32>
    %150 = vector.shape_cast %149 : vector<1x6x512xf32> to vector<6x512xf32>
    %151 = arith.mulf %148, %150 : vector<6x512xf32>
    %152 = arith.addf %132, %151 : vector<6x512xf32>
    %c24 = arith.constant 24 : index
    %c0_68 = arith.constant 0 : index
    %c0_69 = arith.constant 0 : index
    %153 = vector.load %arg5[%c24, %c0_68, %c0_69] : memref<49x6x512xf32, #tpu.memory_space<vmem>>, vector<1x6x512xf32>
    %154 = vector.shape_cast %153 : vector<1x6x512xf32> to vector<6x512xf32>
    %155 = arith.mulf %28, %154 : vector<6x512xf32>
    %156 = arith.addf %137, %155 : vector<6x512xf32>
    %c511_i32 = arith.constant 511 : i32
    %157 = tpu.dynamic_rotate %28 by %c511_i32 dim 1 : vector<6x512xf32>, i32 -> vector<6x512xf32>
    %c25 = arith.constant 25 : index
    %c0_70 = arith.constant 0 : index
    %c0_71 = arith.constant 0 : index
    %158 = vector.load %arg5[%c25, %c0_70, %c0_71] : memref<49x6x512xf32, #tpu.memory_space<vmem>>, vector<1x6x512xf32>
    %159 = vector.shape_cast %158 : vector<1x6x512xf32> to vector<6x512xf32>
    %160 = arith.mulf %157, %159 : vector<6x512xf32>
    %161 = arith.addf %142, %160 : vector<6x512xf32>
    %c510_i32 = arith.constant 510 : i32
    %162 = tpu.dynamic_rotate %28 by %c510_i32 dim 1 : vector<6x512xf32>, i32 -> vector<6x512xf32>
    %c26 = arith.constant 26 : index
    %c0_72 = arith.constant 0 : index
    %c0_73 = arith.constant 0 : index
    %163 = vector.load %arg5[%c26, %c0_72, %c0_73] : memref<49x6x512xf32, #tpu.memory_space<vmem>>, vector<1x6x512xf32>
    %164 = vector.shape_cast %163 : vector<1x6x512xf32> to vector<6x512xf32>
    %165 = arith.mulf %162, %164 : vector<6x512xf32>
    %166 = arith.addf %147, %165 : vector<6x512xf32>
    %c509_i32 = arith.constant 509 : i32
    %167 = tpu.dynamic_rotate %28 by %c509_i32 dim 1 : vector<6x512xf32>, i32 -> vector<6x512xf32>
    %c27 = arith.constant 27 : index
    %c0_74 = arith.constant 0 : index
    %c0_75 = arith.constant 0 : index
    %168 = vector.load %arg5[%c27, %c0_74, %c0_75] : memref<49x6x512xf32, #tpu.memory_space<vmem>>, vector<1x6x512xf32>
    %169 = vector.shape_cast %168 : vector<1x6x512xf32> to vector<6x512xf32>
    %170 = arith.mulf %167, %169 : vector<6x512xf32>
    %171 = arith.addf %152, %170 : vector<6x512xf32>
    %c499_i32 = arith.constant 499 : i32
    %172 = tpu.dynamic_rotate %28 by %c499_i32 dim 1 : vector<6x512xf32>, i32 -> vector<6x512xf32>
    %c28 = arith.constant 28 : index
    %c0_76 = arith.constant 0 : index
    %c0_77 = arith.constant 0 : index
    %173 = vector.load %arg5[%c28, %c0_76, %c0_77] : memref<49x6x512xf32, #tpu.memory_space<vmem>>, vector<1x6x512xf32>
    %174 = vector.shape_cast %173 : vector<1x6x512xf32> to vector<6x512xf32>
    %175 = arith.mulf %172, %174 : vector<6x512xf32>
    %176 = arith.addf %156, %175 : vector<6x512xf32>
    %c498_i32 = arith.constant 498 : i32
    %177 = tpu.dynamic_rotate %28 by %c498_i32 dim 1 : vector<6x512xf32>, i32 -> vector<6x512xf32>
    %c29 = arith.constant 29 : index
    %c0_78 = arith.constant 0 : index
    %c0_79 = arith.constant 0 : index
    %178 = vector.load %arg5[%c29, %c0_78, %c0_79] : memref<49x6x512xf32, #tpu.memory_space<vmem>>, vector<1x6x512xf32>
    %179 = vector.shape_cast %178 : vector<1x6x512xf32> to vector<6x512xf32>
    %180 = arith.mulf %177, %179 : vector<6x512xf32>
    %181 = arith.addf %161, %180 : vector<6x512xf32>
    %c497_i32 = arith.constant 497 : i32
    %182 = tpu.dynamic_rotate %28 by %c497_i32 dim 1 : vector<6x512xf32>, i32 -> vector<6x512xf32>
    %c30 = arith.constant 30 : index
    %c0_80 = arith.constant 0 : index
    %c0_81 = arith.constant 0 : index
    %183 = vector.load %arg5[%c30, %c0_80, %c0_81] : memref<49x6x512xf32, #tpu.memory_space<vmem>>, vector<1x6x512xf32>
    %184 = vector.shape_cast %183 : vector<1x6x512xf32> to vector<6x512xf32>
    %185 = arith.mulf %182, %184 : vector<6x512xf32>
    %186 = arith.addf %166, %185 : vector<6x512xf32>
    %c496_i32 = arith.constant 496 : i32
    %187 = tpu.dynamic_rotate %28 by %c496_i32 dim 1 : vector<6x512xf32>, i32 -> vector<6x512xf32>
    %c31 = arith.constant 31 : index
    %c0_82 = arith.constant 0 : index
    %c0_83 = arith.constant 0 : index
    %188 = vector.load %arg5[%c31, %c0_82, %c0_83] : memref<49x6x512xf32, #tpu.memory_space<vmem>>, vector<1x6x512xf32>
    %189 = vector.shape_cast %188 : vector<1x6x512xf32> to vector<6x512xf32>
    %190 = arith.mulf %187, %189 : vector<6x512xf32>
    %191 = arith.addf %171, %190 : vector<6x512xf32>
    %c495_i32 = arith.constant 495 : i32
    %192 = tpu.dynamic_rotate %28 by %c495_i32 dim 1 : vector<6x512xf32>, i32 -> vector<6x512xf32>
    %c32 = arith.constant 32 : index
    %c0_84 = arith.constant 0 : index
    %c0_85 = arith.constant 0 : index
    %193 = vector.load %arg5[%c32, %c0_84, %c0_85] : memref<49x6x512xf32, #tpu.memory_space<vmem>>, vector<1x6x512xf32>
    %194 = vector.shape_cast %193 : vector<1x6x512xf32> to vector<6x512xf32>
    %195 = arith.mulf %192, %194 : vector<6x512xf32>
    %196 = arith.addf %176, %195 : vector<6x512xf32>
    %c494_i32 = arith.constant 494 : i32
    %197 = tpu.dynamic_rotate %28 by %c494_i32 dim 1 : vector<6x512xf32>, i32 -> vector<6x512xf32>
    %c33 = arith.constant 33 : index
    %c0_86 = arith.constant 0 : index
    %c0_87 = arith.constant 0 : index
    %198 = vector.load %arg5[%c33, %c0_86, %c0_87] : memref<49x6x512xf32, #tpu.memory_space<vmem>>, vector<1x6x512xf32>
    %199 = vector.shape_cast %198 : vector<1x6x512xf32> to vector<6x512xf32>
    %200 = arith.mulf %197, %199 : vector<6x512xf32>
    %201 = arith.addf %181, %200 : vector<6x512xf32>
    %c493_i32 = arith.constant 493 : i32
    %202 = tpu.dynamic_rotate %28 by %c493_i32 dim 1 : vector<6x512xf32>, i32 -> vector<6x512xf32>
    %c34 = arith.constant 34 : index
    %c0_88 = arith.constant 0 : index
    %c0_89 = arith.constant 0 : index
    %203 = vector.load %arg5[%c34, %c0_88, %c0_89] : memref<49x6x512xf32, #tpu.memory_space<vmem>>, vector<1x6x512xf32>
    %204 = vector.shape_cast %203 : vector<1x6x512xf32> to vector<6x512xf32>
    %205 = arith.mulf %202, %204 : vector<6x512xf32>
    %206 = arith.addf %186, %205 : vector<6x512xf32>
    %c483_i32 = arith.constant 483 : i32
    %207 = tpu.dynamic_rotate %28 by %c483_i32 dim 1 : vector<6x512xf32>, i32 -> vector<6x512xf32>
    %c35 = arith.constant 35 : index
    %c0_90 = arith.constant 0 : index
    %c0_91 = arith.constant 0 : index
    %208 = vector.load %arg5[%c35, %c0_90, %c0_91] : memref<49x6x512xf32, #tpu.memory_space<vmem>>, vector<1x6x512xf32>
    %209 = vector.shape_cast %208 : vector<1x6x512xf32> to vector<6x512xf32>
    %210 = arith.mulf %207, %209 : vector<6x512xf32>
    %211 = arith.addf %191, %210 : vector<6x512xf32>
    %c482_i32 = arith.constant 482 : i32
    %212 = tpu.dynamic_rotate %28 by %c482_i32 dim 1 : vector<6x512xf32>, i32 -> vector<6x512xf32>
    %c36 = arith.constant 36 : index
    %c0_92 = arith.constant 0 : index
    %c0_93 = arith.constant 0 : index
    %213 = vector.load %arg5[%c36, %c0_92, %c0_93] : memref<49x6x512xf32, #tpu.memory_space<vmem>>, vector<1x6x512xf32>
    %214 = vector.shape_cast %213 : vector<1x6x512xf32> to vector<6x512xf32>
    %215 = arith.mulf %212, %214 : vector<6x512xf32>
    %216 = arith.addf %196, %215 : vector<6x512xf32>
    %c481_i32 = arith.constant 481 : i32
    %217 = tpu.dynamic_rotate %28 by %c481_i32 dim 1 : vector<6x512xf32>, i32 -> vector<6x512xf32>
    %c37 = arith.constant 37 : index
    %c0_94 = arith.constant 0 : index
    %c0_95 = arith.constant 0 : index
    %218 = vector.load %arg5[%c37, %c0_94, %c0_95] : memref<49x6x512xf32, #tpu.memory_space<vmem>>, vector<1x6x512xf32>
    %219 = vector.shape_cast %218 : vector<1x6x512xf32> to vector<6x512xf32>
    %220 = arith.mulf %217, %219 : vector<6x512xf32>
    %221 = arith.addf %201, %220 : vector<6x512xf32>
    %c480_i32 = arith.constant 480 : i32
    %222 = tpu.dynamic_rotate %28 by %c480_i32 dim 1 : vector<6x512xf32>, i32 -> vector<6x512xf32>
    %c38 = arith.constant 38 : index
    %c0_96 = arith.constant 0 : index
    %c0_97 = arith.constant 0 : index
    %223 = vector.load %arg5[%c38, %c0_96, %c0_97] : memref<49x6x512xf32, #tpu.memory_space<vmem>>, vector<1x6x512xf32>
    %224 = vector.shape_cast %223 : vector<1x6x512xf32> to vector<6x512xf32>
    %225 = arith.mulf %222, %224 : vector<6x512xf32>
    %226 = arith.addf %206, %225 : vector<6x512xf32>
    %c479_i32 = arith.constant 479 : i32
    %227 = tpu.dynamic_rotate %28 by %c479_i32 dim 1 : vector<6x512xf32>, i32 -> vector<6x512xf32>
    %c39 = arith.constant 39 : index
    %c0_98 = arith.constant 0 : index
    %c0_99 = arith.constant 0 : index
    %228 = vector.load %arg5[%c39, %c0_98, %c0_99] : memref<49x6x512xf32, #tpu.memory_space<vmem>>, vector<1x6x512xf32>
    %229 = vector.shape_cast %228 : vector<1x6x512xf32> to vector<6x512xf32>
    %230 = arith.mulf %227, %229 : vector<6x512xf32>
    %231 = arith.addf %211, %230 : vector<6x512xf32>
    %c478_i32 = arith.constant 478 : i32
    %232 = tpu.dynamic_rotate %28 by %c478_i32 dim 1 : vector<6x512xf32>, i32 -> vector<6x512xf32>
    %c40 = arith.constant 40 : index
    %c0_100 = arith.constant 0 : index
    %c0_101 = arith.constant 0 : index
    %233 = vector.load %arg5[%c40, %c0_100, %c0_101] : memref<49x6x512xf32, #tpu.memory_space<vmem>>, vector<1x6x512xf32>
    %234 = vector.shape_cast %233 : vector<1x6x512xf32> to vector<6x512xf32>
    %235 = arith.mulf %232, %234 : vector<6x512xf32>
    %236 = arith.addf %216, %235 : vector<6x512xf32>
    %c477_i32 = arith.constant 477 : i32
    %237 = tpu.dynamic_rotate %28 by %c477_i32 dim 1 : vector<6x512xf32>, i32 -> vector<6x512xf32>
    %c41 = arith.constant 41 : index
    %c0_102 = arith.constant 0 : index
    %c0_103 = arith.constant 0 : index
    %238 = vector.load %arg5[%c41, %c0_102, %c0_103] : memref<49x6x512xf32, #tpu.memory_space<vmem>>, vector<1x6x512xf32>
    %239 = vector.shape_cast %238 : vector<1x6x512xf32> to vector<6x512xf32>
    %240 = arith.mulf %237, %239 : vector<6x512xf32>
    %241 = arith.addf %221, %240 : vector<6x512xf32>
    %c467_i32 = arith.constant 467 : i32
    %242 = tpu.dynamic_rotate %28 by %c467_i32 dim 1 : vector<6x512xf32>, i32 -> vector<6x512xf32>
    %c42 = arith.constant 42 : index
    %c0_104 = arith.constant 0 : index
    %c0_105 = arith.constant 0 : index
    %243 = vector.load %arg5[%c42, %c0_104, %c0_105] : memref<49x6x512xf32, #tpu.memory_space<vmem>>, vector<1x6x512xf32>
    %244 = vector.shape_cast %243 : vector<1x6x512xf32> to vector<6x512xf32>
    %245 = arith.mulf %242, %244 : vector<6x512xf32>
    %246 = arith.addf %226, %245 : vector<6x512xf32>
    %c466_i32 = arith.constant 466 : i32
    %247 = tpu.dynamic_rotate %28 by %c466_i32 dim 1 : vector<6x512xf32>, i32 -> vector<6x512xf32>
    %c43 = arith.constant 43 : index
    %c0_106 = arith.constant 0 : index
    %c0_107 = arith.constant 0 : index
    %248 = vector.load %arg5[%c43, %c0_106, %c0_107] : memref<49x6x512xf32, #tpu.memory_space<vmem>>, vector<1x6x512xf32>
    %249 = vector.shape_cast %248 : vector<1x6x512xf32> to vector<6x512xf32>
    %250 = arith.mulf %247, %249 : vector<6x512xf32>
    %251 = arith.addf %231, %250 : vector<6x512xf32>
    %c465_i32 = arith.constant 465 : i32
    %252 = tpu.dynamic_rotate %28 by %c465_i32 dim 1 : vector<6x512xf32>, i32 -> vector<6x512xf32>
    %c44 = arith.constant 44 : index
    %c0_108 = arith.constant 0 : index
    %c0_109 = arith.constant 0 : index
    %253 = vector.load %arg5[%c44, %c0_108, %c0_109] : memref<49x6x512xf32, #tpu.memory_space<vmem>>, vector<1x6x512xf32>
    %254 = vector.shape_cast %253 : vector<1x6x512xf32> to vector<6x512xf32>
    %255 = arith.mulf %252, %254 : vector<6x512xf32>
    %256 = arith.addf %236, %255 : vector<6x512xf32>
    %c464_i32 = arith.constant 464 : i32
    %257 = tpu.dynamic_rotate %28 by %c464_i32 dim 1 : vector<6x512xf32>, i32 -> vector<6x512xf32>
    %c45 = arith.constant 45 : index
    %c0_110 = arith.constant 0 : index
    %c0_111 = arith.constant 0 : index
    %258 = vector.load %arg5[%c45, %c0_110, %c0_111] : memref<49x6x512xf32, #tpu.memory_space<vmem>>, vector<1x6x512xf32>
    %259 = vector.shape_cast %258 : vector<1x6x512xf32> to vector<6x512xf32>
    %260 = arith.mulf %257, %259 : vector<6x512xf32>
    %261 = arith.addf %241, %260 : vector<6x512xf32>
    %c463_i32 = arith.constant 463 : i32
    %262 = tpu.dynamic_rotate %28 by %c463_i32 dim 1 : vector<6x512xf32>, i32 -> vector<6x512xf32>
    %c46 = arith.constant 46 : index
    %c0_112 = arith.constant 0 : index
    %c0_113 = arith.constant 0 : index
    %263 = vector.load %arg5[%c46, %c0_112, %c0_113] : memref<49x6x512xf32, #tpu.memory_space<vmem>>, vector<1x6x512xf32>
    %264 = vector.shape_cast %263 : vector<1x6x512xf32> to vector<6x512xf32>
    %265 = arith.mulf %262, %264 : vector<6x512xf32>
    %266 = arith.addf %246, %265 : vector<6x512xf32>
    %c462_i32 = arith.constant 462 : i32
    %267 = tpu.dynamic_rotate %28 by %c462_i32 dim 1 : vector<6x512xf32>, i32 -> vector<6x512xf32>
    %c47 = arith.constant 47 : index
    %c0_114 = arith.constant 0 : index
    %c0_115 = arith.constant 0 : index
    %268 = vector.load %arg5[%c47, %c0_114, %c0_115] : memref<49x6x512xf32, #tpu.memory_space<vmem>>, vector<1x6x512xf32>
    %269 = vector.shape_cast %268 : vector<1x6x512xf32> to vector<6x512xf32>
    %270 = arith.mulf %267, %269 : vector<6x512xf32>
    %271 = arith.addf %251, %270 : vector<6x512xf32>
    %c461_i32 = arith.constant 461 : i32
    %272 = tpu.dynamic_rotate %28 by %c461_i32 dim 1 : vector<6x512xf32>, i32 -> vector<6x512xf32>
    %c48 = arith.constant 48 : index
    %c0_116 = arith.constant 0 : index
    %c0_117 = arith.constant 0 : index
    %273 = vector.load %arg5[%c48, %c0_116, %c0_117] : memref<49x6x512xf32, #tpu.memory_space<vmem>>, vector<1x6x512xf32>
    %274 = vector.shape_cast %273 : vector<1x6x512xf32> to vector<6x512xf32>
    %275 = arith.mulf %272, %274 : vector<6x512xf32>
    %276 = arith.addf %256, %275 : vector<6x512xf32>
    %277 = arith.addf %276, %261 : vector<6x512xf32>
    %278 = arith.addf %266, %271 : vector<6x512xf32>
    %279 = arith.addf %277, %278 : vector<6x512xf32>
    %c0_118 = arith.constant 0 : index
    %c0_119 = arith.constant 0 : index
    %280 = vector.load %arg6[%c0_118, %c0_119] : memref<6x1xf32, #tpu.memory_space<vmem>>, vector<6x1xf32>
    %281 = vector.broadcast %280 : vector<6x1xf32> to vector<6x512xf32>
    %282 = arith.addf %279, %281 : vector<6x512xf32>
    %c0_120 = arith.constant 0 : index
    %c0_121 = arith.constant 0 : index
    %283 = vector.load %arg7[%c0_120, %c0_121] : memref<96x6xf32, #tpu.memory_space<vmem>>, vector<96x6xf32>
    %cst_122 = arith.constant dense<0.000000e+00> : vector<96x512xf32>
    %284 = tpu.matmul %283, %282, %cst_122 {dimension_numbers = #tpu.dot_dimension_numbers<[1], [0], [0], [1], [0, 0, 1, 1], [], []>} : vector<96x6xf32>, vector<6x512xf32>, vector<96x512xf32> -> vector<96x512xf32>
    %c0_123 = arith.constant 0 : index
    %c0_124 = arith.constant 0 : index
    %285 = vector.load %arg8[%c0_123, %c0_124] : memref<96x1xf32, #tpu.memory_space<vmem>>, vector<96x1xf32>
    %286 = vector.broadcast %285 : vector<96x1xf32> to vector<96x512xf32>
    %287 = arith.addf %284, %286 : vector<96x512xf32>
    %cst_125 = arith.constant dense<0.000000e+00> : vector<96xf32>
    %288 = vector.multi_reduction <add>, %287, %cst_125 [1] : vector<96x512xf32> to vector<96xf32>
    %289 = vector.shape_cast %288 : vector<96xf32> to vector<96x1xf32>
    %cst_126 = arith.constant 0.001953125 : f32
    %290 = vector.broadcast %cst_126 : f32 to vector<96x1xf32>
    %291 = arith.mulf %289, %290 : vector<96x1xf32>
    %292 = vector.broadcast %291 : vector<96x1xf32> to vector<96x512xf32>
    %293 = arith.subf %287, %292 : vector<96x512xf32>
    %294 = arith.mulf %293, %293 : vector<96x512xf32>
    %cst_127 = arith.constant dense<0.000000e+00> : vector<96xf32>
    %295 = vector.multi_reduction <add>, %294, %cst_127 [1] : vector<96x512xf32> to vector<96xf32>
    %296 = vector.shape_cast %295 : vector<96xf32> to vector<96x1xf32>
    %cst_128 = arith.constant 0.001953125 : f32
    %297 = vector.broadcast %cst_128 : f32 to vector<96x1xf32>
    %298 = arith.mulf %296, %297 : vector<96x1xf32>
    %c0_129 = arith.constant 0 : index
    %c0_130 = arith.constant 0 : index
    %299 = vector.load %arg9[%c0_129, %c0_130] : memref<96x1xf32, #tpu.memory_space<vmem>>, vector<96x1xf32>
    %cst_131 = arith.constant 9.99999974E-6 : f32
    %300 = vector.broadcast %cst_131 : f32 to vector<96x1xf32>
    %301 = arith.addf %298, %300 : vector<96x1xf32>
    %302 = math.rsqrt %301 : vector<96x1xf32>
    %303 = arith.mulf %299, %302 : vector<96x1xf32>
    %304 = vector.broadcast %303 : vector<96x1xf32> to vector<96x512xf32>
    %305 = arith.mulf %293, %304 : vector<96x512xf32>
    %c0_132 = arith.constant 0 : index
    %c0_133 = arith.constant 0 : index
    %306 = vector.load %arg10[%c0_132, %c0_133] : memref<96x1xf32, #tpu.memory_space<vmem>>, vector<96x1xf32>
    %307 = vector.broadcast %306 : vector<96x1xf32> to vector<96x512xf32>
    %308 = arith.addf %305, %307 : vector<96x512xf32>
    %cst_134 = arith.constant 0.000000e+00 : f32
    %309 = vector.broadcast %cst_134 : f32 to vector<96x512xf32>
    %310 = arith.maximumf %308, %309 : vector<96x512xf32>
    %311 = arith.negf %310 : vector<96x512xf32>
    %312 = math.exp %311 : vector<96x512xf32>
    %cst_135 = arith.constant 1.000000e+00 : f32
    %313 = vector.broadcast %cst_135 : f32 to vector<96x512xf32>
    %314 = arith.addf %313, %312 : vector<96x512xf32>
    %315 = arith.divf %313, %314 : vector<96x512xf32>
    %316 = vector.extract_strided_slice %315 {offsets = [0, 0], sizes = [32, 512], strides = [1, 1]} : vector<96x512xf32> to vector<32x512xf32>
    %317 = vector.extract_strided_slice %315 {offsets = [32, 0], sizes = [32, 512], strides = [1, 1]} : vector<96x512xf32> to vector<32x512xf32>
    %318 = arith.addf %316, %317 : vector<32x512xf32>
    %319 = vector.extract_strided_slice %315 {offsets = [64, 0], sizes = [32, 512], strides = [1, 1]} : vector<96x512xf32> to vector<32x512xf32>
    %320 = arith.addf %318, %319 : vector<32x512xf32>
    %321 = arith.mulf %0, %320 : vector<32x512xf32>
    %c0_136 = arith.constant 0 : index
    %c0_137 = arith.constant 0 : index
    %322 = vector.load %arg11[%c0_136, %c0_137] : memref<32x512xf32, #tpu.memory_space<vmem>>, vector<32x512xf32>
    tpu.vector_store %arg11[%c0_136, %c0_137], %321 {strides = array<i32>} : memref<32x512xf32, #tpu.memory_space<vmem>>, vector<32x512xf32>,
    return
  }
}

</mosaic_0001>

<llo_original>
// kernel: tpu_custom_call.1
$region0: #{tpu_custom_call.1}
  #allocation0 [shape = 'u32[]', space=smem, size = 0x4, offset = 0x4, fixed_abs, tag = 'smem constant byte address 0x4 - core index']
  #allocation1 [shape = 'u32[144,128]{1,0:T(1,128)}', space=vmem, size = 0x12000, scoped, tag = 'internal scratch']
  %s0 = inlined_call_operand.vmem [shape: f32[32,512], index: 0, kind: input, shape index: {}]
  %s1 = inlined_call_operand.vmem [shape: f32[6,32], index: 1, kind: input, shape index: {}]
  %s2 = inlined_call_operand.vmem [shape: f32[6,1], index: 2, kind: input, shape index: {}]
  %s3 = inlined_call_operand.vmem [shape: f32[6,1], index: 3, kind: input, shape index: {}]
  %s4 = inlined_call_operand.vmem [shape: f32[6,1], index: 4, kind: input, shape index: {}]
  %s5 = inlined_call_operand.vmem [shape: f32[49,6,512], index: 5, kind: input, shape index: {}]
  %s6 = inlined_call_operand.vmem [shape: f32[6,1], index: 6, kind: input, shape index: {}]
  %s7 = inlined_call_operand.vmem [shape: f32[96,6], index: 7, kind: input, shape index: {}]
  %s8 = inlined_call_operand.vmem [shape: f32[96,1], index: 8, kind: input, shape index: {}]
  %s9 = inlined_call_operand.vmem [shape: f32[96,1], index: 9, kind: input, shape index: {}]
  %s10 = inlined_call_operand.vmem [shape: f32[96,1], index: 10, kind: input, shape index: {}]
  %s11 = inlined_call_operand.hbm [shape: f32[32,512], index: 11, kind: output, shape index: {}]
  %s12 = sld [smem:[#allocation0]]
  $region54: #{tpu_custom_call.1} parent=0
    _
  %s14 = ssub.s32 1, %s12
  %s15 = scalar_select 0, %s14, %s12
  $region1: #{tpu_custom_call.1} parent=0
    #allocation2 [shape = 'u8[65536]{0}', space=vmem, size = 0x10000, scoped, tag = 'output window, operand 0, single buffered']
    #allocation3 [shape = 's32[1]{0}', space=sflag, size = 0x4, scoped, tag = 'scoped memory for tpu_custom_call.1']
    %16 = vsyncpa [#allocation3], 0
    // Predicated region
    $region2: #{tpu_custom_call.1} parent=1 // pred_check
      _
    $region3: #{tpu_custom_call.1} parent=1 // pred_check_branch
      %18 = sbr.rel (0) target = $region5
    $region4: #{tpu_custom_call.1} parent=1 // pred_region
      _
    $region5: #{tpu_custom_call.1} parent=1 // pred_fallthru
      _
    // Predicated region
    $region6: #{tpu_custom_call.1} parent=1 // pred_check
      _
    $region7: #{tpu_custom_call.1} parent=1 // pred_check_branch
      %20 = sbr.rel (0) target = $region9
    $region8: #{tpu_custom_call.1} parent=1 // pred_region
      _
    $region9: #{tpu_custom_call.1} parent=1 // pred_fallthru
      _
    // Predicated region
    $region10: #{tpu_custom_call.1} parent=1 // pred_check
      _
    $region11: #{tpu_custom_call.1} parent=1 // pred_check_branch
      %22 = sbr.rel (0) target = $region13
    $region12: #{tpu_custom_call.1} parent=1 // pred_region
      _
    $region13: #{tpu_custom_call.1} parent=1 // pred_fallthru
      _
    // Predicated region
    $region14: #{tpu_custom_call.1} parent=1 // pred_check
      _
    $region15: #{tpu_custom_call.1} parent=1 // pred_check_branch
      %24 = sbr.rel (0) target = $region17
    $region16: #{tpu_custom_call.1} parent=1 // pred_region
      _
    $region17: #{tpu_custom_call.1} parent=1 // pred_fallthru
      _
    // Predicated region
    $region18: #{tpu_custom_call.1} parent=1 // pred_check
      _
    $region19: #{tpu_custom_call.1} parent=1 // pred_check_branch
      %26 = sbr.rel (0) target = $region21
    $region20: #{tpu_custom_call.1} parent=1 // pred_region
      _
    $region21: #{tpu_custom_call.1} parent=1 // pred_fallthru
      _
    // Predicated region
    $region22: #{tpu_custom_call.1} parent=1 // pred_check
      _
    $region23: #{tpu_custom_call.1} parent=1 // pred_check_branch
      %28 = sbr.rel (0) target = $region25
    $region24: #{tpu_custom_call.1} parent=1 // pred_region
      _
    $region25: #{tpu_custom_call.1} parent=1 // pred_fallthru
      _
    // Predicated region
    $region26: #{tpu_custom_call.1} parent=1 // pred_check
      _
    $region27: #{tpu_custom_call.1} parent=1 // pred_check_branch
      %30 = sbr.rel (0) target = $region29
    $region28: #{tpu_custom_call.1} parent=1 // pred_region
      _
    $region29: #{tpu_custom_call.1} parent=1 // pred_fallthru
      _
    // Predicated region
    $region30: #{tpu_custom_call.1} parent=1 // pred_check
      _
    $region31: #{tpu_custom_call.1} parent=1 // pred_check_branch
      %32 = sbr.rel (0) target = $region33
    $region32: #{tpu_custom_call.1} parent=1 // pred_region
      _
    $region33: #{tpu_custom_call.1} parent=1 // pred_fallthru
      _
    // Predicated region
    $region34: #{tpu_custom_call.1} parent=1 // pred_check
      _
    $region35: #{tpu_custom_call.1} parent=1 // pred_check_branch
      %34 = sbr.rel (0) target = $region37
    $region36: #{tpu_custom_call.1} parent=1 // pred_region
      _
    $region37: #{tpu_custom_call.1} parent=1 // pred_fallthru
      _
    // Predicated region
    $region38: #{tpu_custom_call.1} parent=1 // pred_check
      _
    $region39: #{tpu_custom_call.1} parent=1 // pred_check_branch
      %36 = sbr.rel (0) target = $region41
    $region40: #{tpu_custom_call.1} parent=1 // pred_region
      _
    $region41: #{tpu_custom_call.1} parent=1 // pred_fallthru
      _
    // Predicated region
    $region42: #{tpu_custom_call.1} parent=1 // pred_check
      _
    $region43: #{tpu_custom_call.1} parent=1 // pred_check_branch
      %38 = sbr.rel (0) target = $region45
    $region44: #{tpu_custom_call.1} parent=1 // pred_region
      _
    $region45: #{tpu_custom_call.1} parent=1 // pred_fallthru
      _
    %v39 = vld [vmem:[%s0] sm:$0xff]
    %v40 = vld [vmem:[%s0 + $0x8] sm:$0xff]
    %v41 = vld [vmem:[%s0 + $0x10] sm:$0xff]
    %v42 = vld [vmem:[%s0 + $0x18] sm:$0xff]
    %v43 = vld [vmem:[%s0 + $0x20] sm:$0xff]
    %v44 = vld [vmem:[%s0 + $0x28] sm:$0xff]
    %v45 = vld [vmem:[%s0 + $0x30] sm:$0xff]
    %v46 = vld [vmem:[%s0 + $0x38] sm:$0xff]
    %v47 = vld [vmem:[%s0 + $0x40] sm:$0xff]
    %v48 = vld [vmem:[%s0 + $0x48] sm:$0xff]
    %v49 = vld [vmem:[%s0 + $0x50] sm:$0xff]
    %v50 = vld [vmem:[%s0 + $0x58] sm:$0xff]
    %v51 = vld [vmem:[%s0 + $0x60] sm:$0xff]
    %v52 = vld [vmem:[%s0 + $0x68] sm:$0xff]
    %v53 = vld [vmem:[%s0 + $0x70] sm:$0xff]
    %v54 = vld [vmem:[%s0 + $0x78] sm:$0xff]
    %v55 = vld [vmem:[%s1] sm:$0x3f]
    %v56 = vld [vmem:[%s2] sm:$0x3f]
    %58 = vset.pattern.permute.xlu0 0
    %59 = vperm.xlu0 %58, %v56
    %v60 = vpop.permute.xlu0 %59
    %vm62 = vcmask 261120
    %v64 = vsel %vm62, %v55, 0
    %66 = vmatprep.subr.mxu0 0.0
    %67 = vmatpush1.msra.mxu0 0.0
    %68 = vmatprep.subr.mxu0 0.0
    %69 = vmatpush1.msra.mxu0 0.0
    %70 = vmatprep.subr.mxu0 0.0
    %71 = vmatpush1.msra.mxu0 0.0
    %72 = vmatprep.subr.mxu0 0.0
    %73 = vmatpush1.msra.mxu0 0.0
    %74 = vmatprep.subr.mxu0 0.0
    %75 = vmatpush1.msra.mxu0 0.0
    %76 = vmatprep.subr.mxu0 0.0
    %77 = vmatpush1.msra.mxu0 0.0
    %78 = vmatprep.subr.mxu0 0.0
    %79 = vmatpush1.msra.mxu0 0.0
    %80 = vmatprep.subr.mxu0 0.0
    %81 = vmatpush1.msra.mxu0 0.0
    %82 = vmatprep.subr.mxu0 0.0
    %83 = vmatpush1.msra.mxu0 0.0
    %84 = vmatprep.subr.mxu0 0.0
    %85 = vmatpush1.msra.mxu0 0.0
    %86 = vmatprep.subr.mxu0 0.0
    %87 = vmatpush1.msra.mxu0 0.0
    %88 = vmatprep.subr.mxu0 0.0
    %89 = vmatpush1.msra.mxu0 0.0
    %90 = vmatprep.subr.mxu0 %v52
    %91 = vmatpush1.msra.mxu0 %v51
    %92 = vmatprep.subr.mxu0 %v48
    %93 = vmatpush1.msra.mxu0 %v47
    %94 = vmatprep.subr.mxu0 %v44
    %95 = vmatpush1.msra.mxu0 %v43
    %96 = vmatprep.subr.mxu0 %v40
    %97 = vmatpush1.msra.mxu0 %v39
    %98 = vmatprep.subr.mxu0 0.0
    %99 = vmatpush2.msra.mxu0 0.0
    %100 = vmatprep.subr.mxu0 0.0
    %101 = vmatpush2.msra.mxu0 0.0
    %102 = vmatprep.subr.mxu0 0.0
    %103 = vmatpush2.msra.mxu0 0.0
    %104 = vmatprep.subr.mxu0 0.0
    %105 = vmatpush2.msra.mxu0 0.0
    %106 = vmatprep.subr.mxu0 0.0
    %107 = vmatpush2.msra.mxu0 0.0
    %108 = vmatprep.subr.mxu0 0.0
    %109 = vmatpush2.msra.mxu0 0.0
    %110 = vmatprep.subr.mxu0 0.0
    %111 = vmatpush2.msra.mxu0 0.0
    %112 = vmatprep.subr.mxu0 0.0
    %113 = vmatpush2.msra.mxu0 0.0
    %114 = vmatprep.subr.mxu0 0.0
    %115 = vmatpush2.msra.mxu0 0.0
    %116 = vmatprep.subr.mxu0 0.0
    %117 = vmatpush2.msra.mxu0 0.0
    %118 = vmatprep.subr.mxu0 0.0
    %119 = vmatpush2.msra.mxu0 0.0
    %120 = vmatprep.subr.mxu0 0.0
    %121 = vmatpush2.msra.mxu0 0.0
    %122 = vmatprep.subr.mxu0 0.0
    %123 = vmatpush2.msra.mxu0 0.0
    %124 = vmatprep.subr.mxu0 0.0
    %125 = vmatpush2.msra.mxu0 0.0
    %126 = vmatprep.subr.mxu0 0.0
    %127 = vmatpush2.msra.mxu0 0.0
    %128 = vmatprep.subr.mxu0 0.0
    %129 = vmatpush2.msra.mxu0 0.0
    %130 = vmatprep.mubr.f32.mxu0 0.0
    %131 = vmatmul.mubr.f32.gmra.mxu0 %v64
    %v132 = vpop.f32.mrf.mxu0
    %v133 = vadd.f32 %v60, %v132
    %v134 = vpop.f32.mrf.mxu0
    %v135 = vadd.f32 %v60, %v134
    %136 = vdwg.mxu0
    %137 = vmatprep.subr.mxu0 0.0
    %138 = vmatpush1.msra.mxu0 0.0
    %139 = vmatprep.subr.mxu0 0.0
    %140 = vmatpush1.msra.mxu0 0.0
    %141 = vmatprep.subr.mxu0 0.0
    %142 = vmatpush1.msra.mxu0 0.0
    %143 = vmatprep.subr.mxu0 0.0
    %144 = vmatpush1.msra.mxu0 0.0
    %145 = vmatprep.subr.mxu0 0.0
    %146 = vmatpush1.msra.mxu0 0.0
    %147 = vmatprep.subr.mxu0 0.0
    %148 = vmatpush1.msra.mxu0 0.0
    %149 = vmatprep.subr.mxu0 0.0
    %150 = vmatpush1.msra.mxu0 0.0
    %151 = vmatprep.subr.mxu0 0.0
    %152 = vmatpush1.msra.mxu0 0.0
    %153 = vmatprep.subr.mxu0 0.0
    %154 = vmatpush1.msra.mxu0 0.0
    %155 = vmatprep.subr.mxu0 0.0
    %156 = vmatpush1.msra.mxu0 0.0
    %157 = vmatprep.subr.mxu0 0.0
    %158 = vmatpush1.msra.mxu0 0.0
    %159 = vmatprep.subr.mxu0 0.0
    %160 = vmatpush1.msra.mxu0 0.0
    %161 = vmatprep.subr.mxu0 %v54
    %162 = vmatpush1.msra.mxu0 %v53
    %163 = vmatprep.subr.mxu0 %v50
    %164 = vmatpush1.msra.mxu0 %v49
    %165 = vmatprep.subr.mxu0 %v46
    %166 = vmatpush1.msra.mxu0 %v45
    %167 = vmatprep.subr.mxu0 %v42
    %168 = vmatpush1.msra.mxu0 %v41
    %169 = vmatprep.subr.mxu0 0.0
    %170 = vmatpush2.msra.mxu0 0.0
    %171 = vmatprep.subr.mxu0 0.0
    %172 = vmatpush2.msra.mxu0 0.0
    %173 = vmatprep.subr.mxu0 0.0
    %174 = vmatpush2.msra.mxu0 0.0
    %175 = vmatprep.subr.mxu0 0.0
    %176 = vmatpush2.msra.mxu0 0.0
    %177 = vmatprep.subr.mxu0 0.0
    %178 = vmatpush2.msra.mxu0 0.0
    %179 = vmatprep.subr.mxu0 0.0
    %180 = vmatpush2.msra.mxu0 0.0
    %181 = vmatprep.subr.mxu0 0.0
    %182 = vmatpush2.msra.mxu0 0.0
    %183 = vmatprep.subr.mxu0 0.0
    %184 = vmatpush2.msra.mxu0 0.0
    %185 = vmatprep.subr.mxu0 0.0
    %186 = vmatpush2.msra.mxu0 0.0
    %187 = vmatprep.subr.mxu0 0.0
    %188 = vmatpush2.msra.mxu0 0.0
    %189 = vmatprep.subr.mxu0 0.0
    %190 = vmatpush2.msra.mxu0 0.0
    %191 = vmatprep.subr.mxu0 0.0
    %192 = vmatpush2.msra.mxu0 0.0
    %193 = vmatprep.subr.mxu0 0.0
    %194 = vmatpush2.msra.mxu0 0.0
    %195 = vmatprep.subr.mxu0 0.0
    %196 = vmatpush2.msra.mxu0 0.0
    %197 = vmatprep.subr.mxu0 0.0
    %198 = vmatpush2.msra.mxu0 0.0
    %199 = vmatprep.subr.mxu0 0.0
    %200 = vmatpush2.msra.mxu0 0.0
    %201 = vmatprep.mubr.f32.mxu0 0.0
    %202 = vmatmul.mubr.f32.gmra.mxu0 %v64
    %v203 = vpop.f32.mrf.mxu0
    %v204 = vadd.f32 %v60, %v203
    %v205 = vpop.f32.mrf.mxu0
    %v206 = vadd.f32 %v60, %v205
    %207 = vdwg.mxu0
    %vm208 = vcmask 1045504
    %v209 = vsel %vm208, %v133, 0.0
    %v210 = vsel %vm208, %v135, 0.0
    %v211 = vadd.f32 %v209, %v210
    %v212 = vsel %vm208, %v204, 0.0
    %v213 = vadd.f32 %v211, %v212
    %v214 = vsel %vm208, %v206, 0.0
    %v215 = vadd.f32 %v213, %v214
    %216 = vadd.xlane.f32.xlu0 %v215
    %v217 = vpop.xlane.xlu0 %216
    %v218 = vmul.f32 %v217, 0.001953125
    %v219 = vsub.f32 %v133, %v218
    %v220 = vsub.f32 %v135, %v218
    %v221 = vsub.f32 %v204, %v218
    %v222 = vsub.f32 %v206, %v218
    %v223 = vmul.f32 %v219, %v219
    %v224 = vmul.f32 %v220, %v220
    %v225 = vmul.f32 %v221, %v221
    %v226 = vmul.f32 %v222, %v222
    %v227 = vsel %vm208, %v223, 0.0
    %v228 = vsel %vm208, %v224, 0.0
    %v229 = vadd.f32 %v227, %v228
    %v230 = vsel %vm208, %v225, 0.0
    %v231 = vadd.f32 %v229, %v230
    %v232 = vsel %vm208, %v226, 0.0
    %v233 = vadd.f32 %v231, %v232
    %234 = vadd.xlane.f32.xlu0 %v233
    %v235 = vpop.xlane.xlu0 %234
    %v236 = vmul.f32 %v235, 0.001953125
    %v237 = vld [vmem:[%s3] sm:$0x3f]
    %v238 = vadd.f32 %v236, 1e-05
    %v239 = vrsqrt.pop %v238
    %v240 = vmul.f32 %v237, %v239
    %242 = vset.pattern.permute.xlu0 0
    %243 = vperm.xlu0 %242, %v240
    %v244 = vpop.permute.xlu0 %243
    %v246 = vmul.f32 %v219, %v244
    %v247 = vmul.f32 %v220, %v244
    %v248 = vmul.f32 %v221, %v244
    %v249 = vmul.f32 %v222, %v244
    %v250 = vld [vmem:[%s4] sm:$0x3f]
    %252 = vset.pattern.permute.xlu0 0
    %253 = vperm.xlu0 %252, %v250
    %v254 = vpop.permute.xlu0 %253
    %v256 = vadd.f32 %v246, %v254
    %v257 = vadd.f32 %v247, %v254
    %v258 = vadd.f32 %v248, %v254
    %v259 = vadd.f32 %v249, %v254
    %v260 = vmax.f32 %v256, 0.0
    %v261 = vmax.f32 %v257, 0.0
    %v262 = vmax.f32 %v258, 0.0
    %v263 = vmax.f32 %v259, 0.0
    %264 = vrot.lane.b32.xlu0 %v260, 51
    %v265 = vpop.permute.xlu0 %264
    %266 = vrot.lane.b32.xlu0 %v261, 51
    %v267 = vpop.permute.xlu0 %266
    %268 = vrot.lane.b32.xlu0 %v262, 51
    %v269 = vpop.permute.xlu0 %268
    %270 = vrot.lane.b32.xlu0 %v263, 51
    %v271 = vpop.permute.xlu0 %270
    %v272 = vlaneseq
    %v273 = vand.u32 %v272, 127
    %vm274 = vcmp.lt.s32.totalorder %v273, 51
    %v275 = vsel %vm274, %v269, %v271
    %v276 = vsel %vm274, %v267, %v269
    %v277 = vsel %vm274, %v265, %v267
    %v278 = vsel %vm274, %v271, %v265
    %v279 = vld [vmem:[%s5] sm:$0x3f]
    %v280 = vld [vmem:[%s5 + $0x8] sm:$0x3f]
    %v281 = vld [vmem:[%s5 + $0x10] sm:$0x3f]
    %v282 = vld [vmem:[%s5 + $0x18] sm:$0x3f]
    %v283 = vmul.f32 %v278, %v279
    %v284 = vmul.f32 %v277, %v280
    %v285 = vmul.f32 %v276, %v281
    %v286 = vmul.f32 %v275, %v282
    %v287 = vadd.f32 %v283, 0.0
    %v288 = vadd.f32 %v284, 0.0
    %v289 = vadd.f32 %v285, 0.0
    %v290 = vadd.f32 %v286, 0.0
    %291 = vrot.lane.b32.xlu0 %v260, 50
    %v292 = vpop.permute.xlu0 %291
    %293 = vrot.lane.b32.xlu0 %v261, 50
    %v294 = vpop.permute.xlu0 %293
    %295 = vrot.lane.b32.xlu0 %v262, 50
    %v296 = vpop.permute.xlu0 %295
    %297 = vrot.lane.b32.xlu0 %v263, 50
    %v298 = vpop.permute.xlu0 %297
    %vm299 = vcmp.lt.s32.totalorder %v273, 50
    %v300 = vsel %vm299, %v296, %v298
    %v301 = vsel %vm299, %v294, %v296
    %v302 = vsel %vm299, %v292, %v294
    %v303 = vsel %vm299, %v298, %v292
    %s304 = scalar_lea.vmem %s5, 32
    %v305 = vld [vmem:[%s304] sm:$0x3f]
    %v306 = vld [vmem:[%s304 + $0x8] sm:$0x3f]
    %v307 = vld [vmem:[%s304 + $0x10] sm:$0x3f]
    %v308 = vld [vmem:[%s304 + $0x18] sm:$0x3f]
    %v309 = vmul.f32 %v303, %v305
    %v310 = vmul.f32 %v302, %v306
    %v311 = vmul.f32 %v301, %v307
    %v312 = vmul.f32 %v300, %v308
    %v313 = vadd.f32 %v309, 0.0
    %v314 = vadd.f32 %v310, 0.0
    %v315 = vadd.f32 %v311, 0.0
    %v316 = vadd.f32 %v312, 0.0
    %317 = vrot.lane.b32.xlu0 %v260, 49
    %v318 = vpop.permute.xlu0 %317
    %319 = vrot.lane.b32.xlu0 %v261, 49
    %v320 = vpop.permute.xlu0 %319
    %321 = vrot.lane.b32.xlu0 %v262, 49
    %v322 = vpop.permute.xlu0 %321
    %323 = vrot.lane.b32.xlu0 %v263, 49
    %v324 = vpop.permute.xlu0 %323
    %vm325 = vcmp.lt.s32.totalorder %v273, 49
    %v326 = vsel %vm325, %v322, %v324
    %v327 = vsel %vm325, %v320, %v322
    %v328 = vsel %vm325, %v318, %v320
    %v329 = vsel %vm325, %v324, %v318
    %s330 = scalar_lea.vmem %s5, 64
    %v331 = vld [vmem:[%s330] sm:$0x3f]
    %v332 = vld [vmem:[%s330 + $0x8] sm:$0x3f]
    %v333 = vld [vmem:[%s330 + $0x10] sm:$0x3f]
    %v334 = vld [vmem:[%s330 + $0x18] sm:$0x3f]
    %v335 = vmul.f32 %v329, %v331
    %v336 = vmul.f32 %v328, %v332
    %v337 = vmul.f32 %v327, %v333
    %v338 = vmul.f32 %v326, %v334
    %v339 = vadd.f32 %v335, 0.0
    %v340 = vadd.f32 %v336, 0.0
    %v341 = vadd.f32 %v337, 0.0
    %v342 = vadd.f32 %v338, 0.0
    %343 = vrot.lane.b32.xlu0 %v260, 48
    %v344 = vpop.permute.xlu0 %343
    %345 = vrot.lane.b32.xlu0 %v261, 48
    %v346 = vpop.permute.xlu0 %345
    %347 = vrot.lane.b32.xlu0 %v262, 48
    %v348 = vpop.permute.xlu0 %347
    %349 = vrot.lane.b32.xlu0 %v263, 48
    %v350 = vpop.permute.xlu0 %349
    %vm351 = vcmp.lt.s32.totalorder %v273, 48
    %v352 = vsel %vm351, %v348, %v350
    %v353 = vsel %vm351, %v346, %v348
    %v354 = vsel %vm351, %v344, %v346
    %v355 = vsel %vm351, %v350, %v344
    %s356 = scalar_lea.vmem %s5, 96
    %v357 = vld [vmem:[%s356] sm:$0x3f]
    %v358 = vld [vmem:[%s356 + $0x8] sm:$0x3f]
    %v359 = vld [vmem:[%s356 + $0x10] sm:$0x3f]
    %v360 = vld [vmem:[%s356 + $0x18] sm:$0x3f]
    %v361 = vmul.f32 %v355, %v357
    %v362 = vmul.f32 %v354, %v358
    %v363 = vmul.f32 %v353, %v359
    %v364 = vmul.f32 %v352, %v360
    %v365 = vadd.f32 %v361, 0.0
    %v366 = vadd.f32 %v362, 0.0
    %v367 = vadd.f32 %v363, 0.0
    %v368 = vadd.f32 %v364, 0.0
    %369 = vrot.lane.b32.xlu0 %v260, 47
    %v370 = vpop.permute.xlu0 %369
    %371 = vrot.lane.b32.xlu0 %v261, 47
    %v372 = vpop.permute.xlu0 %371
    %373 = vrot.lane.b32.xlu0 %v262, 47
    %v374 = vpop.permute.xlu0 %373
    %375 = vrot.lane.b32.xlu0 %v263, 47
    %v376 = vpop.permute.xlu0 %375
    %vm377 = vcmp.lt.s32.totalorder %v273, 47
    %v378 = vsel %vm377, %v374, %v376
    %v379 = vsel %vm377, %v372, %v374
    %v380 = vsel %vm377, %v370, %v372
    %v381 = vsel %vm377, %v376, %v370
    %s382 = scalar_lea.vmem %s5, 128
    %v383 = vld [vmem:[%s382] sm:$0x3f]
    %v384 = vld [vmem:[%s382 + $0x8] sm:$0x3f]
    %v385 = vld [vmem:[%s382 + $0x10] sm:$0x3f]
    %v386 = vld [vmem:[%s382 + $0x18] sm:$0x3f]
    %v387 = vmul.f32 %v381, %v383
    %v388 = vmul.f32 %v380, %v384
    %v389 = vmul.f32 %v379, %v385
    %v390 = vmul.f32 %v378, %v386
    %v391 = vadd.f32 %v287, %v387
    %v392 = vadd.f32 %v288, %v388
    %v393 = vadd.f32 %v289, %v389
    %v394 = vadd.f32 %v290, %v390
    %395 = vrot.lane.b32.xlu0 %v260, 46
    %v396 = vpop.permute.xlu0 %395
    %397 = vrot.lane.b32.xlu0 %v261, 46
    %v398 = vpop.permute.xlu0 %397
    %399 = vrot.lane.b32.xlu0 %v262, 46
    %v400 = vpop.permute.xlu0 %399
    %401 = vrot.lane.b32.xlu0 %v263, 46
    %v402 = vpop.permute.xlu0 %401
    %vm403 = vcmp.lt.s32.totalorder %v273, 46
    %v404 = vsel %vm403, %v400, %v402
    %v405 = vsel %vm403, %v398, %v400
    %v406 = vsel %vm403, %v396, %v398
    %v407 = vsel %vm403, %v402, %v396
    %s408 = scalar_lea.vmem %s5, 160
    %v409 = vld [vmem:[%s408] sm:$0x3f]
    %v410 = vld [vmem:[%s408 + $0x8] sm:$0x3f]
    %v411 = vld [vmem:[%s408 + $0x10] sm:$0x3f]
    %v412 = vld [vmem:[%s408 + $0x18] sm:$0x3f]
    %v413 = vmul.f32 %v407, %v409
    %v414 = vmul.f32 %v406, %v410
    %v415 = vmul.f32 %v405, %v411
    %v416 = vmul.f32 %v404, %v412
    %v417 = vadd.f32 %v313, %v413
    %v418 = vadd.f32 %v314, %v414
    %v419 = vadd.f32 %v315, %v415
    %v420 = vadd.f32 %v316, %v416
    %421 = vrot.lane.b32.xlu0 %v260, 45
    %v422 = vpop.permute.xlu0 %421
    %423 = vrot.lane.b32.xlu0 %v261, 45
    %v424 = vpop.permute.xlu0 %423
    %425 = vrot.lane.b32.xlu0 %v262, 45
    %v426 = vpop.permute.xlu0 %425
    %427 = vrot.lane.b32.xlu0 %v263, 45
    %v428 = vpop.permute.xlu0 %427
    %vm429 = vcmp.lt.s32.totalorder %v273, 45
    %v430 = vsel %vm429, %v426, %v428
    %v431 = vsel %vm429, %v424, %v426
    %v432 = vsel %vm429, %v422, %v424
    %v433 = vsel %vm429, %v428, %v422
    %s434 = scalar_lea.vmem %s5, 192
    %v435 = vld [vmem:[%s434] sm:$0x3f]
    %v436 = vld [vmem:[%s434 + $0x8] sm:$0x3f]
    %v437 = vld [vmem:[%s434 + $0x10] sm:$0x3f]
    %v438 = vld [vmem:[%s434 + $0x18] sm:$0x3f]
    %v439 = vmul.f32 %v433, %v435
    %v440 = vmul.f32 %v432, %v436
    %v441 = vmul.f32 %v431, %v437
    %v442 = vmul.f32 %v430, %v438
    %v443 = vadd.f32 %v339, %v439
    %v444 = vadd.f32 %v340, %v440
    %v445 = vadd.f32 %v341, %v441
    %v446 = vadd.f32 %v342, %v442
    %447 = vrot.lane.b32.xlu0 %v260, 35
    %v448 = vpop.permute.xlu0 %447
    %449 = vrot.lane.b32.xlu0 %v261, 35
    %v450 = vpop.permute.xlu0 %449
    %451 = vrot.lane.b32.xlu0 %v262, 35
    %v452 = vpop.permute.xlu0 %451
    %453 = vrot.lane.b32.xlu0 %v263, 35
    %v454 = vpop.permute.xlu0 %453
    %vm455 = vcmp.lt.s32.totalorder %v273, 35
    %v456 = vsel %vm455, %v452, %v454
    %v457 = vsel %vm455, %v450, %v452
    %v458 = vsel %vm455, %v448, %v450
    %v459 = vsel %vm455, %v454, %v448
    %s460 = scalar_lea.vmem %s5, 224
    %v461 = vld [vmem:[%s460] sm:$0x3f]
    %v462 = vld [vmem:[%s460 + $0x8] sm:$0x3f]
    %v463 = vld [vmem:[%s460 + $0x10] sm:$0x3f]
    %v464 = vld [vmem:[%s460 + $0x18] sm:$0x3f]
    %v465 = vmul.f32 %v459, %v461
    %v466 = vmul.f32 %v458, %v462
    %v467 = vmul.f32 %v457, %v463
    %v468 = vmul.f32 %v456, %v464
    %v469 = vadd.f32 %v365, %v465
    %v470 = vadd.f32 %v366, %v466
    %v471 = vadd.f32 %v367, %v467
    %v472 = vadd.f32 %v368, %v468
    %473 = vrot.lane.b32.xlu0 %v260, 34
    %v474 = vpop.permute.xlu0 %473
    %475 = vrot.lane.b32.xlu0 %v261, 34
    %v476 = vpop.permute.xlu0 %475
    %477 = vrot.lane.b32.xlu0 %v262, 34
    %v478 = vpop.permute.xlu0 %477
    %479 = vrot.lane.b32.xlu0 %v263, 34
    %v480 = vpop.permute.xlu0 %479
    %vm481 = vcmp.lt.s32.totalorder %v273, 34
    %v482 = vsel %vm481, %v478, %v480
    %v483 = vsel %vm481, %v476, %v478
    %v484 = vsel %vm481, %v474, %v476
    %v485 = vsel %vm481, %v480, %v474
    %s486 = scalar_lea.vmem %s5, 256
    %v487 = vld [vmem:[%s486] sm:$0x3f]
    %v488 = vld [vmem:[%s486 + $0x8] sm:$0x3f]
    %v489 = vld [vmem:[%s486 + $0x10] sm:$0x3f]
    %v490 = vld [vmem:[%s486 + $0x18] sm:$0x3f]
    %v491 = vmul.f32 %v485, %v487
    %v492 = vmul.f32 %v484, %v488
    %v493 = vmul.f32 %v483, %v489
    %v494 = vmul.f32 %v482, %v490
    %v495 = vadd.f32 %v391, %v491
    %v496 = vadd.f32 %v392, %v492
    %v497 = vadd.f32 %v393, %v493
    %v498 = vadd.f32 %v394, %v494
    %499 = vrot.lane.b32.xlu0 %v260, 33
    %v500 = vpop.permute.xlu0 %499
    %501 = vrot.lane.b32.xlu0 %v261, 33
    %v502 = vpop.permute.xlu0 %501
    %503 = vrot.lane.b32.xlu0 %v262, 33
    %v504 = vpop.permute.xlu0 %503
    %505 = vrot.lane.b32.xlu0 %v263, 33
    %v506 = vpop.permute.xlu0 %505
    %vm507 = vcmp.lt.s32.totalorder %v273, 33
    %v508 = vsel %vm507, %v504, %v506
    %v509 = vsel %vm507, %v502, %v504
    %v510 = vsel %vm507, %v500, %v502
    %v511 = vsel %vm507, %v506, %v500
    %s512 = scalar_lea.vmem %s5, 288
    %v513 = vld [vmem:[%s512] sm:$0x3f]
    %v514 = vld [vmem:[%s512 + $0x8] sm:$0x3f]
    %v515 = vld [vmem:[%s512 + $0x10] sm:$0x3f]
    %v516 = vld [vmem:[%s512 + $0x18] sm:$0x3f]
    %v517 = vmul.f32 %v511, %v513
    %v518 = vmul.f32 %v510, %v514
    %v519 = vmul.f32 %v509, %v515
    %v520 = vmul.f32 %v508, %v516
    %v521 = vadd.f32 %v417, %v517
    %v522 = vadd.f32 %v418, %v518
    %v523 = vadd.f32 %v419, %v519
    %v524 = vadd.f32 %v420, %v520
    %525 = vrot.lane.b32.xlu0 %v260, 32
    %v526 = vpop.permute.xlu0 %525
    %527 = vrot.lane.b32.xlu0 %v261, 32
    %v528 = vpop.permute.xlu0 %527
    %529 = vrot.lane.b32.xlu0 %v262, 32
    %v530 = vpop.permute.xlu0 %529
    %531 = vrot.lane.b32.xlu0 %v263, 32
    %v532 = vpop.permute.xlu0 %531
    %vm533 = vcmp.lt.s32.totalorder %v273, 32
    %v534 = vsel %vm533, %v530, %v532
    %v535 = vsel %vm533, %v528, %v530
    %v536 = vsel %vm533, %v526, %v528
    %v537 = vsel %vm533, %v532, %v526
    %s538 = scalar_lea.vmem %s5, 320
    %v539 = vld [vmem:[%s538] sm:$0x3f]
    %v540 = vld [vmem:[%s538 + $0x8] sm:$0x3f]
    %v541 = vld [vmem:[%s538 + $0x10] sm:$0x3f]
    %v542 = vld [vmem:[%s538 + $0x18] sm:$0x3f]
    %v543 = vmul.f32 %v537, %v539
    %v544 = vmul.f32 %v536, %v540
    %v545 = vmul.f32 %v535, %v541
    %v546 = vmul.f32 %v534, %v542
    %v547 = vadd.f32 %v443, %v543
    %v548 = vadd.f32 %v444, %v544
    %v549 = vadd.f32 %v445, %v545
    %v550 = vadd.f32 %v446, %v546
    %551 = vrot.lane.b32.xlu0 %v260, 31
    %v552 = vpop.permute.xlu0 %551
    %553 = vrot.lane.b32.xlu0 %v261, 31
    %v554 = vpop.permute.xlu0 %553
    %555 = vrot.lane.b32.xlu0 %v262, 31
    %v556 = vpop.permute.xlu0 %555
    %557 = vrot.lane.b32.xlu0 %v263, 31
    %v558 = vpop.permute.xlu0 %557
    %vm559 = vcmp.lt.s32.totalorder %v273, 31
    %v560 = vsel %vm559, %v556, %v558
    %v561 = vsel %vm559, %v554, %v556
    %v562 = vsel %vm559, %v552, %v554
    %v563 = vsel %vm559, %v558, %v552
    %s564 = scalar_lea.vmem %s5, 352
    %v565 = vld [vmem:[%s564] sm:$0x3f]
    %v566 = vld [vmem:[%s564 + $0x8] sm:$0x3f]
    %v567 = vld [vmem:[%s564 + $0x10] sm:$0x3f]
    %v568 = vld [vmem:[%s564 + $0x18] sm:$0x3f]
    %v569 = vmul.f32 %v563, %v565
    %v570 = vmul.f32 %v562, %v566
    %v571 = vmul.f32 %v561, %v567
    %v572 = vmul.f32 %v560, %v568
    %v573 = vadd.f32 %v469, %v569
    %v574 = vadd.f32 %v470, %v570
    %v575 = vadd.f32 %v471, %v571
    %v576 = vadd.f32 %v472, %v572
    %577 = vrot.lane.b32.xlu0 %v260, 30
    %v578 = vpop.permute.xlu0 %577
    %579 = vrot.lane.b32.xlu0 %v261, 30
    %v580 = vpop.permute.xlu0 %579
    %581 = vrot.lane.b32.xlu0 %v262, 30
    %v582 = vpop.permute.xlu0 %581
    %583 = vrot.lane.b32.xlu0 %v263, 30
    %v584 = vpop.permute.xlu0 %583
    %vm585 = vcmp.lt.s32.totalorder %v273, 30
    %v586 = vsel %vm585, %v582, %v584
    %v587 = vsel %vm585, %v580, %v582
    %v588 = vsel %vm585, %v578, %v580
    %v589 = vsel %vm585, %v584, %v578
    %s590 = scalar_lea.vmem %s5, 384
    %v591 = vld [vmem:[%s590] sm:$0x3f]
    %v592 = vld [vmem:[%s590 + $0x8] sm:$0x3f]
    %v593 = vld [vmem:[%s590 + $0x10] sm:$0x3f]
    %v594 = vld [vmem:[%s590 + $0x18] sm:$0x3f]
    %v595 = vmul.f32 %v589, %v591
    %v596 = vmul.f32 %v588, %v592
    %v597 = vmul.f32 %v587, %v593
    %v598 = vmul.f32 %v586, %v594
    %v599 = vadd.f32 %v495, %v595
    %v600 = vadd.f32 %v496, %v596
    %v601 = vadd.f32 %v497, %v597
    %v602 = vadd.f32 %v498, %v598
    %603 = vrot.lane.b32.xlu0 %v260, 29
    %v604 = vpop.permute.xlu0 %603
    %605 = vrot.lane.b32.xlu0 %v261, 29
    %v606 = vpop.permute.xlu0 %605
    %607 = vrot.lane.b32.xlu0 %v262, 29
    %v608 = vpop.permute.xlu0 %607
    %609 = vrot.lane.b32.xlu0 %v263, 29
    %v610 = vpop.permute.xlu0 %609
    %vm611 = vcmp.lt.s32.totalorder %v273, 29
    %v612 = vsel %vm611, %v608, %v610
    %v613 = vsel %vm611, %v606, %v608
    %v614 = vsel %vm611, %v604, %v606
    %v615 = vsel %vm611, %v610, %v604
    %s616 = scalar_lea.vmem %s5, 416
    %v617 = vld [vmem:[%s616] sm:$0x3f]
    %v618 = vld [vmem:[%s616 + $0x8] sm:$0x3f]
    %v619 = vld [vmem:[%s616 + $0x10] sm:$0x3f]
    %v620 = vld [vmem:[%s616 + $0x18] sm:$0x3f]
    %v621 = vmul.f32 %v615, %v617
    %v622 = vmul.f32 %v614, %v618
    %v623 = vmul.f32 %v613, %v619
    %v624 = vmul.f32 %v612, %v620
    %v625 = vadd.f32 %v521, %v621
    %v626 = vadd.f32 %v522, %v622
    %v627 = vadd.f32 %v523, %v623
    %v628 = vadd.f32 %v524, %v624
    %629 = vrot.lane.b32.xlu0 %v260, 19
    %v630 = vpop.permute.xlu0 %629
    %631 = vrot.lane.b32.xlu0 %v261, 19
    %v632 = vpop.permute.xlu0 %631
    %633 = vrot.lane.b32.xlu0 %v262, 19
    %v634 = vpop.permute.xlu0 %633
    %635 = vrot.lane.b32.xlu0 %v263, 19
    %v636 = vpop.permute.xlu0 %635
    %vm637 = vcmp.lt.s32.totalorder %v273, 19
    %v638 = vsel %vm637, %v634, %v636
    %v639 = vsel %vm637, %v632, %v634
    %v640 = vsel %vm637, %v630, %v632
    %v641 = vsel %vm637, %v636, %v630
    %s642 = scalar_lea.vmem %s5, 448
    %v643 = vld [vmem:[%s642] sm:$0x3f]
    %v644 = vld [vmem:[%s642 + $0x8] sm:$0x3f]
    %v645 = vld [vmem:[%s642 + $0x10] sm:$0x3f]
    %v646 = vld [vmem:[%s642 + $0x18] sm:$0x3f]
    %v647 = vmul.f32 %v641, %v643
    %v648 = vmul.f32 %v640, %v644
    %v649 = vmul.f32 %v639, %v645
    %v650 = vmul.f32 %v638, %v646
    %v651 = vadd.f32 %v547, %v647
    %v652 = vadd.f32 %v548, %v648
    %v653 = vadd.f32 %v549, %v649
    %v654 = vadd.f32 %v550, %v650
    %655 = vrot.lane.b32.xlu0 %v260, 18
    %v656 = vpop.permute.xlu0 %655
    %657 = vrot.lane.b32.xlu0 %v261, 18
    %v658 = vpop.permute.xlu0 %657
    %659 = vrot.lane.b32.xlu0 %v262, 18
    %v660 = vpop.permute.xlu0 %659
    %661 = vrot.lane.b32.xlu0 %v263, 18
    %v662 = vpop.permute.xlu0 %661
    %vm663 = vcmp.lt.s32.totalorder %v273, 18
    %v664 = vsel %vm663, %v660, %v662
    %v665 = vsel %vm663, %v658, %v660
    %v666 = vsel %vm663, %v656, %v658
    %v667 = vsel %vm663, %v662, %v656
    %s668 = scalar_lea.vmem %s5, 480
    %v669 = vld [vmem:[%s668] sm:$0x3f]
    %v670 = vld [vmem:[%s668 + $0x8] sm:$0x3f]
    %v671 = vld [vmem:[%s668 + $0x10] sm:$0x3f]
    %v672 = vld [vmem:[%s668 + $0x18] sm:$0x3f]
    %v673 = vmul.f32 %v667, %v669
    %v674 = vmul.f32 %v666, %v670
    %v675 = vmul.f32 %v665, %v671
    %v676 = vmul.f32 %v664, %v672
    %v677 = vadd.f32 %v573, %v673
    %v678 = vadd.f32 %v574, %v674
    %v679 = vadd.f32 %v575, %v675
    %v680 = vadd.f32 %v576, %v676
    %681 = vrot.lane.b32.xlu0 %v260, 17
    %v682 = vpop.permute.xlu0 %681
    %683 = vrot.lane.b32.xlu0 %v261, 17
    %v684 = vpop.permute.xlu0 %683
    %685 = vrot.lane.b32.xlu0 %v262, 17
    %v686 = vpop.permute.xlu0 %685
    %687 = vrot.lane.b32.xlu0 %v263, 17
    %v688 = vpop.permute.xlu0 %687
    %vm689 = vcmp.lt.s32.totalorder %v273, 17
    %v690 = vsel %vm689, %v686, %v688
    %v691 = vsel %vm689, %v684, %v686
    %v692 = vsel %vm689, %v682, %v684
    %v693 = vsel %vm689, %v688, %v682
    %s694 = scalar_lea.vmem %s5, 512
    %v695 = vld [vmem:[%s694] sm:$0x3f]
    %v696 = vld [vmem:[%s694 + $0x8] sm:$0x3f]
    %v697 = vld [vmem:[%s694 + $0x10] sm:$0x3f]
    %v698 = vld [vmem:[%s694 + $0x18] sm:$0x3f]
    %v699 = vmul.f32 %v693, %v695
    %v700 = vmul.f32 %v692, %v696
    %v701 = vmul.f32 %v691, %v697
    %v702 = vmul.f32 %v690, %v698
    %v703 = vadd.f32 %v599, %v699
    %v704 = vadd.f32 %v600, %v700
    %v705 = vadd.f32 %v601, %v701
    %v706 = vadd.f32 %v602, %v702
    %707 = vrot.lane.b32.xlu0 %v260, 16
    %v708 = vpop.permute.xlu0 %707
    %709 = vrot.lane.b32.xlu0 %v261, 16
    %v710 = vpop.permute.xlu0 %709
    %711 = vrot.lane.b32.xlu0 %v262, 16
    %v712 = vpop.permute.xlu0 %711
    %713 = vrot.lane.b32.xlu0 %v263, 16
    %v714 = vpop.permute.xlu0 %713
    %vm715 = vcmp.lt.s32.totalorder %v273, 16
    %v716 = vsel %vm715, %v712, %v714
    %v717 = vsel %vm715, %v710, %v712
    %v718 = vsel %vm715, %v708, %v710
    %v719 = vsel %vm715, %v714, %v708
    %s720 = scalar_lea.vmem %s5, 544
    %v721 = vld [vmem:[%s720] sm:$0x3f]
    %v722 = vld [vmem:[%s720 + $0x8] sm:$0x3f]
    %v723 = vld [vmem:[%s720 + $0x10] sm:$0x3f]
    %v724 = vld [vmem:[%s720 + $0x18] sm:$0x3f]
    %v725 = vmul.f32 %v719, %v721
    %v726 = vmul.f32 %v718, %v722
    %v727 = vmul.f32 %v717, %v723
    %v728 = vmul.f32 %v716, %v724
    %v729 = vadd.f32 %v625, %v725
    %v730 = vadd.f32 %v626, %v726
    %v731 = vadd.f32 %v627, %v727
    %v732 = vadd.f32 %v628, %v728
    %733 = vrot.lane.b32.xlu0 %v260, 15
    %v734 = vpop.permute.xlu0 %733
    %735 = vrot.lane.b32.xlu0 %v261, 15
    %v736 = vpop.permute.xlu0 %735
    %737 = vrot.lane.b32.xlu0 %v262, 15
    %v738 = vpop.permute.xlu0 %737
    %739 = vrot.lane.b32.xlu0 %v263, 15
    %v740 = vpop.permute.xlu0 %739
    %vm741 = vcmp.lt.s32.totalorder %v273, 15
    %v742 = vsel %vm741, %v738, %v740
    %v743 = vsel %vm741, %v736, %v738
    %v744 = vsel %vm741, %v734, %v736
    %v745 = vsel %vm741, %v740, %v734
    %s746 = scalar_lea.vmem %s5, 576
    %v747 = vld [vmem:[%s746] sm:$0x3f]
    %v748 = vld [vmem:[%s746 + $0x8] sm:$0x3f]
    %v749 = vld [vmem:[%s746 + $0x10] sm:$0x3f]
    %v750 = vld [vmem:[%s746 + $0x18] sm:$0x3f]
    %v751 = vmul.f32 %v745, %v747
    %v752 = vmul.f32 %v744, %v748
    %v753 = vmul.f32 %v743, %v749
    %v754 = vmul.f32 %v742, %v750
    %v755 = vadd.f32 %v651, %v751
    %v756 = vadd.f32 %v652, %v752
    %v757 = vadd.f32 %v653, %v753
    %v758 = vadd.f32 %v654, %v754
    %759 = vrot.lane.b32.xlu0 %v260, 14
    %v760 = vpop.permute.xlu0 %759
    %761 = vrot.lane.b32.xlu0 %v261, 14
    %v762 = vpop.permute.xlu0 %761
    %763 = vrot.lane.b32.xlu0 %v262, 14
    %v764 = vpop.permute.xlu0 %763
    %765 = vrot.lane.b32.xlu0 %v263, 14
    %v766 = vpop.permute.xlu0 %765
    %vm767 = vcmp.lt.s32.totalorder %v273, 14
    %v768 = vsel %vm767, %v764, %v766
    %v769 = vsel %vm767, %v762, %v764
    %v770 = vsel %vm767, %v760, %v762
    %v771 = vsel %vm767, %v766, %v760
    %s772 = scalar_lea.vmem %s5, 608
    %v773 = vld [vmem:[%s772] sm:$0x3f]
    %v774 = vld [vmem:[%s772 + $0x8] sm:$0x3f]
    %v775 = vld [vmem:[%s772 + $0x10] sm:$0x3f]
    %v776 = vld [vmem:[%s772 + $0x18] sm:$0x3f]
    %v777 = vmul.f32 %v771, %v773
    %v778 = vmul.f32 %v770, %v774
    %v779 = vmul.f32 %v769, %v775
    %v780 = vmul.f32 %v768, %v776
    %v781 = vadd.f32 %v677, %v777
    %v782 = vadd.f32 %v678, %v778
    %v783 = vadd.f32 %v679, %v779
    %v784 = vadd.f32 %v680, %v780
    %785 = vrot.lane.b32.xlu0 %v260, 13
    %v786 = vpop.permute.xlu0 %785
    %787 = vrot.lane.b32.xlu0 %v261, 13
    %v788 = vpop.permute.xlu0 %787
    %789 = vrot.lane.b32.xlu0 %v262, 13
    %v790 = vpop.permute.xlu0 %789
    %791 = vrot.lane.b32.xlu0 %v263, 13
    %v792 = vpop.permute.xlu0 %791
    %vm793 = vcmp.lt.s32.totalorder %v273, 13
    %v794 = vsel %vm793, %v790, %v792
    %v795 = vsel %vm793, %v788, %v790
    %v796 = vsel %vm793, %v786, %v788
    %v797 = vsel %vm793, %v792, %v786
    %s798 = scalar_lea.vmem %s5, 640
    %v799 = vld [vmem:[%s798] sm:$0x3f]
    %v800 = vld [vmem:[%s798 + $0x8] sm:$0x3f]
    %v801 = vld [vmem:[%s798 + $0x10] sm:$0x3f]
    %v802 = vld [vmem:[%s798 + $0x18] sm:$0x3f]
    %v803 = vmul.f32 %v797, %v799
    %v804 = vmul.f32 %v796, %v800
    %v805 = vmul.f32 %v795, %v801
    %v806 = vmul.f32 %v794, %v802
    %v807 = vadd.f32 %v703, %v803
    %v808 = vadd.f32 %v704, %v804
    %v809 = vadd.f32 %v705, %v805
    %v810 = vadd.f32 %v706, %v806
    %811 = vrot.lane.b32.xlu0 %v260, 3
    %v812 = vpop.permute.xlu0 %811
    %813 = vrot.lane.b32.xlu0 %v261, 3
    %v814 = vpop.permute.xlu0 %813
    %815 = vrot.lane.b32.xlu0 %v262, 3
    %v816 = vpop.permute.xlu0 %815
    %817 = vrot.lane.b32.xlu0 %v263, 3
    %v818 = vpop.permute.xlu0 %817
    %vm819 = vcmp.lt.s32.totalorder %v273, 3
    %v820 = vsel %vm819, %v816, %v818
    %v821 = vsel %vm819, %v814, %v816
    %v822 = vsel %vm819, %v812, %v814
    %v823 = vsel %vm819, %v818, %v812
    %s824 = scalar_lea.vmem %s5, 672
    %v825 = vld [vmem:[%s824] sm:$0x3f]
    %v826 = vld [vmem:[%s824 + $0x8] sm:$0x3f]
    %v827 = vld [vmem:[%s824 + $0x10] sm:$0x3f]
    %v828 = vld [vmem:[%s824 + $0x18] sm:$0x3f]
    %v829 = vmul.f32 %v823, %v825
    %v830 = vmul.f32 %v822, %v826
    %v831 = vmul.f32 %v821, %v827
    %v832 = vmul.f32 %v820, %v828
    %v833 = vadd.f32 %v729, %v829
    %v834 = vadd.f32 %v730, %v830
    %v835 = vadd.f32 %v731, %v831
    %v836 = vadd.f32 %v732, %v832
    %837 = vrot.lane.b32.xlu0 %v260, 2
    %v838 = vpop.permute.xlu0 %837
    %839 = vrot.lane.b32.xlu0 %v261, 2
    %v840 = vpop.permute.xlu0 %839
    %841 = vrot.lane.b32.xlu0 %v262, 2
    %v842 = vpop.permute.xlu0 %841
    %843 = vrot.lane.b32.xlu0 %v263, 2
    %v844 = vpop.permute.xlu0 %843
    %vm845 = vcmp.lt.s32.totalorder %v273, 2
    %v846 = vsel %vm845, %v842, %v844
    %v847 = vsel %vm845, %v840, %v842
    %v848 = vsel %vm845, %v838, %v840
    %v849 = vsel %vm845, %v844, %v838
    %s850 = scalar_lea.vmem %s5, 704
    %v851 = vld [vmem:[%s850] sm:$0x3f]
    %v852 = vld [vmem:[%s850 + $0x8] sm:$0x3f]
    %v853 = vld [vmem:[%s850 + $0x10] sm:$0x3f]
    %v854 = vld [vmem:[%s850 + $0x18] sm:$0x3f]
    %v855 = vmul.f32 %v849, %v851
    %v856 = vmul.f32 %v848, %v852
    %v857 = vmul.f32 %v847, %v853
    %v858 = vmul.f32 %v846, %v854
    %v859 = vadd.f32 %v755, %v855
    %v860 = vadd.f32 %v756, %v856
    %v861 = vadd.f32 %v757, %v857
    %v862 = vadd.f32 %v758, %v858
    %863 = vrot.lane.b32.xlu0 %v260, 1
    %v864 = vpop.permute.xlu0 %863
    %865 = vrot.lane.b32.xlu0 %v261, 1
    %v866 = vpop.permute.xlu0 %865
    %867 = vrot.lane.b32.xlu0 %v262, 1
    %v868 = vpop.permute.xlu0 %867
    %869 = vrot.lane.b32.xlu0 %v263, 1
    %v870 = vpop.permute.xlu0 %869
    %vm871 = vcmp.lt.s32.totalorder %v273, 1
    %v872 = vsel %vm871, %v868, %v870
    %v873 = vsel %vm871, %v866, %v868
    %v874 = vsel %vm871, %v864, %v866
    %v875 = vsel %vm871, %v870, %v864
    %s876 = scalar_lea.vmem %s5, 736
    %v877 = vld [vmem:[%s876] sm:$0x3f]
    %v878 = vld [vmem:[%s876 + $0x8] sm:$0x3f]
    %v879 = vld [vmem:[%s876 + $0x10] sm:$0x3f]
    %v880 = vld [vmem:[%s876 + $0x18] sm:$0x3f]
    %v881 = vmul.f32 %v875, %v877
    %v882 = vmul.f32 %v874, %v878
    %v883 = vmul.f32 %v873, %v879
    %v884 = vmul.f32 %v872, %v880
    %v885 = vadd.f32 %v781, %v881
    %v886 = vadd.f32 %v782, %v882
    %v887 = vadd.f32 %v783, %v883
    %v888 = vadd.f32 %v784, %v884
    %s889 = scalar_lea.vmem %s5, 768
    %v890 = vld [vmem:[%s889] sm:$0x3f]
    %v891 = vld [vmem:[%s889 + $0x8] sm:$0x3f]
    %v892 = vld [vmem:[%s889 + $0x10] sm:$0x3f]
    %v893 = vld [vmem:[%s889 + $0x18] sm:$0x3f]
    %v894 = vmul.f32 %v260, %v890
    %v895 = vmul.f32 %v261, %v891
    %v896 = vmul.f32 %v262, %v892
    %v897 = vmul.f32 %v263, %v893
    %v898 = vadd.f32 %v807, %v894
    %v899 = vadd.f32 %v808, %v895
    %v900 = vadd.f32 %v809, %v896
    %v901 = vadd.f32 %v810, %v897
    %902 = vrot.lane.b32.xlu0 %v260, 127
    %v903 = vpop.permute.xlu0 %902
    %904 = vrot.lane.b32.xlu0 %v261, 127
    %v905 = vpop.permute.xlu0 %904
    %906 = vrot.lane.b32.xlu0 %v262, 127
    %v907 = vpop.permute.xlu0 %906
    %908 = vrot.lane.b32.xlu0 %v263, 127
    %v909 = vpop.permute.xlu0 %908
    %vm910 = vcmp.lt.s32.totalorder %v273, 127
    %v911 = vsel %vm910, %v907, %v909
    %v912 = vsel %vm910, %v905, %v907
    %v913 = vsel %vm910, %v903, %v905
    %v914 = vsel %vm910, %v909, %v903
    %s915 = scalar_lea.vmem %s5, 800
    %v916 = vld [vmem:[%s915] sm:$0x3f]
    %v917 = vld [vmem:[%s915 + $0x8] sm:$0x3f]
    %v918 = vld [vmem:[%s915 + $0x10] sm:$0x3f]
    %v919 = vld [vmem:[%s915 + $0x18] sm:$0x3f]
    %v920 = vmul.f32 %v913, %v916
    %v921 = vmul.f32 %v912, %v917
    %v922 = vmul.f32 %v911, %v918
    %v923 = vmul.f32 %v914, %v919
    %v924 = vadd.f32 %v833, %v920
    %v925 = vadd.f32 %v834, %v921
    %v926 = vadd.f32 %v835, %v922
    %v927 = vadd.f32 %v836, %v923
    %928 = vrot.lane.b32.xlu0 %v260, 126
    %v929 = vpop.permute.xlu0 %928
    %930 = vrot.lane.b32.xlu0 %v261, 126
    %v931 = vpop.permute.xlu0 %930
    %932 = vrot.lane.b32.xlu0 %v262, 126
    %v933 = vpop.permute.xlu0 %932
    %934 = vrot.lane.b32.xlu0 %v263, 126
    %v935 = vpop.permute.xlu0 %934
    %vm936 = vcmp.lt.s32.totalorder %v273, 126
    %v937 = vsel %vm936, %v933, %v935
    %v938 = vsel %vm936, %v931, %v933
    %v939 = vsel %vm936, %v929, %v931
    %v940 = vsel %vm936, %v935, %v929
    %s941 = scalar_lea.vmem %s5, 832
    %v942 = vld [vmem:[%s941] sm:$0x3f]
    %v943 = vld [vmem:[%s941 + $0x8] sm:$0x3f]
    %v944 = vld [vmem:[%s941 + $0x10] sm:$0x3f]
    %v945 = vld [vmem:[%s941 + $0x18] sm:$0x3f]
    %v946 = vmul.f32 %v939, %v942
    %v947 = vmul.f32 %v938, %v943
    %v948 = vmul.f32 %v937, %v944
    %v949 = vmul.f32 %v940, %v945
    %v950 = vadd.f32 %v859, %v946
    %v951 = vadd.f32 %v860, %v947
    %v952 = vadd.f32 %v861, %v948
    %v953 = vadd.f32 %v862, %v949
    %954 = vrot.lane.b32.xlu0 %v260, 125
    %v955 = vpop.permute.xlu0 %954
    %956 = vrot.lane.b32.xlu0 %v261, 125
    %v957 = vpop.permute.xlu0 %956
    %958 = vrot.lane.b32.xlu0 %v262, 125
    %v959 = vpop.permute.xlu0 %958
    %960 = vrot.lane.b32.xlu0 %v263, 125
    %v961 = vpop.permute.xlu0 %960
    %vm962 = vcmp.lt.s32.totalorder %v273, 125
    %v963 = vsel %vm962, %v959, %v961
    %v964 = vsel %vm962, %v957, %v959
    %v965 = vsel %vm962, %v955, %v957
    %v966 = vsel %vm962, %v961, %v955
    %s967 = scalar_lea.vmem %s5, 864
    %v968 = vld [vmem:[%s967] sm:$0x3f]
    %v969 = vld [vmem:[%s967 + $0x8] sm:$0x3f]
    %v970 = vld [vmem:[%s967 + $0x10] sm:$0x3f]
    %v971 = vld [vmem:[%s967 + $0x18] sm:$0x3f]
    %v972 = vmul.f32 %v965, %v968
    %v973 = vmul.f32 %v964, %v969
    %v974 = vmul.f32 %v963, %v970
    %v975 = vmul.f32 %v966, %v971
    %v976 = vadd.f32 %v885, %v972
    %v977 = vadd.f32 %v886, %v973
    %v978 = vadd.f32 %v887, %v974
    %v979 = vadd.f32 %v888, %v975
    %980 = vrot.lane.b32.xlu0 %v260, 115
    %v981 = vpop.permute.xlu0 %980
    %982 = vrot.lane.b32.xlu0 %v261, 115
    %v983 = vpop.permute.xlu0 %982
    %984 = vrot.lane.b32.xlu0 %v262, 115
    %v985 = vpop.permute.xlu0 %984
    %986 = vrot.lane.b32.xlu0 %v263, 115
    %v987 = vpop.permute.xlu0 %986
    %vm988 = vcmp.lt.s32.totalorder %v273, 115
    %v989 = vsel %vm988, %v985, %v987
    %v990 = vsel %vm988, %v983, %v985
    %v991 = vsel %vm988, %v981, %v983
    %v992 = vsel %vm988, %v987, %v981
    %s993 = scalar_lea.vmem %s5, 896
    %v994 = vld [vmem:[%s993] sm:$0x3f]
    %v995 = vld [vmem:[%s993 + $0x8] sm:$0x3f]
    %v996 = vld [vmem:[%s993 + $0x10] sm:$0x3f]
    %v997 = vld [vmem:[%s993 + $0x18] sm:$0x3f]
    %v998 = vmul.f32 %v991, %v994
    %v999 = vmul.f32 %v990, %v995
    %v1000 = vmul.f32 %v989, %v996
    %v1001 = vmul.f32 %v992, %v997
    %v1002 = vadd.f32 %v898, %v998
    %v1003 = vadd.f32 %v899, %v999
    %v1004 = vadd.f32 %v900, %v1000
    %v1005 = vadd.f32 %v901, %v1001
    %1006 = vrot.lane.b32.xlu0 %v260, 114
    %v1007 = vpop.permute.xlu0 %1006
    %1008 = vrot.lane.b32.xlu0 %v261, 114
    %v1009 = vpop.permute.xlu0 %1008
    %1010 = vrot.lane.b32.xlu0 %v262, 114
    %v1011 = vpop.permute.xlu0 %1010
    %1012 = vrot.lane.b32.xlu0 %v263, 114
    %v1013 = vpop.permute.xlu0 %1012
    %vm1014 = vcmp.lt.s32.totalorder %v273, 114
    %v1015 = vsel %vm1014, %v1011, %v1013
    %v1016 = vsel %vm1014, %v1009, %v1011
    %v1017 = vsel %vm1014, %v1007, %v1009
    %v1018 = vsel %vm1014, %v1013, %v1007
    %s1019 = scalar_lea.vmem %s5, 928
    %v1020 = vld [vmem:[%s1019] sm:$0x3f]
    %v1021 = vld [vmem:[%s1019 + $0x8] sm:$0x3f]
    %v1022 = vld [vmem:[%s1019 + $0x10] sm:$0x3f]
    %v1023 = vld [vmem:[%s1019 + $0x18] sm:$0x3f]
    %v1024 = vmul.f32 %v1017, %v1020
    %v1025 = vmul.f32 %v1016, %v1021
    %v1026 = vmul.f32 %v1015, %v1022
    %v1027 = vmul.f32 %v1018, %v1023
    %v1028 = vadd.f32 %v924, %v1024
    %v1029 = vadd.f32 %v925, %v1025
    %v1030 = vadd.f32 %v926, %v1026
    %v1031 = vadd.f32 %v927, %v1027
    %1032 = vrot.lane.b32.xlu0 %v260, 113
    %v1033 = vpop.permute.xlu0 %1032
    %1034 = vrot.lane.b32.xlu0 %v261, 113
    %v1035 = vpop.permute.xlu0 %1034
    %1036 = vrot.lane.b32.xlu0 %v262, 113
    %v1037 = vpop.permute.xlu0 %1036
    %1038 = vrot.lane.b32.xlu0 %v263, 113
    %v1039 = vpop.permute.xlu0 %1038
    %vm1040 = vcmp.lt.s32.totalorder %v273, 113
    %v1041 = vsel %vm1040, %v1037, %v1039
    %v1042 = vsel %vm1040, %v1035, %v1037
    %v1043 = vsel %vm1040, %v1033, %v1035
    %v1044 = vsel %vm1040, %v1039, %v1033
    %s1045 = scalar_lea.vmem %s5, 960
    %v1046 = vld [vmem:[%s1045] sm:$0x3f]
    %v1047 = vld [vmem:[%s1045 + $0x8] sm:$0x3f]
    %v1048 = vld [vmem:[%s1045 + $0x10] sm:$0x3f]
    %v1049 = vld [vmem:[%s1045 + $0x18] sm:$0x3f]
    %v1050 = vmul.f32 %v1043, %v1046
    %v1051 = vmul.f32 %v1042, %v1047
    %v1052 = vmul.f32 %v1041, %v1048
    %v1053 = vmul.f32 %v1044, %v1049
    %v1054 = vadd.f32 %v950, %v1050
    %v1055 = vadd.f32 %v951, %v1051
    %v1056 = vadd.f32 %v952, %v1052
    %v1057 = vadd.f32 %v953, %v1053
    %1058 = vrot.lane.b32.xlu0 %v260, 112
    %v1059 = vpop.permute.xlu0 %1058
    %1060 = vrot.lane.b32.xlu0 %v261, 112
    %v1061 = vpop.permute.xlu0 %1060
    %1062 = vrot.lane.b32.xlu0 %v262, 112
    %v1063 = vpop.permute.xlu0 %1062
    %1064 = vrot.lane.b32.xlu0 %v263, 112
    %v1065 = vpop.permute.xlu0 %1064
    %vm1066 = vcmp.lt.s32.totalorder %v273, 112
    %v1067 = vsel %vm1066, %v1063, %v1065
    %v1068 = vsel %vm1066, %v1061, %v1063
    %v1069 = vsel %vm1066, %v1059, %v1061
    %v1070 = vsel %vm1066, %v1065, %v1059
    %s1071 = scalar_lea.vmem %s5, 992
    %v1072 = vld [vmem:[%s1071] sm:$0x3f]
    %v1073 = vld [vmem:[%s1071 + $0x8] sm:$0x3f]
    %v1074 = vld [vmem:[%s1071 + $0x10] sm:$0x3f]
    %v1075 = vld [vmem:[%s1071 + $0x18] sm:$0x3f]
    %v1076 = vmul.f32 %v1069, %v1072
    %v1077 = vmul.f32 %v1068, %v1073
    %v1078 = vmul.f32 %v1067, %v1074
    %v1079 = vmul.f32 %v1070, %v1075
    %v1080 = vadd.f32 %v976, %v1076
    %v1081 = vadd.f32 %v977, %v1077
    %v1082 = vadd.f32 %v978, %v1078
    %v1083 = vadd.f32 %v979, %v1079
    %1084 = vrot.lane.b32.xlu0 %v260, 111
    %v1085 = vpop.permute.xlu0 %1084
    %1086 = vrot.lane.b32.xlu0 %v261, 111
    %v1087 = vpop.permute.xlu0 %1086
    %1088 = vrot.lane.b32.xlu0 %v262, 111
    %v1089 = vpop.permute.xlu0 %1088
    %1090 = vrot.lane.b32.xlu0 %v263, 111
    %v1091 = vpop.permute.xlu0 %1090
    %vm1092 = vcmp.lt.s32.totalorder %v273, 111
    %v1093 = vsel %vm1092, %v1089, %v1091
    %v1094 = vsel %vm1092, %v1087, %v1089
    %v1095 = vsel %vm1092, %v1085, %v1087
    %v1096 = vsel %vm1092, %v1091, %v1085
    %s1097 = scalar_lea.vmem %s5, 1024
    %v1098 = vld [vmem:[%s1097] sm:$0x3f]
    %v1099 = vld [vmem:[%s1097 + $0x8] sm:$0x3f]
    %v1100 = vld [vmem:[%s1097 + $0x10] sm:$0x3f]
    %v1101 = vld [vmem:[%s1097 + $0x18] sm:$0x3f]
    %v1102 = vmul.f32 %v1095, %v1098
    %v1103 = vmul.f32 %v1094, %v1099
    %v1104 = vmul.f32 %v1093, %v1100
    %v1105 = vmul.f32 %v1096, %v1101
    %v1106 = vadd.f32 %v1002, %v1102
    %v1107 = vadd.f32 %v1003, %v1103
    %v1108 = vadd.f32 %v1004, %v1104
    %v1109 = vadd.f32 %v1005, %v1105
    %1110 = vrot.lane.b32.xlu0 %v260, 110
    %v1111 = vpop.permute.xlu0 %1110
    %1112 = vrot.lane.b32.xlu0 %v261, 110
    %v1113 = vpop.permute.xlu0 %1112
    %1114 = vrot.lane.b32.xlu0 %v262, 110
    %v1115 = vpop.permute.xlu0 %1114
    %1116 = vrot.lane.b32.xlu0 %v263, 110
    %v1117 = vpop.permute.xlu0 %1116
    %vm1118 = vcmp.lt.s32.totalorder %v273, 110
    %v1119 = vsel %vm1118, %v1115, %v1117
    %v1120 = vsel %vm1118, %v1113, %v1115
    %v1121 = vsel %vm1118, %v1111, %v1113
    %v1122 = vsel %vm1118, %v1117, %v1111
    %s1123 = scalar_lea.vmem %s5, 1056
    %v1124 = vld [vmem:[%s1123] sm:$0x3f]
    %v1125 = vld [vmem:[%s1123 + $0x8] sm:$0x3f]
    %v1126 = vld [vmem:[%s1123 + $0x10] sm:$0x3f]
    %v1127 = vld [vmem:[%s1123 + $0x18] sm:$0x3f]
    %v1128 = vmul.f32 %v1121, %v1124
    %v1129 = vmul.f32 %v1120, %v1125
    %v1130 = vmul.f32 %v1119, %v1126
    %v1131 = vmul.f32 %v1122, %v1127
    %v1132 = vadd.f32 %v1028, %v1128
    %v1133 = vadd.f32 %v1029, %v1129
    %v1134 = vadd.f32 %v1030, %v1130
    %v1135 = vadd.f32 %v1031, %v1131
    %1136 = vrot.lane.b32.xlu0 %v260, 109
    %v1137 = vpop.permute.xlu0 %1136
    %1138 = vrot.lane.b32.xlu0 %v261, 109
    %v1139 = vpop.permute.xlu0 %1138
    %1140 = vrot.lane.b32.xlu0 %v262, 109
    %v1141 = vpop.permute.xlu0 %1140
    %1142 = vrot.lane.b32.xlu0 %v263, 109
    %v1143 = vpop.permute.xlu0 %1142
    %vm1144 = vcmp.lt.s32.totalorder %v273, 109
    %v1145 = vsel %vm1144, %v1141, %v1143
    %v1146 = vsel %vm1144, %v1139, %v1141
    %v1147 = vsel %vm1144, %v1137, %v1139
    %v1148 = vsel %vm1144, %v1143, %v1137
    %s1149 = scalar_lea.vmem %s5, 1088
    %v1150 = vld [vmem:[%s1149] sm:$0x3f]
    %v1151 = vld [vmem:[%s1149 + $0x8] sm:$0x3f]
    %v1152 = vld [vmem:[%s1149 + $0x10] sm:$0x3f]
    %v1153 = vld [vmem:[%s1149 + $0x18] sm:$0x3f]
    %v1154 = vmul.f32 %v1147, %v1150
    %v1155 = vmul.f32 %v1146, %v1151
    %v1156 = vmul.f32 %v1145, %v1152
    %v1157 = vmul.f32 %v1148, %v1153
    %v1158 = vadd.f32 %v1054, %v1154
    %v1159 = vadd.f32 %v1055, %v1155
    %v1160 = vadd.f32 %v1056, %v1156
    %v1161 = vadd.f32 %v1057, %v1157
    %1162 = vrot.lane.b32.xlu0 %v260, 99
    %v1163 = vpop.permute.xlu0 %1162
    %1164 = vrot.lane.b32.xlu0 %v261, 99
    %v1165 = vpop.permute.xlu0 %1164
    %1166 = vrot.lane.b32.xlu0 %v262, 99
    %v1167 = vpop.permute.xlu0 %1166
    %1168 = vrot.lane.b32.xlu0 %v263, 99
    %v1169 = vpop.permute.xlu0 %1168
    %vm1170 = vcmp.lt.s32.totalorder %v273, 99
    %v1171 = vsel %vm1170, %v1167, %v1169
    %v1172 = vsel %vm1170, %v1165, %v1167
    %v1173 = vsel %vm1170, %v1163, %v1165
    %v1174 = vsel %vm1170, %v1169, %v1163
    %s1175 = scalar_lea.vmem %s5, 1120
    %v1176 = vld [vmem:[%s1175] sm:$0x3f]
    %v1177 = vld [vmem:[%s1175 + $0x8] sm:$0x3f]
    %v1178 = vld [vmem:[%s1175 + $0x10] sm:$0x3f]
    %v1179 = vld [vmem:[%s1175 + $0x18] sm:$0x3f]
    %v1180 = vmul.f32 %v1173, %v1176
    %v1181 = vmul.f32 %v1172, %v1177
    %v1182 = vmul.f32 %v1171, %v1178
    %v1183 = vmul.f32 %v1174, %v1179
    %v1184 = vadd.f32 %v1080, %v1180
    %v1185 = vadd.f32 %v1081, %v1181
    %v1186 = vadd.f32 %v1082, %v1182
    %v1187 = vadd.f32 %v1083, %v1183
    %1188 = vrot.lane.b32.xlu0 %v260, 98
    %v1189 = vpop.permute.xlu0 %1188
    %1190 = vrot.lane.b32.xlu0 %v261, 98
    %v1191 = vpop.permute.xlu0 %1190
    %1192 = vrot.lane.b32.xlu0 %v262, 98
    %v1193 = vpop.permute.xlu0 %1192
    %1194 = vrot.lane.b32.xlu0 %v263, 98
    %v1195 = vpop.permute.xlu0 %1194
    %vm1196 = vcmp.lt.s32.totalorder %v273, 98
    %v1197 = vsel %vm1196, %v1193, %v1195
    %v1198 = vsel %vm1196, %v1191, %v1193
    %v1199 = vsel %vm1196, %v1189, %v1191
    %v1200 = vsel %vm1196, %v1195, %v1189
    %s1201 = scalar_lea.vmem %s5, 1152
    %v1202 = vld [vmem:[%s1201] sm:$0x3f]
    %v1203 = vld [vmem:[%s1201 + $0x8] sm:$0x3f]
    %v1204 = vld [vmem:[%s1201 + $0x10] sm:$0x3f]
    %v1205 = vld [vmem:[%s1201 + $0x18] sm:$0x3f]
    %v1206 = vmul.f32 %v1199, %v1202
    %v1207 = vmul.f32 %v1198, %v1203
    %v1208 = vmul.f32 %v1197, %v1204
    %v1209 = vmul.f32 %v1200, %v1205
    %v1210 = vadd.f32 %v1106, %v1206
    %v1211 = vadd.f32 %v1107, %v1207
    %v1212 = vadd.f32 %v1108, %v1208
    %v1213 = vadd.f32 %v1109, %v1209
    %1214 = vrot.lane.b32.xlu0 %v260, 97
    %v1215 = vpop.permute.xlu0 %1214
    %1216 = vrot.lane.b32.xlu0 %v261, 97
    %v1217 = vpop.permute.xlu0 %1216
    %1218 = vrot.lane.b32.xlu0 %v262, 97
    %v1219 = vpop.permute.xlu0 %1218
    %1220 = vrot.lane.b32.xlu0 %v263, 97
    %v1221 = vpop.permute.xlu0 %1220
    %vm1222 = vcmp.lt.s32.totalorder %v273, 97
    %v1223 = vsel %vm1222, %v1219, %v1221
    %v1224 = vsel %vm1222, %v1217, %v1219
    %v1225 = vsel %vm1222, %v1215, %v1217
    %v1226 = vsel %vm1222, %v1221, %v1215
    %s1227 = scalar_lea.vmem %s5, 1184
    %v1228 = vld [vmem:[%s1227] sm:$0x3f]
    %v1229 = vld [vmem:[%s1227 + $0x8] sm:$0x3f]
    %v1230 = vld [vmem:[%s1227 + $0x10] sm:$0x3f]
    %v1231 = vld [vmem:[%s1227 + $0x18] sm:$0x3f]
    %v1232 = vmul.f32 %v1225, %v1228
    %v1233 = vmul.f32 %v1224, %v1229
    %v1234 = vmul.f32 %v1223, %v1230
    %v1235 = vmul.f32 %v1226, %v1231
    %v1236 = vadd.f32 %v1132, %v1232
    %v1237 = vadd.f32 %v1133, %v1233
    %v1238 = vadd.f32 %v1134, %v1234
    %v1239 = vadd.f32 %v1135, %v1235
    %1240 = vrot.lane.b32.xlu0 %v260, 96
    %v1241 = vpop.permute.xlu0 %1240
    %1242 = vrot.lane.b32.xlu0 %v261, 96
    %v1243 = vpop.permute.xlu0 %1242
    %1244 = vrot.lane.b32.xlu0 %v262, 96
    %v1245 = vpop.permute.xlu0 %1244
    %1246 = vrot.lane.b32.xlu0 %v263, 96
    %v1247 = vpop.permute.xlu0 %1246
    %vm1248 = vcmp.lt.s32.totalorder %v273, 96
    %v1249 = vsel %vm1248, %v1245, %v1247
    %v1250 = vsel %vm1248, %v1243, %v1245
    %v1251 = vsel %vm1248, %v1241, %v1243
    %v1252 = vsel %vm1248, %v1247, %v1241
    %s1253 = scalar_lea.vmem %s5, 1216
    %v1254 = vld [vmem:[%s1253] sm:$0x3f]
    %v1255 = vld [vmem:[%s1253 + $0x8] sm:$0x3f]
    %v1256 = vld [vmem:[%s1253 + $0x10] sm:$0x3f]
    %v1257 = vld [vmem:[%s1253 + $0x18] sm:$0x3f]
    %v1258 = vmul.f32 %v1251, %v1254
    %v1259 = vmul.f32 %v1250, %v1255
    %v1260 = vmul.f32 %v1249, %v1256
    %v1261 = vmul.f32 %v1252, %v1257
    %v1262 = vadd.f32 %v1158, %v1258
    %v1263 = vadd.f32 %v1159, %v1259
    %v1264 = vadd.f32 %v1160, %v1260
    %v1265 = vadd.f32 %v1161, %v1261
    %1266 = vrot.lane.b32.xlu0 %v260, 95
    %v1267 = vpop.permute.xlu0 %1266
    %1268 = vrot.lane.b32.xlu0 %v261, 95
    %v1269 = vpop.permute.xlu0 %1268
    %1270 = vrot.lane.b32.xlu0 %v262, 95
    %v1271 = vpop.permute.xlu0 %1270
    %1272 = vrot.lane.b32.xlu0 %v263, 95
    %v1273 = vpop.permute.xlu0 %1272
    %vm1274 = vcmp.lt.s32.totalorder %v273, 95
    %v1275 = vsel %vm1274, %v1271, %v1273
    %v1276 = vsel %vm1274, %v1269, %v1271
    %v1277 = vsel %vm1274, %v1267, %v1269
    %v1278 = vsel %vm1274, %v1273, %v1267
    %s1279 = scalar_lea.vmem %s5, 1248
    %v1280 = vld [vmem:[%s1279] sm:$0x3f]
    %v1281 = vld [vmem:[%s1279 + $0x8] sm:$0x3f]
    %v1282 = vld [vmem:[%s1279 + $0x10] sm:$0x3f]
    %v1283 = vld [vmem:[%s1279 + $0x18] sm:$0x3f]
    %v1284 = vmul.f32 %v1277, %v1280
    %v1285 = vmul.f32 %v1276, %v1281
    %v1286 = vmul.f32 %v1275, %v1282
    %v1287 = vmul.f32 %v1278, %v1283
    %v1288 = vadd.f32 %v1184, %v1284
    %v1289 = vadd.f32 %v1185, %v1285
    %v1290 = vadd.f32 %v1186, %v1286
    %v1291 = vadd.f32 %v1187, %v1287
    %1292 = vrot.lane.b32.xlu0 %v260, 94
    %v1293 = vpop.permute.xlu0 %1292
    %1294 = vrot.lane.b32.xlu0 %v261, 94
    %v1295 = vpop.permute.xlu0 %1294
    %1296 = vrot.lane.b32.xlu0 %v262, 94
    %v1297 = vpop.permute.xlu0 %1296
    %1298 = vrot.lane.b32.xlu0 %v263, 94
    %v1299 = vpop.permute.xlu0 %1298
    %vm1300 = vcmp.lt.s32.totalorder %v273, 94
    %v1301 = vsel %vm1300, %v1297, %v1299
    %v1302 = vsel %vm1300, %v1295, %v1297
    %v1303 = vsel %vm1300, %v1293, %v1295
    %v1304 = vsel %vm1300, %v1299, %v1293
    %s1305 = scalar_lea.vmem %s5, 1280
    %v1306 = vld [vmem:[%s1305] sm:$0x3f]
    %v1307 = vld [vmem:[%s1305 + $0x8] sm:$0x3f]
    %v1308 = vld [vmem:[%s1305 + $0x10] sm:$0x3f]
    %v1309 = vld [vmem:[%s1305 + $0x18] sm:$0x3f]
    %v1310 = vmul.f32 %v1303, %v1306
    %v1311 = vmul.f32 %v1302, %v1307
    %v1312 = vmul.f32 %v1301, %v1308
    %v1313 = vmul.f32 %v1304, %v1309
    %v1314 = vadd.f32 %v1210, %v1310
    %v1315 = vadd.f32 %v1211, %v1311
    %v1316 = vadd.f32 %v1212, %v1312
    %v1317 = vadd.f32 %v1213, %v1313
    %1318 = vrot.lane.b32.xlu0 %v260, 93
    %v1319 = vpop.permute.xlu0 %1318
    %1320 = vrot.lane.b32.xlu0 %v261, 93
    %v1321 = vpop.permute.xlu0 %1320
    %1322 = vrot.lane.b32.xlu0 %v262, 93
    %v1323 = vpop.permute.xlu0 %1322
    %1324 = vrot.lane.b32.xlu0 %v263, 93
    %v1325 = vpop.permute.xlu0 %1324
    %vm1326 = vcmp.lt.s32.totalorder %v273, 93
    %v1327 = vsel %vm1326, %v1323, %v1325
    %v1328 = vsel %vm1326, %v1321, %v1323
    %v1329 = vsel %vm1326, %v1319, %v1321
    %v1330 = vsel %vm1326, %v1325, %v1319
    %s1331 = scalar_lea.vmem %s5, 1312
    %v1332 = vld [vmem:[%s1331] sm:$0x3f]
    %v1333 = vld [vmem:[%s1331 + $0x8] sm:$0x3f]
    %v1334 = vld [vmem:[%s1331 + $0x10] sm:$0x3f]
    %v1335 = vld [vmem:[%s1331 + $0x18] sm:$0x3f]
    %v1336 = vmul.f32 %v1329, %v1332
    %v1337 = vmul.f32 %v1328, %v1333
    %v1338 = vmul.f32 %v1327, %v1334
    %v1339 = vmul.f32 %v1330, %v1335
    %v1340 = vadd.f32 %v1236, %v1336
    %v1341 = vadd.f32 %v1237, %v1337
    %v1342 = vadd.f32 %v1238, %v1338
    %v1343 = vadd.f32 %v1239, %v1339
    %1344 = vrot.lane.b32.xlu0 %v260, 83
    %v1345 = vpop.permute.xlu0 %1344
    %1346 = vrot.lane.b32.xlu0 %v261, 83
    %v1347 = vpop.permute.xlu0 %1346
    %1348 = vrot.lane.b32.xlu0 %v262, 83
    %v1349 = vpop.permute.xlu0 %1348
    %1350 = vrot.lane.b32.xlu0 %v263, 83
    %v1351 = vpop.permute.xlu0 %1350
    %vm1352 = vcmp.lt.s32.totalorder %v273, 83
    %v1353 = vsel %vm1352, %v1349, %v1351
    %v1354 = vsel %vm1352, %v1347, %v1349
    %v1355 = vsel %vm1352, %v1345, %v1347
    %v1356 = vsel %vm1352, %v1351, %v1345
    %s1357 = scalar_lea.vmem %s5, 1344
    %v1358 = vld [vmem:[%s1357] sm:$0x3f]
    %v1359 = vld [vmem:[%s1357 + $0x8] sm:$0x3f]
    %v1360 = vld [vmem:[%s1357 + $0x10] sm:$0x3f]
    %v1361 = vld [vmem:[%s1357 + $0x18] sm:$0x3f]
    %v1362 = vmul.f32 %v1355, %v1358
    %v1363 = vmul.f32 %v1354, %v1359
    %v1364 = vmul.f32 %v1353, %v1360
    %v1365 = vmul.f32 %v1356, %v1361
    %v1366 = vadd.f32 %v1262, %v1362
    %v1367 = vadd.f32 %v1263, %v1363
    %v1368 = vadd.f32 %v1264, %v1364
    %v1369 = vadd.f32 %v1265, %v1365
    %1370 = vrot.lane.b32.xlu0 %v260, 82
    %v1371 = vpop.permute.xlu0 %1370
    %1372 = vrot.lane.b32.xlu0 %v261, 82
    %v1373 = vpop.permute.xlu0 %1372
    %1374 = vrot.lane.b32.xlu0 %v262, 82
    %v1375 = vpop.permute.xlu0 %1374
    %1376 = vrot.lane.b32.xlu0 %v263, 82
    %v1377 = vpop.permute.xlu0 %1376
    %vm1378 = vcmp.lt.s32.totalorder %v273, 82
    %v1379 = vsel %vm1378, %v1375, %v1377
    %v1380 = vsel %vm1378, %v1373, %v1375
    %v1381 = vsel %vm1378, %v1371, %v1373
    %v1382 = vsel %vm1378, %v1377, %v1371
    %s1383 = scalar_lea.vmem %s5, 1376
    %v1384 = vld [vmem:[%s1383] sm:$0x3f]
    %v1385 = vld [vmem:[%s1383 + $0x8] sm:$0x3f]
    %v1386 = vld [vmem:[%s1383 + $0x10] sm:$0x3f]
    %v1387 = vld [vmem:[%s1383 + $0x18] sm:$0x3f]
    %v1388 = vmul.f32 %v1381, %v1384
    %v1389 = vmul.f32 %v1380, %v1385
    %v1390 = vmul.f32 %v1379, %v1386
    %v1391 = vmul.f32 %v1382, %v1387
    %v1392 = vadd.f32 %v1288, %v1388
    %v1393 = vadd.f32 %v1289, %v1389
    %v1394 = vadd.f32 %v1290, %v1390
    %v1395 = vadd.f32 %v1291, %v1391
    %1396 = vrot.lane.b32.xlu0 %v260, 81
    %v1397 = vpop.permute.xlu0 %1396
    %1398 = vrot.lane.b32.xlu0 %v261, 81
    %v1399 = vpop.permute.xlu0 %1398
    %1400 = vrot.lane.b32.xlu0 %v262, 81
    %v1401 = vpop.permute.xlu0 %1400
    %1402 = vrot.lane.b32.xlu0 %v263, 81
    %v1403 = vpop.permute.xlu0 %1402
    %vm1404 = vcmp.lt.s32.totalorder %v273, 81
    %v1405 = vsel %vm1404, %v1401, %v1403
    %v1406 = vsel %vm1404, %v1399, %v1401
    %v1407 = vsel %vm1404, %v1397, %v1399
    %v1408 = vsel %vm1404, %v1403, %v1397
    %s1409 = scalar_lea.vmem %s5, 1408
    %v1410 = vld [vmem:[%s1409] sm:$0x3f]
    %v1411 = vld [vmem:[%s1409 + $0x8] sm:$0x3f]
    %v1412 = vld [vmem:[%s1409 + $0x10] sm:$0x3f]
    %v1413 = vld [vmem:[%s1409 + $0x18] sm:$0x3f]
    %v1414 = vmul.f32 %v1407, %v1410
    %v1415 = vmul.f32 %v1406, %v1411
    %v1416 = vmul.f32 %v1405, %v1412
    %v1417 = vmul.f32 %v1408, %v1413
    %v1418 = vadd.f32 %v1314, %v1414
    %v1419 = vadd.f32 %v1315, %v1415
    %v1420 = vadd.f32 %v1316, %v1416
    %v1421 = vadd.f32 %v1317, %v1417
    %1422 = vrot.lane.b32.xlu0 %v260, 80
    %v1423 = vpop.permute.xlu0 %1422
    %1424 = vrot.lane.b32.xlu0 %v261, 80
    %v1425 = vpop.permute.xlu0 %1424
    %1426 = vrot.lane.b32.xlu0 %v262, 80
    %v1427 = vpop.permute.xlu0 %1426
    %1428 = vrot.lane.b32.xlu0 %v263, 80
    %v1429 = vpop.permute.xlu0 %1428
    %vm1430 = vcmp.lt.s32.totalorder %v273, 80
    %v1431 = vsel %vm1430, %v1427, %v1429
    %v1432 = vsel %vm1430, %v1425, %v1427
    %v1433 = vsel %vm1430, %v1423, %v1425
    %v1434 = vsel %vm1430, %v1429, %v1423
    %s1435 = scalar_lea.vmem %s5, 1440
    %v1436 = vld [vmem:[%s1435] sm:$0x3f]
    %v1437 = vld [vmem:[%s1435 + $0x8] sm:$0x3f]
    %v1438 = vld [vmem:[%s1435 + $0x10] sm:$0x3f]
    %v1439 = vld [vmem:[%s1435 + $0x18] sm:$0x3f]
    %v1440 = vmul.f32 %v1433, %v1436
    %v1441 = vmul.f32 %v1432, %v1437
    %v1442 = vmul.f32 %v1431, %v1438
    %v1443 = vmul.f32 %v1434, %v1439
    %v1444 = vadd.f32 %v1340, %v1440
    %v1445 = vadd.f32 %v1341, %v1441
    %v1446 = vadd.f32 %v1342, %v1442
    %v1447 = vadd.f32 %v1343, %v1443
    %1448 = vrot.lane.b32.xlu0 %v260, 79
    %v1449 = vpop.permute.xlu0 %1448
    %1450 = vrot.lane.b32.xlu0 %v261, 79
    %v1451 = vpop.permute.xlu0 %1450
    %1452 = vrot.lane.b32.xlu0 %v262, 79
    %v1453 = vpop.permute.xlu0 %1452
    %1454 = vrot.lane.b32.xlu0 %v263, 79
    %v1455 = vpop.permute.xlu0 %1454
    %vm1456 = vcmp.lt.s32.totalorder %v273, 79
    %v1457 = vsel %vm1456, %v1453, %v1455
    %v1458 = vsel %vm1456, %v1451, %v1453
    %v1459 = vsel %vm1456, %v1449, %v1451
    %v1460 = vsel %vm1456, %v1455, %v1449
    %s1461 = scalar_lea.vmem %s5, 1472
    %v1462 = vld [vmem:[%s1461] sm:$0x3f]
    %v1463 = vld [vmem:[%s1461 + $0x8] sm:$0x3f]
    %v1464 = vld [vmem:[%s1461 + $0x10] sm:$0x3f]
    %v1465 = vld [vmem:[%s1461 + $0x18] sm:$0x3f]
    %v1466 = vmul.f32 %v1459, %v1462
    %v1467 = vmul.f32 %v1458, %v1463
    %v1468 = vmul.f32 %v1457, %v1464
    %v1469 = vmul.f32 %v1460, %v1465
    %v1470 = vadd.f32 %v1366, %v1466
    %v1471 = vadd.f32 %v1367, %v1467
    %v1472 = vadd.f32 %v1368, %v1468
    %v1473 = vadd.f32 %v1369, %v1469
    %1474 = vrot.lane.b32.xlu0 %v260, 78
    %v1475 = vpop.permute.xlu0 %1474
    %1476 = vrot.lane.b32.xlu0 %v261, 78
    %v1477 = vpop.permute.xlu0 %1476
    %1478 = vrot.lane.b32.xlu0 %v262, 78
    %v1479 = vpop.permute.xlu0 %1478
    %1480 = vrot.lane.b32.xlu0 %v263, 78
    %v1481 = vpop.permute.xlu0 %1480
    %vm1482 = vcmp.lt.s32.totalorder %v273, 78
    %v1483 = vsel %vm1482, %v1479, %v1481
    %v1484 = vsel %vm1482, %v1477, %v1479
    %v1485 = vsel %vm1482, %v1475, %v1477
    %v1486 = vsel %vm1482, %v1481, %v1475
    %s1487 = scalar_lea.vmem %s5, 1504
    %v1488 = vld [vmem:[%s1487] sm:$0x3f]
    %v1489 = vld [vmem:[%s1487 + $0x8] sm:$0x3f]
    %v1490 = vld [vmem:[%s1487 + $0x10] sm:$0x3f]
    %v1491 = vld [vmem:[%s1487 + $0x18] sm:$0x3f]
    %v1492 = vmul.f32 %v1485, %v1488
    %v1493 = vmul.f32 %v1484, %v1489
    %v1494 = vmul.f32 %v1483, %v1490
    %v1495 = vmul.f32 %v1486, %v1491
    %v1496 = vadd.f32 %v1392, %v1492
    %v1497 = vadd.f32 %v1393, %v1493
    %v1498 = vadd.f32 %v1394, %v1494
    %v1499 = vadd.f32 %v1395, %v1495
    %1500 = vrot.lane.b32.xlu0 %v260, 77
    %v1501 = vpop.permute.xlu0 %1500
    %1502 = vrot.lane.b32.xlu0 %v261, 77
    %v1503 = vpop.permute.xlu0 %1502
    %1504 = vrot.lane.b32.xlu0 %v262, 77
    %v1505 = vpop.permute.xlu0 %1504
    %1506 = vrot.lane.b32.xlu0 %v263, 77
    %v1507 = vpop.permute.xlu0 %1506
    %vm1508 = vcmp.lt.s32.totalorder %v273, 77
    %v1509 = vsel %vm1508, %v1505, %v1507
    %v1510 = vsel %vm1508, %v1503, %v1505
    %v1511 = vsel %vm1508, %v1501, %v1503
    %v1512 = vsel %vm1508, %v1507, %v1501
    %s1513 = scalar_lea.vmem %s5, 1536
    %v1514 = vld [vmem:[%s1513] sm:$0x3f]
    %v1515 = vld [vmem:[%s1513 + $0x8] sm:$0x3f]
    %v1516 = vld [vmem:[%s1513 + $0x10] sm:$0x3f]
    %v1517 = vld [vmem:[%s1513 + $0x18] sm:$0x3f]
    %v1518 = vmul.f32 %v1511, %v1514
    %v1519 = vmul.f32 %v1510, %v1515
    %v1520 = vmul.f32 %v1509, %v1516
    %v1521 = vmul.f32 %v1512, %v1517
    %v1522 = vadd.f32 %v1418, %v1518
    %v1523 = vadd.f32 %v1419, %v1519
    %v1524 = vadd.f32 %v1420, %v1520
    %v1525 = vadd.f32 %v1421, %v1521
    %v1526 = vadd.f32 %v1522, %v1444
    %v1527 = vadd.f32 %v1523, %v1445
    %v1528 = vadd.f32 %v1524, %v1446
    %v1529 = vadd.f32 %v1525, %v1447
    %v1530 = vadd.f32 %v1470, %v1496
    %v1531 = vadd.f32 %v1471, %v1497
    %v1532 = vadd.f32 %v1472, %v1498
    %v1533 = vadd.f32 %v1473, %v1499
    %v1534 = vadd.f32 %v1526, %v1530
    %v1535 = vadd.f32 %v1527, %v1531
    %v1536 = vadd.f32 %v1528, %v1532
    %v1537 = vadd.f32 %v1529, %v1533
    %v1538 = vld [vmem:[%s6] sm:$0x3f]
    %1540 = vset.pattern.permute.xlu0 0
    %1541 = vperm.xlu0 %1540, %v1538
    %v1542 = vpop.permute.xlu0 %1541
    %v1544 = vadd.f32 %v1534, %v1542
    %v1545 = vadd.f32 %v1535, %v1542
    %v1546 = vadd.f32 %v1536, %v1542
    %v1547 = vadd.f32 %v1537, %v1542
    %v1548 = vld [vmem:[%s7] sm:$0xff]
    %v1549 = vld [vmem:[%s7 + $0x8] sm:$0xff]
    %v1550 = vld [vmem:[%s7 + $0x10] sm:$0xff]
    %v1551 = vld [vmem:[%s7 + $0x18] sm:$0xff]
    %v1552 = vld [vmem:[%s7 + $0x20] sm:$0xff]
    %v1553 = vld [vmem:[%s7 + $0x28] sm:$0xff]
    %v1554 = vld [vmem:[%s7 + $0x30] sm:$0xff]
    %v1555 = vld [vmem:[%s7 + $0x38] sm:$0xff]
    %v1556 = vld [vmem:[%s7 + $0x40] sm:$0xff]
    %v1557 = vld [vmem:[%s7 + $0x48] sm:$0xff]
    %v1558 = vld [vmem:[%s7 + $0x50] sm:$0xff]
    %v1559 = vld [vmem:[%s7 + $0x58] sm:$0xff]
    %v1560 = vld [vmem:[%s8] sm:$0xff]
    %v1561 = vld [vmem:[%s8 + $0x8] sm:$0xff]
    %v1562 = vld [vmem:[%s8 + $0x10] sm:$0xff]
    %v1563 = vld [vmem:[%s8 + $0x18] sm:$0xff]
    %v1564 = vld [vmem:[%s8 + $0x20] sm:$0xff]
    %v1565 = vld [vmem:[%s8 + $0x28] sm:$0xff]
    %v1566 = vld [vmem:[%s8 + $0x30] sm:$0xff]
    %v1567 = vld [vmem:[%s8 + $0x38] sm:$0xff]
    %v1568 = vld [vmem:[%s8 + $0x40] sm:$0xff]
    %v1569 = vld [vmem:[%s8 + $0x48] sm:$0xff]
    %v1570 = vld [vmem:[%s8 + $0x50] sm:$0xff]
    %v1571 = vld [vmem:[%s8 + $0x58] sm:$0xff]
    %1573 = vset.pattern.permute.xlu0 0
    %1574 = vperm.xlu0 %1573, %v1560
    %v1575 = vpop.permute.xlu0 %1574
    %1578 = vset.pattern.permute.xlu0 0
    %1579 = vperm.xlu0 %1578, %v1561
    %v1580 = vpop.permute.xlu0 %1579
    %1583 = vset.pattern.permute.xlu0 0
    %1584 = vperm.xlu0 %1583, %v1562
    %v1585 = vpop.permute.xlu0 %1584
    %1588 = vset.pattern.permute.xlu0 0
    %1589 = vperm.xlu0 %1588, %v1563
    %v1590 = vpop.permute.xlu0 %1589
    %1593 = vset.pattern.permute.xlu0 0
    %1594 = vperm.xlu0 %1593, %v1564
    %v1595 = vpop.permute.xlu0 %1594
    %1598 = vset.pattern.permute.xlu0 0
    %1599 = vperm.xlu0 %1598, %v1565
    %v1600 = vpop.permute.xlu0 %1599
    %1603 = vset.pattern.permute.xlu0 0
    %1604 = vperm.xlu0 %1603, %v1566
    %v1605 = vpop.permute.xlu0 %1604
    %1608 = vset.pattern.permute.xlu0 0
    %1609 = vperm.xlu0 %1608, %v1567
    %v1610 = vpop.permute.xlu0 %1609
    %1613 = vset.pattern.permute.xlu0 0
    %1614 = vperm.xlu0 %1613, %v1568
    %v1615 = vpop.permute.xlu0 %1614
    %1618 = vset.pattern.permute.xlu0 0
    %1619 = vperm.xlu0 %1618, %v1569
    %v1620 = vpop.permute.xlu0 %1619
    %1623 = vset.pattern.permute.xlu0 0
    %1624 = vperm.xlu0 %1623, %v1570
    %v1625 = vpop.permute.xlu0 %1624
    %1628 = vset.pattern.permute.xlu0 0
    %1629 = vperm.xlu0 %1628, %v1571
    %v1630 = vpop.permute.xlu0 %1629
    %vm1632 = vcmask 48128
    %v1634 = vsel %vm1632, %v1548, 0
    %v1637 = vsel %vm1632, %v1549, 0
    %v1640 = vsel %vm1632, %v1550, 0
    %v1643 = vsel %vm1632, %v1551, 0
    %v1646 = vsel %vm1632, %v1552, 0
    %v1649 = vsel %vm1632, %v1553, 0
    %v1652 = vsel %vm1632, %v1554, 0
    %v1655 = vsel %vm1632, %v1555, 0
    %v1658 = vsel %vm1632, %v1556, 0
    %v1661 = vsel %vm1632, %v1557, 0
    %v1664 = vsel %vm1632, %v1558, 0
    %v1667 = vsel %vm1632, %v1559, 0
    %v1670 = vsel %vm208, %v1544, 0
    %v1673 = vsel %vm208, %v1545, 0
    %v1676 = vsel %vm208, %v1546, 0
    %v1679 = vsel %vm208, %v1547, 0
    %1681 = vmatprep.subr.mxu0 0.0
    %1682 = vmatpush1.msra.mxu0 0.0
    %1683 = vmatprep.subr.mxu0 0.0
    %1684 = vmatpush1.msra.mxu0 0.0
    %1685 = vmatprep.subr.mxu0 0.0
    %1686 = vmatpush1.msra.mxu0 0.0
    %1687 = vmatprep.subr.mxu0 0.0
    %1688 = vmatpush1.msra.mxu0 0.0
    %1689 = vmatprep.subr.mxu0 0.0
    %1690 = vmatpush1.msra.mxu0 0.0
    %1691 = vmatprep.subr.mxu0 0.0
    %1692 = vmatpush1.msra.mxu0 0.0
    %1693 = vmatprep.subr.mxu0 0.0
    %1694 = vmatpush1.msra.mxu0 0.0
    %1695 = vmatprep.subr.mxu0 0.0
    %1696 = vmatpush1.msra.mxu0 0.0
    %1697 = vmatprep.subr.mxu0 0.0
    %1698 = vmatpush1.msra.mxu0 0.0
    %1699 = vmatprep.subr.mxu0 0.0
    %1700 = vmatpush1.msra.mxu0 0.0
    %1701 = vmatprep.subr.mxu0 0.0
    %1702 = vmatpush1.msra.mxu0 0.0
    %1703 = vmatprep.subr.mxu0 0.0
    %1704 = vmatpush1.msra.mxu0 0.0
    %1705 = vmatprep.subr.mxu0 0.0
    %1706 = vmatpush1.msra.mxu0 0.0
    %1707 = vmatprep.subr.mxu0 0.0
    %1708 = vmatpush1.msra.mxu0 0.0
    %1709 = vmatprep.subr.mxu0 0.0
    %1710 = vmatpush1.msra.mxu0 0.0
    %1711 = vmatprep.subr.mxu0 %v1673
    %1712 = vmatpush1.msra.mxu0 %v1670
    %1713 = vmatprep.subr.mxu0 0.0
    %1714 = vmatpush2.msra.mxu0 0.0
    %1715 = vmatprep.subr.mxu0 0.0
    %1716 = vmatpush2.msra.mxu0 0.0
    %1717 = vmatprep.subr.mxu0 0.0
    %1718 = vmatpush2.msra.mxu0 0.0
    %1719 = vmatprep.subr.mxu0 0.0
    %1720 = vmatpush2.msra.mxu0 0.0
    %1721 = vmatprep.subr.mxu0 0.0
    %1722 = vmatpush2.msra.mxu0 0.0
    %1723 = vmatprep.subr.mxu0 0.0
    %1724 = vmatpush2.msra.mxu0 0.0
    %1725 = vmatprep.subr.mxu0 0.0
    %1726 = vmatpush2.msra.mxu0 0.0
    %1727 = vmatprep.subr.mxu0 0.0
    %1728 = vmatpush2.msra.mxu0 0.0
    %1729 = vmatprep.subr.mxu0 0.0
    %1730 = vmatpush2.msra.mxu0 0.0
    %1731 = vmatprep.subr.mxu0 0.0
    %1732 = vmatpush2.msra.mxu0 0.0
    %1733 = vmatprep.subr.mxu0 0.0
    %1734 = vmatpush2.msra.mxu0 0.0
    %1735 = vmatprep.subr.mxu0 0.0
    %1736 = vmatpush2.msra.mxu0 0.0
    %1737 = vmatprep.subr.mxu0 0.0
    %1738 = vmatpush2.msra.mxu0 0.0
    %1739 = vmatprep.subr.mxu0 0.0
    %1740 = vmatpush2.msra.mxu0 0.0
    %1741 = vmatprep.subr.mxu0 0.0
    %1742 = vmatpush2.msra.mxu0 0.0
    %1743 = vmatprep.subr.mxu0 0.0
    %1744 = vmatpush2.msra.mxu0 0.0
    %1745 = vmatprep.mubr.f32.mxu0 0.0
    %1746 = vmatmul.mubr.f32.gmra.mxu0 %v1634
    %v1747 = vpop.f32.mrf.mxu0
    %v1748 = vadd.f32 %v1575, %v1747
    %v1749 = vpop.f32.mrf.mxu0
    %v1750 = vadd.f32 %v1575, %v1749
    %1751 = vmatprep.mubr.f32.mxu0 0.0
    %1752 = vmatmul.mubr.f32.gmra.mxu0 %v1637
    %v1753 = vpop.f32.mrf.mxu0
    %v1754 = vadd.f32 %v1580, %v1753
    %v1755 = vpop.f32.mrf.mxu0
    %v1756 = vadd.f32 %v1580, %v1755
    %1757 = vmatprep.mubr.f32.mxu0 0.0
    %1758 = vmatmul.mubr.f32.gmra.mxu0 %v1640
    %v1759 = vpop.f32.mrf.mxu0
    %v1760 = vadd.f32 %v1585, %v1759
    %v1761 = vpop.f32.mrf.mxu0
    %v1762 = vadd.f32 %v1585, %v1761
    %1763 = vmatprep.mubr.f32.mxu0 0.0
    %1764 = vmatmul.mubr.f32.gmra.mxu0 %v1643
    %v1765 = vpop.f32.mrf.mxu0
    %v1766 = vadd.f32 %v1590, %v1765
    %v1767 = vpop.f32.mrf.mxu0
    %v1768 = vadd.f32 %v1590, %v1767
    %1769 = vmatprep.mubr.f32.mxu0 0.0
    %1770 = vmatmul.mubr.f32.gmra.mxu0 %v1646
    %v1771 = vpop.f32.mrf.mxu0
    %v1772 = vadd.f32 %v1595, %v1771
    %v1773 = vpop.f32.mrf.mxu0
    %v1774 = vadd.f32 %v1595, %v1773
    %1775 = vmatprep.mubr.f32.mxu0 0.0
    %1776 = vmatmul.mubr.f32.gmra.mxu0 %v1649
    %v1777 = vpop.f32.mrf.mxu0
    %v1778 = vadd.f32 %v1600, %v1777
    %v1779 = vpop.f32.mrf.mxu0
    %v1780 = vadd.f32 %v1600, %v1779
    %1781 = vmatprep.mubr.f32.mxu0 0.0
    %1782 = vmatmul.mubr.f32.gmra.mxu0 %v1652
    %v1783 = vpop.f32.mrf.mxu0
    %v1784 = vadd.f32 %v1605, %v1783
    %v1785 = vpop.f32.mrf.mxu0
    %v1786 = vadd.f32 %v1605, %v1785
    %1787 = vmatprep.mubr.f32.mxu0 0.0
    %1788 = vmatmul.mubr.f32.gmra.mxu0 %v1655
    %v1789 = vpop.f32.mrf.mxu0
    %v1790 = vadd.f32 %v1610, %v1789
    %v1791 = vpop.f32.mrf.mxu0
    %v1792 = vadd.f32 %v1610, %v1791
    %1793 = vmatprep.mubr.f32.mxu0 0.0
    %1794 = vmatmul.mubr.f32.gmra.mxu0 %v1658
    %v1795 = vpop.f32.mrf.mxu0
    %v1796 = vadd.f32 %v1615, %v1795
    %v1797 = vpop.f32.mrf.mxu0
    %v1798 = vadd.f32 %v1615, %v1797
    %1799 = vmatprep.mubr.f32.mxu0 0.0
    %1800 = vmatmul.mubr.f32.gmra.mxu0 %v1661
    %v1801 = vpop.f32.mrf.mxu0
    %v1802 = vadd.f32 %v1620, %v1801
    %v1803 = vpop.f32.mrf.mxu0
    %v1804 = vadd.f32 %v1620, %v1803
    %1805 = vmatprep.mubr.f32.mxu0 0.0
    %1806 = vmatmul.mubr.f32.gmra.mxu0 %v1664
    %v1807 = vpop.f32.mrf.mxu0
    %v1808 = vadd.f32 %v1625, %v1807
    %v1809 = vpop.f32.mrf.mxu0
    %v1810 = vadd.f32 %v1625, %v1809
    %1811 = vmatprep.mubr.f32.mxu0 0.0
    %1812 = vmatmul.mubr.f32.gmra.mxu0 %v1667
    %v1813 = vpop.f32.mrf.mxu0
    %v1814 = vadd.f32 %v1630, %v1813
    %v1815 = vpop.f32.mrf.mxu0
    %v1816 = vadd.f32 %v1630, %v1815
    %1817 = vdwg.mxu0
    %1818 = vmatprep.subr.mxu0 0.0
    %1819 = vmatpush1.msra.mxu0 0.0
    %1820 = vmatprep.subr.mxu0 0.0
    %1821 = vmatpush1.msra.mxu0 0.0
    %1822 = vmatprep.subr.mxu0 0.0
    %1823 = vmatpush1.msra.mxu0 0.0
    %1824 = vmatprep.subr.mxu0 0.0
    %1825 = vmatpush1.msra.mxu0 0.0
    %1826 = vmatprep.subr.mxu0 0.0
    %1827 = vmatpush1.msra.mxu0 0.0
    %1828 = vmatprep.subr.mxu0 0.0
    %1829 = vmatpush1.msra.mxu0 0.0
    %1830 = vmatprep.subr.mxu0 0.0
    %1831 = vmatpush1.msra.mxu0 0.0
    %1832 = vmatprep.subr.mxu0 0.0
    %1833 = vmatpush1.msra.mxu0 0.0
    %1834 = vmatprep.subr.mxu0 0.0
    %1835 = vmatpush1.msra.mxu0 0.0
    %1836 = vmatprep.subr.mxu0 0.0
    %1837 = vmatpush1.msra.mxu0 0.0
    %1838 = vmatprep.subr.mxu0 0.0
    %1839 = vmatpush1.msra.mxu0 0.0
    %1840 = vmatprep.subr.mxu0 0.0
    %1841 = vmatpush1.msra.mxu0 0.0
    %1842 = vmatprep.subr.mxu0 0.0
    %1843 = vmatpush1.msra.mxu0 0.0
    %1844 = vmatprep.subr.mxu0 0.0
    %1845 = vmatpush1.msra.mxu0 0.0
    %1846 = vmatprep.subr.mxu0 0.0
    %1847 = vmatpush1.msra.mxu0 0.0
    %1848 = vmatprep.subr.mxu0 %v1679
    %1849 = vmatpush1.msra.mxu0 %v1676
    %1850 = vmatprep.subr.mxu0 0.0
    %1851 = vmatpush2.msra.mxu0 0.0
    %1852 = vmatprep.subr.mxu0 0.0
    %1853 = vmatpush2.msra.mxu0 0.0
    %1854 = vmatprep.subr.mxu0 0.0
    %1855 = vmatpush2.msra.mxu0 0.0
    %1856 = vmatprep.subr.mxu0 0.0
    %1857 = vmatpush2.msra.mxu0 0.0
    %1858 = vmatprep.subr.mxu0 0.0
    %1859 = vmatpush2.msra.mxu0 0.0
    %1860 = vmatprep.subr.mxu0 0.0
    %1861 = vmatpush2.msra.mxu0 0.0
    %1862 = vmatprep.subr.mxu0 0.0
    %1863 = vmatpush2.msra.mxu0 0.0
    %1864 = vmatprep.subr.mxu0 0.0
    %1865 = vmatpush2.msra.mxu0 0.0
    %1866 = vmatprep.subr.mxu0 0.0
    %1867 = vmatpush2.msra.mxu0 0.0
    %1868 = vmatprep.subr.mxu0 0.0
    %1869 = vmatpush2.msra.mxu0 0.0
    %1870 = vmatprep.subr.mxu0 0.0
    %1871 = vmatpush2.msra.mxu0 0.0
    %1872 = vmatprep.subr.mxu0 0.0
    %1873 = vmatpush2.msra.mxu0 0.0
    %1874 = vmatprep.subr.mxu0 0.0
    %1875 = vmatpush2.msra.mxu0 0.0
    %1876 = vmatprep.subr.mxu0 0.0
    %1877 = vmatpush2.msra.mxu0 0.0
    %1878 = vmatprep.subr.mxu0 0.0
    %1879 = vmatpush2.msra.mxu0 0.0
    %1880 = vmatprep.subr.mxu0 0.0
    %1881 = vmatpush2.msra.mxu0 0.0
    %1882 = vmatprep.mubr.f32.mxu0 0.0
    %1883 = vmatmul.mubr.f32.gmra.mxu0 %v1634
    %v1884 = vpop.f32.mrf.mxu0
    %v1885 = vadd.f32 %v1575, %v1884
    %v1886 = vpop.f32.mrf.mxu0
    %v1887 = vadd.f32 %v1575, %v1886
    %1888 = vmatprep.mubr.f32.mxu0 0.0
    %1889 = vmatmul.mubr.f32.gmra.mxu0 %v1637
    %v1890 = vpop.f32.mrf.mxu0
    %v1891 = vadd.f32 %v1580, %v1890
    %v1892 = vpop.f32.mrf.mxu0
    %v1893 = vadd.f32 %v1580, %v1892
    %1894 = vmatprep.mubr.f32.mxu0 0.0
    %1895 = vmatmul.mubr.f32.gmra.mxu0 %v1640
    %v1896 = vpop.f32.mrf.mxu0
    %v1897 = vadd.f32 %v1585, %v1896
    %v1898 = vpop.f32.mrf.mxu0
    %v1899 = vadd.f32 %v1585, %v1898
    %1900 = vmatprep.mubr.f32.mxu0 0.0
    %1901 = vmatmul.mubr.f32.gmra.mxu0 %v1643
    %v1902 = vpop.f32.mrf.mxu0
    %v1903 = vadd.f32 %v1590, %v1902
    %v1904 = vpop.f32.mrf.mxu0
    %v1905 = vadd.f32 %v1590, %v1904
    %1906 = vmatprep.mubr.f32.mxu0 0.0
    %1907 = vmatmul.mubr.f32.gmra.mxu0 %v1646
    %v1908 = vpop.f32.mrf.mxu0
    %v1909 = vadd.f32 %v1595, %v1908
    %v1910 = vpop.f32.mrf.mxu0
    %v1911 = vadd.f32 %v1595, %v1910
    %1912 = vmatprep.mubr.f32.mxu0 0.0
    %1913 = vmatmul.mubr.f32.gmra.mxu0 %v1649
    %v1914 = vpop.f32.mrf.mxu0
    %v1915 = vadd.f32 %v1600, %v1914
    %v1916 = vpop.f32.mrf.mxu0
    %v1917 = vadd.f32 %v1600, %v1916
    %1918 = vmatprep.mubr.f32.mxu0 0.0
    %1919 = vmatmul.mubr.f32.gmra.mxu0 %v1652
    %v1920 = vpop.f32.mrf.mxu0
    %v1921 = vadd.f32 %v1605, %v1920
    %v1922 = vpop.f32.mrf.mxu0
    %v1923 = vadd.f32 %v1605, %v1922
    %1924 = vmatprep.mubr.f32.mxu0 0.0
    %1925 = vmatmul.mubr.f32.gmra.mxu0 %v1655
    %v1926 = vpop.f32.mrf.mxu0
    %v1927 = vadd.f32 %v1610, %v1926
    %v1928 = vpop.f32.mrf.mxu0
    %v1929 = vadd.f32 %v1610, %v1928
    %1930 = vmatprep.mubr.f32.mxu0 0.0
    %1931 = vmatmul.mubr.f32.gmra.mxu0 %v1658
    %v1932 = vpop.f32.mrf.mxu0
    %v1933 = vadd.f32 %v1615, %v1932
    %v1934 = vpop.f32.mrf.mxu0
    %v1935 = vadd.f32 %v1615, %v1934
    %1936 = vmatprep.mubr.f32.mxu0 0.0
    %1937 = vmatmul.mubr.f32.gmra.mxu0 %v1661
    %v1938 = vpop.f32.mrf.mxu0
    %v1939 = vadd.f32 %v1620, %v1938
    %v1940 = vpop.f32.mrf.mxu0
    %v1941 = vadd.f32 %v1620, %v1940
    %1942 = vmatprep.mubr.f32.mxu0 0.0
    %1943 = vmatmul.mubr.f32.gmra.mxu0 %v1664
    %v1944 = vpop.f32.mrf.mxu0
    %v1945 = vadd.f32 %v1625, %v1944
    %v1946 = vpop.f32.mrf.mxu0
    %v1947 = vadd.f32 %v1625, %v1946
    %1948 = vmatprep.mubr.f32.mxu0 0.0
    %1949 = vmatmul.mubr.f32.gmra.mxu0 %v1667
    %v1950 = vpop.f32.mrf.mxu0
    %v1951 = vadd.f32 %v1630, %v1950
    %v1952 = vpop.f32.mrf.mxu0
    %v1953 = vadd.f32 %v1630, %v1952
    %1954 = vdwg.mxu0
    %v1955 = vadd.f32 %v1748, %v1750
    %v1956 = vadd.f32 %v1955, %v1885
    %v1957 = vadd.f32 %v1956, %v1887
    %1958 = vadd.xlane.f32.xlu0 %v1957
    %v1959 = vpop.xlane.xlu0 %1958
    %v1960 = vadd.f32 %v1754, %v1756
    %v1961 = vadd.f32 %v1960, %v1891
    %v1962 = vadd.f32 %v1961, %v1893
    %1963 = vadd.xlane.f32.xlu0 %v1962
    %v1964 = vpop.xlane.xlu0 %1963
    %v1965 = vadd.f32 %v1760, %v1762
    %v1966 = vadd.f32 %v1965, %v1897
    %v1967 = vadd.f32 %v1966, %v1899
    %1968 = vadd.xlane.f32.xlu0 %v1967
    %v1969 = vpop.xlane.xlu0 %1968
    %v1970 = vadd.f32 %v1766, %v1768
    %v1971 = vadd.f32 %v1970, %v1903
    %v1972 = vadd.f32 %v1971, %v1905
    %1973 = vadd.xlane.f32.xlu0 %v1972
    %v1974 = vpop.xlane.xlu0 %1973
    %v1975 = vadd.f32 %v1772, %v1774
    %v1976 = vadd.f32 %v1975, %v1909
    %v1977 = vadd.f32 %v1976, %v1911
    %1978 = vadd.xlane.f32.xlu0 %v1977
    %v1979 = vpop.xlane.xlu0 %1978
    %v1980 = vadd.f32 %v1778, %v1780
    %v1981 = vadd.f32 %v1980, %v1915
    %v1982 = vadd.f32 %v1981, %v1917
    %1983 = vadd.xlane.f32.xlu0 %v1982
    %v1984 = vpop.xlane.xlu0 %1983
    %v1985 = vadd.f32 %v1784, %v1786
    %v1986 = vadd.f32 %v1985, %v1921
    %v1987 = vadd.f32 %v1986, %v1923
    %1988 = vadd.xlane.f32.xlu0 %v1987
    %v1989 = vpop.xlane.xlu0 %1988
    %v1990 = vadd.f32 %v1790, %v1792
    %v1991 = vadd.f32 %v1990, %v1927
    %v1992 = vadd.f32 %v1991, %v1929
    %1993 = vadd.xlane.f32.xlu0 %v1992
    %v1994 = vpop.xlane.xlu0 %1993
    %v1995 = vadd.f32 %v1796, %v1798
    %v1996 = vadd.f32 %v1995, %v1933
    %v1997 = vadd.f32 %v1996, %v1935
    %1998 = vadd.xlane.f32.xlu0 %v1997
    %v1999 = vpop.xlane.xlu0 %1998
    %v2000 = vadd.f32 %v1802, %v1804
    %v2001 = vadd.f32 %v2000, %v1939
    %v2002 = vadd.f32 %v2001, %v1941
    %2003 = vadd.xlane.f32.xlu0 %v2002
    %v2004 = vpop.xlane.xlu0 %2003
    %v2005 = vadd.f32 %v1808, %v1810
    %v2006 = vadd.f32 %v2005, %v1945
    %v2007 = vadd.f32 %v2006, %v1947
    %2008 = vadd.xlane.f32.xlu0 %v2007
    %v2009 = vpop.xlane.xlu0 %2008
    %v2010 = vadd.f32 %v1814, %v1816
    %v2011 = vadd.f32 %v2010, %v1951
    %v2012 = vadd.f32 %v2011, %v1953
    %2013 = vadd.xlane.f32.xlu0 %v2012
    %v2014 = vpop.xlane.xlu0 %2013
    %v2015 = vmul.f32 %v1959, 0.001953125
    %v2016 = vmul.f32 %v1964, 0.001953125
    %v2017 = vmul.f32 %v1969, 0.001953125
    %v2018 = vmul.f32 %v1974, 0.001953125
    %v2019 = vmul.f32 %v1979, 0.001953125
    %v2020 = vmul.f32 %v1984, 0.001953125
    %v2021 = vmul.f32 %v1989, 0.001953125
    %v2022 = vmul.f32 %v1994, 0.001953125
    %v2023 = vmul.f32 %v1999, 0.001953125
    %v2024 = vmul.f32 %v2004, 0.001953125
    %v2025 = vmul.f32 %v2009, 0.001953125
    %v2026 = vmul.f32 %v2014, 0.001953125
    %v2027 = vsub.f32 %v1748, %v2015
    %v2028 = vsub.f32 %v1750, %v2015
    %v2029 = vsub.f32 %v1885, %v2015
    %v2030 = vsub.f32 %v1887, %v2015
    %v2031 = vsub.f32 %v1754, %v2016
    %v2032 = vsub.f32 %v1756, %v2016
    %v2033 = vsub.f32 %v1891, %v2016
    %v2034 = vsub.f32 %v1893, %v2016
    %v2035 = vsub.f32 %v1760, %v2017
    %v2036 = vsub.f32 %v1762, %v2017
    %v2037 = vsub.f32 %v1897, %v2017
    %v2038 = vsub.f32 %v1899, %v2017
    %v2039 = vsub.f32 %v1766, %v2018
    %v2040 = vsub.f32 %v1768, %v2018
    %v2041 = vsub.f32 %v1903, %v2018
    %v2042 = vsub.f32 %v1905, %v2018
    %v2043 = vsub.f32 %v1772, %v2019
    %v2044 = vsub.f32 %v1774, %v2019
    %v2045 = vsub.f32 %v1909, %v2019
    %v2046 = vsub.f32 %v1911, %v2019
    %v2047 = vsub.f32 %v1778, %v2020
    %v2048 = vsub.f32 %v1780, %v2020
    %v2049 = vsub.f32 %v1915, %v2020
    %v2050 = vsub.f32 %v1917, %v2020
    %v2051 = vsub.f32 %v1784, %v2021
    %v2052 = vsub.f32 %v1786, %v2021
    %v2053 = vsub.f32 %v1921, %v2021
    %v2054 = vsub.f32 %v1923, %v2021
    %v2055 = vsub.f32 %v1790, %v2022
    %v2056 = vsub.f32 %v1792, %v2022
    %v2057 = vsub.f32 %v1927, %v2022
    %v2058 = vsub.f32 %v1929, %v2022
    %v2059 = vsub.f32 %v1796, %v2023
    %v2060 = vsub.f32 %v1798, %v2023
    %v2061 = vsub.f32 %v1933, %v2023
    %v2062 = vsub.f32 %v1935, %v2023
    %v2063 = vsub.f32 %v1802, %v2024
    %v2064 = vsub.f32 %v1804, %v2024
    %v2065 = vsub.f32 %v1939, %v2024
    %v2066 = vsub.f32 %v1941, %v2024
    %v2067 = vsub.f32 %v1808, %v2025
    %v2068 = vsub.f32 %v1810, %v2025
    %v2069 = vsub.f32 %v1945, %v2025
    %v2070 = vsub.f32 %v1947, %v2025
    %v2071 = vsub.f32 %v1814, %v2026
    %v2072 = vsub.f32 %v1816, %v2026
    %v2073 = vsub.f32 %v1951, %v2026
    %v2074 = vsub.f32 %v1953, %v2026
    %v2075 = vmul.f32 %v2027, %v2027
    %v2076 = vmul.f32 %v2028, %v2028
    %v2077 = vmul.f32 %v2029, %v2029
    %v2078 = vmul.f32 %v2030, %v2030
    %v2079 = vmul.f32 %v2031, %v2031
    %v2080 = vmul.f32 %v2032, %v2032
    %v2081 = vmul.f32 %v2033, %v2033
    %v2082 = vmul.f32 %v2034, %v2034
    %v2083 = vmul.f32 %v2035, %v2035
    %v2084 = vmul.f32 %v2036, %v2036
    %v2085 = vmul.f32 %v2037, %v2037
    %v2086 = vmul.f32 %v2038, %v2038
    %v2087 = vmul.f32 %v2039, %v2039
    %v2088 = vmul.f32 %v2040, %v2040
    %v2089 = vmul.f32 %v2041, %v2041
    %v2090 = vmul.f32 %v2042, %v2042
    %v2091 = vmul.f32 %v2043, %v2043
    %v2092 = vmul.f32 %v2044, %v2044
    %v2093 = vmul.f32 %v2045, %v2045
    %v2094 = vmul.f32 %v2046, %v2046
    %v2095 = vmul.f32 %v2047, %v2047
    %v2096 = vmul.f32 %v2048, %v2048
    %v2097 = vmul.f32 %v2049, %v2049
    %v2098 = vmul.f32 %v2050, %v2050
    %v2099 = vmul.f32 %v2051, %v2051
    %v2100 = vmul.f32 %v2052, %v2052
    %v2101 = vmul.f32 %v2053, %v2053
    %v2102 = vmul.f32 %v2054, %v2054
    %v2103 = vmul.f32 %v2055, %v2055
    %v2104 = vmul.f32 %v2056, %v2056
    %v2105 = vmul.f32 %v2057, %v2057
    %v2106 = vmul.f32 %v2058, %v2058
    %v2107 = vmul.f32 %v2059, %v2059
    %v2108 = vmul.f32 %v2060, %v2060
    %v2109 = vmul.f32 %v2061, %v2061
    %v2110 = vmul.f32 %v2062, %v2062
    %v2111 = vmul.f32 %v2063, %v2063
    %v2112 = vmul.f32 %v2064, %v2064
    %v2113 = vmul.f32 %v2065, %v2065
    %v2114 = vmul.f32 %v2066, %v2066
    %v2115 = vmul.f32 %v2067, %v2067
    %v2116 = vmul.f32 %v2068, %v2068
    %v2117 = vmul.f32 %v2069, %v2069
    %v2118 = vmul.f32 %v2070, %v2070
    %v2119 = vmul.f32 %v2071, %v2071
    %v2120 = vmul.f32 %v2072, %v2072
    %v2121 = vmul.f32 %v2073, %v2073
    %v2122 = vmul.f32 %v2074, %v2074
    %v2123 = vadd.f32 %v2075, %v2076
    %v2124 = vadd.f32 %v2123, %v2077
    %v2125 = vadd.f32 %v2124, %v2078
    %2126 = vadd.xlane.f32.xlu0 %v2125
    %v2127 = vpop.xlane.xlu0 %2126
    %v2128 = vadd.f32 %v2079, %v2080
    %v2129 = vadd.f32 %v2128, %v2081
    %v2130 = vadd.f32 %v2129, %v2082
    %2131 = vadd.xlane.f32.xlu0 %v2130
    %v2132 = vpop.xlane.xlu0 %2131
    %v2133 = vadd.f32 %v2083, %v2084
    %v2134 = vadd.f32 %v2133, %v2085
    %v2135 = vadd.f32 %v2134, %v2086
    %2136 = vadd.xlane.f32.xlu0 %v2135
    %v2137 = vpop.xlane.xlu0 %2136
    %v2138 = vadd.f32 %v2087, %v2088
    %v2139 = vadd.f32 %v2138, %v2089
    %v2140 = vadd.f32 %v2139, %v2090
    %2141 = vadd.xlane.f32.xlu0 %v2140
    %v2142 = vpop.xlane.xlu0 %2141
    %v2143 = vadd.f32 %v2091, %v2092
    %v2144 = vadd.f32 %v2143, %v2093
    %v2145 = vadd.f32 %v2144, %v2094
    %2146 = vadd.xlane.f32.xlu0 %v2145
    %v2147 = vpop.xlane.xlu0 %2146
    %v2148 = vadd.f32 %v2095, %v2096
    %v2149 = vadd.f32 %v2148, %v2097
    %v2150 = vadd.f32 %v2149, %v2098
    %2151 = vadd.xlane.f32.xlu0 %v2150
    %v2152 = vpop.xlane.xlu0 %2151
    %v2153 = vadd.f32 %v2099, %v2100
    %v2154 = vadd.f32 %v2153, %v2101
    %v2155 = vadd.f32 %v2154, %v2102
    %2156 = vadd.xlane.f32.xlu0 %v2155
    %v2157 = vpop.xlane.xlu0 %2156
    %v2158 = vadd.f32 %v2103, %v2104
    %v2159 = vadd.f32 %v2158, %v2105
    %v2160 = vadd.f32 %v2159, %v2106
    %2161 = vadd.xlane.f32.xlu0 %v2160
    %v2162 = vpop.xlane.xlu0 %2161
    %v2163 = vadd.f32 %v2107, %v2108
    %v2164 = vadd.f32 %v2163, %v2109
    %v2165 = vadd.f32 %v2164, %v2110
    %2166 = vadd.xlane.f32.xlu0 %v2165
    %v2167 = vpop.xlane.xlu0 %2166
    %v2168 = vadd.f32 %v2111, %v2112
    %v2169 = vadd.f32 %v2168, %v2113
    %v2170 = vadd.f32 %v2169, %v2114
    %2171 = vadd.xlane.f32.xlu0 %v2170
    %v2172 = vpop.xlane.xlu0 %2171
    %v2173 = vadd.f32 %v2115, %v2116
    %v2174 = vadd.f32 %v2173, %v2117
    %v2175 = vadd.f32 %v2174, %v2118
    %2176 = vadd.xlane.f32.xlu0 %v2175
    %v2177 = vpop.xlane.xlu0 %2176
    %v2178 = vadd.f32 %v2119, %v2120
    %v2179 = vadd.f32 %v2178, %v2121
    %v2180 = vadd.f32 %v2179, %v2122
    %2181 = vadd.xlane.f32.xlu0 %v2180
    %v2182 = vpop.xlane.xlu0 %2181
    %v2183 = vmul.f32 %v2127, 0.001953125
    %v2184 = vmul.f32 %v2132, 0.001953125
    %v2185 = vmul.f32 %v2137, 0.001953125
    %v2186 = vmul.f32 %v2142, 0.001953125
    %v2187 = vmul.f32 %v2147, 0.001953125
    %v2188 = vmul.f32 %v2152, 0.001953125
    %v2189 = vmul.f32 %v2157, 0.001953125
    %v2190 = vmul.f32 %v2162, 0.001953125
    %v2191 = vmul.f32 %v2167, 0.001953125
    %v2192 = vmul.f32 %v2172, 0.001953125
    %v2193 = vmul.f32 %v2177, 0.001953125
    %v2194 = vmul.f32 %v2182, 0.001953125
    %v2195 = vld [vmem:[%s9] sm:$0xff]
    %v2196 = vld [vmem:[%s9 + $0x8] sm:$0xff]
    %v2197 = vld [vmem:[%s9 + $0x10] sm:$0xff]
    %v2198 = vld [vmem:[%s9 + $0x18] sm:$0xff]
    %v2199 = vld [vmem:[%s9 + $0x20] sm:$0xff]
    %v2200 = vld [vmem:[%s9 + $0x28] sm:$0xff]
    %v2201 = vld [vmem:[%s9 + $0x30] sm:$0xff]
    %v2202 = vld [vmem:[%s9 + $0x38] sm:$0xff]
    %v2203 = vld [vmem:[%s9 + $0x40] sm:$0xff]
    %v2204 = vld [vmem:[%s9 + $0x48] sm:$0xff]
    %v2205 = vld [vmem:[%s9 + $0x50] sm:$0xff]
    %v2206 = vld [vmem:[%s9 + $0x58] sm:$0xff]
    %v2207 = vadd.f32 %v2183, 1e-05
    %v2208 = vadd.f32 %v2184, 1e-05
    %v2209 = vadd.f32 %v2185, 1e-05
    %v2210 = vadd.f32 %v2186, 1e-05
    %v2211 = vadd.f32 %v2187, 1e-05
    %v2212 = vadd.f32 %v2188, 1e-05
    %v2213 = vadd.f32 %v2189, 1e-05
    %v2214 = vadd.f32 %v2190, 1e-05
    %v2215 = vadd.f32 %v2191, 1e-05
    %v2216 = vadd.f32 %v2192, 1e-05
    %v2217 = vadd.f32 %v2193, 1e-05
    %v2218 = vadd.f32 %v2194, 1e-05
    %v2219 = vrsqrt.pop %v2207
    %v2220 = vrsqrt.pop %v2208
    %v2221 = vrsqrt.pop %v2209
    %v2222 = vrsqrt.pop %v2210
    %v2223 = vrsqrt.pop %v2211
    %v2224 = vrsqrt.pop %v2212
    %v2225 = vrsqrt.pop %v2213
    %v2226 = vrsqrt.pop %v2214
    %v2227 = vrsqrt.pop %v2215
    %v2228 = vrsqrt.pop %v2216
    %v2229 = vrsqrt.pop %v2217
    %v2230 = vrsqrt.pop %v2218
    %v2231 = vmul.f32 %v2195, %v2219
    %v2232 = vmul.f32 %v2196, %v2220
    %v2233 = vmul.f32 %v2197, %v2221
    %v2234 = vmul.f32 %v2198, %v2222
    %v2235 = vmul.f32 %v2199, %v2223
    %v2236 = vmul.f32 %v2200, %v2224
    %v2237 = vmul.f32 %v2201, %v2225
    %v2238 = vmul.f32 %v2202, %v2226
    %v2239 = vmul.f32 %v2203, %v2227
    %v2240 = vmul.f32 %v2204, %v2228
    %v2241 = vmul.f32 %v2205, %v2229
    %v2242 = vmul.f32 %v2206, %v2230
    %2244 = vset.pattern.permute.xlu0 0
    %2245 = vperm.xlu0 %2244, %v2231
    %v2246 = vpop.permute.xlu0 %2245
    %2249 = vset.pattern.permute.xlu0 0
    %2250 = vperm.xlu0 %2249, %v2232
    %v2251 = vpop.permute.xlu0 %2250
    %2254 = vset.pattern.permute.xlu0 0
    %2255 = vperm.xlu0 %2254, %v2233
    %v2256 = vpop.permute.xlu0 %2255
    %2259 = vset.pattern.permute.xlu0 0
    %2260 = vperm.xlu0 %2259, %v2234
    %v2261 = vpop.permute.xlu0 %2260
    %2264 = vset.pattern.permute.xlu0 0
    %2265 = vperm.xlu0 %2264, %v2235
    %v2266 = vpop.permute.xlu0 %2265
    %2269 = vset.pattern.permute.xlu0 0
    %2270 = vperm.xlu0 %2269, %v2236
    %v2271 = vpop.permute.xlu0 %2270
    %2274 = vset.pattern.permute.xlu0 0
    %2275 = vperm.xlu0 %2274, %v2237
    %v2276 = vpop.permute.xlu0 %2275
    %2279 = vset.pattern.permute.xlu0 0
    %2280 = vperm.xlu0 %2279, %v2238
    %v2281 = vpop.permute.xlu0 %2280
    %2284 = vset.pattern.permute.xlu0 0
    %2285 = vperm.xlu0 %2284, %v2239
    %v2286 = vpop.permute.xlu0 %2285
    %2289 = vset.pattern.permute.xlu0 0
    %2290 = vperm.xlu0 %2289, %v2240
    %v2291 = vpop.permute.xlu0 %2290
    %2294 = vset.pattern.permute.xlu0 0
    %2295 = vperm.xlu0 %2294, %v2241
    %v2296 = vpop.permute.xlu0 %2295
    %2299 = vset.pattern.permute.xlu0 0
    %2300 = vperm.xlu0 %2299, %v2242
    %v2301 = vpop.permute.xlu0 %2300
    %v2303 = vmul.f32 %v2027, %v2246
    %v2304 = vmul.f32 %v2028, %v2246
    %v2305 = vmul.f32 %v2029, %v2246
    %v2306 = vmul.f32 %v2030, %v2246
    %v2307 = vmul.f32 %v2031, %v2251
    %v2308 = vmul.f32 %v2032, %v2251
    %v2309 = vmul.f32 %v2033, %v2251
    %v2310 = vmul.f32 %v2034, %v2251
    %v2311 = vmul.f32 %v2035, %v2256
    %v2312 = vmul.f32 %v2036, %v2256
    %v2313 = vmul.f32 %v2037, %v2256
    %v2314 = vmul.f32 %v2038, %v2256
    %v2315 = vmul.f32 %v2039, %v2261
    %v2316 = vmul.f32 %v2040, %v2261
    %v2317 = vmul.f32 %v2041, %v2261
    %v2318 = vmul.f32 %v2042, %v2261
    %v2319 = vmul.f32 %v2043, %v2266
    %v2320 = vmul.f32 %v2044, %v2266
    %v2321 = vmul.f32 %v2045, %v2266
    %v2322 = vmul.f32 %v2046, %v2266
    %v2323 = vmul.f32 %v2047, %v2271
    %v2324 = vmul.f32 %v2048, %v2271
    %v2325 = vmul.f32 %v2049, %v2271
    %v2326 = vmul.f32 %v2050, %v2271
    %v2327 = vmul.f32 %v2051, %v2276
    %v2328 = vmul.f32 %v2052, %v2276
    %v2329 = vmul.f32 %v2053, %v2276
    %v2330 = vmul.f32 %v2054, %v2276
    %v2331 = vmul.f32 %v2055, %v2281
    %v2332 = vmul.f32 %v2056, %v2281
    %v2333 = vmul.f32 %v2057, %v2281
    %v2334 = vmul.f32 %v2058, %v2281
    %v2335 = vmul.f32 %v2059, %v2286
    %v2336 = vmul.f32 %v2060, %v2286
    %v2337 = vmul.f32 %v2061, %v2286
    %v2338 = vmul.f32 %v2062, %v2286
    %v2339 = vmul.f32 %v2063, %v2291
    %v2340 = vmul.f32 %v2064, %v2291
    %v2341 = vmul.f32 %v2065, %v2291
    %v2342 = vmul.f32 %v2066, %v2291
    %v2343 = vmul.f32 %v2067, %v2296
    %v2344 = vmul.f32 %v2068, %v2296
    %v2345 = vmul.f32 %v2069, %v2296
    %v2346 = vmul.f32 %v2070, %v2296
    %v2347 = vmul.f32 %v2071, %v2301
    %v2348 = vmul.f32 %v2072, %v2301
    %v2349 = vmul.f32 %v2073, %v2301
    %v2350 = vmul.f32 %v2074, %v2301
    %v2351 = vld [vmem:[%s10] sm:$0xff]
    %v2352 = vld [vmem:[%s10 + $0x8] sm:$0xff]
    %v2353 = vld [vmem:[%s10 + $0x10] sm:$0xff]
    %v2354 = vld [vmem:[%s10 + $0x18] sm:$0xff]
    %v2355 = vld [vmem:[%s10 + $0x20] sm:$0xff]
    %v2356 = vld [vmem:[%s10 + $0x28] sm:$0xff]
    %v2357 = vld [vmem:[%s10 + $0x30] sm:$0xff]
    %v2358 = vld [vmem:[%s10 + $0x38] sm:$0xff]
    %v2359 = vld [vmem:[%s10 + $0x40] sm:$0xff]
    %v2360 = vld [vmem:[%s10 + $0x48] sm:$0xff]
    %v2361 = vld [vmem:[%s10 + $0x50] sm:$0xff]
    %v2362 = vld [vmem:[%s10 + $0x58] sm:$0xff]
    %2364 = vset.pattern.permute.xlu0 0
    %2365 = vperm.xlu0 %2364, %v2351
    %v2366 = vpop.permute.xlu0 %2365
    %2369 = vset.pattern.permute.xlu0 0
    %2370 = vperm.xlu0 %2369, %v2352
    %v2371 = vpop.permute.xlu0 %2370
    %2374 = vset.pattern.permute.xlu0 0
    %2375 = vperm.xlu0 %2374, %v2353
    %v2376 = vpop.permute.xlu0 %2375
    %2379 = vset.pattern.permute.xlu0 0
    %2380 = vperm.xlu0 %2379, %v2354
    %v2381 = vpop.permute.xlu0 %2380
    %2384 = vset.pattern.permute.xlu0 0
    %2385 = vperm.xlu0 %2384, %v2355
    %v2386 = vpop.permute.xlu0 %2385
    %2389 = vset.pattern.permute.xlu0 0
    %2390 = vperm.xlu0 %2389, %v2356
    %v2391 = vpop.permute.xlu0 %2390
    %2394 = vset.pattern.permute.xlu0 0
    %2395 = vperm.xlu0 %2394, %v2357
    %v2396 = vpop.permute.xlu0 %2395
    %2399 = vset.pattern.permute.xlu0 0
    %2400 = vperm.xlu0 %2399, %v2358
    %v2401 = vpop.permute.xlu0 %2400
    %2404 = vset.pattern.permute.xlu0 0
    %2405 = vperm.xlu0 %2404, %v2359
    %v2406 = vpop.permute.xlu0 %2405
    %2409 = vset.pattern.permute.xlu0 0
    %2410 = vperm.xlu0 %2409, %v2360
    %v2411 = vpop.permute.xlu0 %2410
    %2414 = vset.pattern.permute.xlu0 0
    %2415 = vperm.xlu0 %2414, %v2361
    %v2416 = vpop.permute.xlu0 %2415
    %2419 = vset.pattern.permute.xlu0 0
    %2420 = vperm.xlu0 %2419, %v2362
    %v2421 = vpop.permute.xlu0 %2420
    %v2423 = vadd.f32 %v2303, %v2366
    %v2424 = vadd.f32 %v2304, %v2366
    %v2425 = vadd.f32 %v2305, %v2366
    %v2426 = vadd.f32 %v2306, %v2366
    %v2427 = vadd.f32 %v2307, %v2371
    %v2428 = vadd.f32 %v2308, %v2371
    %v2429 = vadd.f32 %v2309, %v2371
    %v2430 = vadd.f32 %v2310, %v2371
    %v2431 = vadd.f32 %v2311, %v2376
    %v2432 = vadd.f32 %v2312, %v2376
    %v2433 = vadd.f32 %v2313, %v2376
    %v2434 = vadd.f32 %v2314, %v2376
    %v2435 = vadd.f32 %v2315, %v2381
    %v2436 = vadd.f32 %v2316, %v2381
    %v2437 = vadd.f32 %v2317, %v2381
    %v2438 = vadd.f32 %v2318, %v2381
    %v2439 = vadd.f32 %v2319, %v2386
    %v2440 = vadd.f32 %v2320, %v2386
    %v2441 = vadd.f32 %v2321, %v2386
    %v2442 = vadd.f32 %v2322, %v2386
    %v2443 = vadd.f32 %v2323, %v2391
    %v2444 = vadd.f32 %v2324, %v2391
    %v2445 = vadd.f32 %v2325, %v2391
    %v2446 = vadd.f32 %v2326, %v2391
    %v2447 = vadd.f32 %v2327, %v2396
    %v2448 = vadd.f32 %v2328, %v2396
    %v2449 = vadd.f32 %v2329, %v2396
    %v2450 = vadd.f32 %v2330, %v2396
    %v2451 = vadd.f32 %v2331, %v2401
    %v2452 = vadd.f32 %v2332, %v2401
    %v2453 = vadd.f32 %v2333, %v2401
    %v2454 = vadd.f32 %v2334, %v2401
    %v2455 = vadd.f32 %v2335, %v2406
    %v2456 = vadd.f32 %v2336, %v2406
    %v2457 = vadd.f32 %v2337, %v2406
    %v2458 = vadd.f32 %v2338, %v2406
    %v2459 = vadd.f32 %v2339, %v2411
    %v2460 = vadd.f32 %v2340, %v2411
    %v2461 = vadd.f32 %v2341, %v2411
    %v2462 = vadd.f32 %v2342, %v2411
    %v2463 = vadd.f32 %v2343, %v2416
    %v2464 = vadd.f32 %v2344, %v2416
    %v2465 = vadd.f32 %v2345, %v2416
    %v2466 = vadd.f32 %v2346, %v2416
    %v2467 = vadd.f32 %v2347, %v2421
    %v2468 = vadd.f32 %v2348, %v2421
    %v2469 = vadd.f32 %v2349, %v2421
    %v2470 = vadd.f32 %v2350, %v2421
    %v2471 = vmax.f32 %v2423, 0.0
    %v2472 = vmax.f32 %v2424, 0.0
    %v2473 = vmax.f32 %v2425, 0.0
    %v2474 = vmax.f32 %v2426, 0.0
    %v2475 = vmax.f32 %v2427, 0.0
    %v2476 = vmax.f32 %v2428, 0.0
    %v2477 = vmax.f32 %v2429, 0.0
    %v2478 = vmax.f32 %v2430, 0.0
    %v2479 = vmax.f32 %v2431, 0.0
    %v2480 = vmax.f32 %v2432, 0.0
    %v2481 = vmax.f32 %v2433, 0.0
    %v2482 = vmax.f32 %v2434, 0.0
    %v2483 = vmax.f32 %v2435, 0.0
    %v2484 = vmax.f32 %v2436, 0.0
    %v2485 = vmax.f32 %v2437, 0.0
    %v2486 = vmax.f32 %v2438, 0.0
    %v2487 = vmax.f32 %v2439, 0.0
    %v2488 = vmax.f32 %v2440, 0.0
    %v2489 = vmax.f32 %v2441, 0.0
    %v2490 = vmax.f32 %v2442, 0.0
    %v2491 = vmax.f32 %v2443, 0.0
    %v2492 = vmax.f32 %v2444, 0.0
    %v2493 = vmax.f32 %v2445, 0.0
    %v2494 = vmax.f32 %v2446, 0.0
    %v2495 = vmax.f32 %v2447, 0.0
    %v2496 = vmax.f32 %v2448, 0.0
    %v2497 = vmax.f32 %v2449, 0.0
    %v2498 = vmax.f32 %v2450, 0.0
    %v2499 = vmax.f32 %v2451, 0.0
    %v2500 = vmax.f32 %v2452, 0.0
    %v2501 = vmax.f32 %v2453, 0.0
    %v2502 = vmax.f32 %v2454, 0.0
    %v2503 = vmax.f32 %v2455, 0.0
    %v2504 = vmax.f32 %v2456, 0.0
    %v2505 = vmax.f32 %v2457, 0.0
    %v2506 = vmax.f32 %v2458, 0.0
    %v2507 = vmax.f32 %v2459, 0.0
    %v2508 = vmax.f32 %v2460, 0.0
    %v2509 = vmax.f32 %v2461, 0.0
    %v2510 = vmax.f32 %v2462, 0.0
    %v2511 = vmax.f32 %v2463, 0.0
    %v2512 = vmax.f32 %v2464, 0.0
    %v2513 = vmax.f32 %v2465, 0.0
    %v2514 = vmax.f32 %v2466, 0.0
    %v2515 = vmax.f32 %v2467, 0.0
    %v2516 = vmax.f32 %v2468, 0.0
    %v2517 = vmax.f32 %v2469, 0.0
    %v2518 = vmax.f32 %v2470, 0.0
    %v2519 = vxor.u32 %v2471, 2147483648
    %v2520 = vxor.u32 %v2472, 2147483648
    %v2521 = vxor.u32 %v2473, 2147483648
    %v2522 = vxor.u32 %v2474, 2147483648
    %v2523 = vxor.u32 %v2475, 2147483648
    %v2524 = vxor.u32 %v2476, 2147483648
    %v2525 = vxor.u32 %v2477, 2147483648
    %v2526 = vxor.u32 %v2478, 2147483648
    %v2527 = vxor.u32 %v2479, 2147483648
    %v2528 = vxor.u32 %v2480, 2147483648
    %v2529 = vxor.u32 %v2481, 2147483648
    %v2530 = vxor.u32 %v2482, 2147483648
    %v2531 = vxor.u32 %v2483, 2147483648
    %v2532 = vxor.u32 %v2484, 2147483648
    %v2533 = vxor.u32 %v2485, 2147483648
    %v2534 = vxor.u32 %v2486, 2147483648
    %v2535 = vxor.u32 %v2487, 2147483648
    %v2536 = vxor.u32 %v2488, 2147483648
    %v2537 = vxor.u32 %v2489, 2147483648
    %v2538 = vxor.u32 %v2490, 2147483648
    %v2539 = vxor.u32 %v2491, 2147483648
    %v2540 = vxor.u32 %v2492, 2147483648
    %v2541 = vxor.u32 %v2493, 2147483648
    %v2542 = vxor.u32 %v2494, 2147483648
    %v2543 = vxor.u32 %v2495, 2147483648
    %v2544 = vxor.u32 %v2496, 2147483648
    %v2545 = vxor.u32 %v2497, 2147483648
    %v2546 = vxor.u32 %v2498, 2147483648
    %v2547 = vxor.u32 %v2499, 2147483648
    %v2548 = vxor.u32 %v2500, 2147483648
    %v2549 = vxor.u32 %v2501, 2147483648
    %v2550 = vxor.u32 %v2502, 2147483648
    %v2551 = vxor.u32 %v2503, 2147483648
    %v2552 = vxor.u32 %v2504, 2147483648
    %v2553 = vxor.u32 %v2505, 2147483648
    %v2554 = vxor.u32 %v2506, 2147483648
    %v2555 = vxor.u32 %v2507, 2147483648
    %v2556 = vxor.u32 %v2508, 2147483648
    %v2557 = vxor.u32 %v2509, 2147483648
    %v2558 = vxor.u32 %v2510, 2147483648
    %v2559 = vxor.u32 %v2511, 2147483648
    %v2560 = vxor.u32 %v2512, 2147483648
    %v2561 = vxor.u32 %v2513, 2147483648
    %v2562 = vxor.u32 %v2514, 2147483648
    %v2563 = vxor.u32 %v2515, 2147483648
    %v2564 = vxor.u32 %v2516, 2147483648
    %v2565 = vxor.u32 %v2517, 2147483648
    %v2566 = vxor.u32 %v2518, 2147483648
    %v2567 = vmul.f32 %v2519, 1.442695
    %v2568 = vpow.pop %v2567
    %v2569 = vmul.f32 %v2520, 1.442695
    %v2570 = vpow.pop %v2569
    %v2571 = vmul.f32 %v2521, 1.442695
    %v2572 = vpow.pop %v2571
    %v2573 = vmul.f32 %v2522, 1.442695
    %v2574 = vpow.pop %v2573
    %v2575 = vmul.f32 %v2523, 1.442695
    %v2576 = vpow.pop %v2575
    %v2577 = vmul.f32 %v2524, 1.442695
    %v2578 = vpow.pop %v2577
    %v2579 = vmul.f32 %v2525, 1.442695
    %v2580 = vpow.pop %v2579
    %v2581 = vmul.f32 %v2526, 1.442695
    %v2582 = vpow.pop %v2581
    %v2583 = vmul.f32 %v2527, 1.442695
    %v2584 = vpow.pop %v2583
    %v2585 = vmul.f32 %v2528, 1.442695
    %v2586 = vpow.pop %v2585
    %v2587 = vmul.f32 %v2529, 1.442695
    %v2588 = vpow.pop %v2587
    %v2589 = vmul.f32 %v2530, 1.442695
    %v2590 = vpow.pop %v2589
    %v2591 = vmul.f32 %v2531, 1.442695
    %v2592 = vpow.pop %v2591
    %v2593 = vmul.f32 %v2532, 1.442695
    %v2594 = vpow.pop %v2593
    %v2595 = vmul.f32 %v2533, 1.442695
    %v2596 = vpow.pop %v2595
    %v2597 = vmul.f32 %v2534, 1.442695
    %v2598 = vpow.pop %v2597
    %v2599 = vmul.f32 %v2535, 1.442695
    %v2600 = vpow.pop %v2599
    %v2601 = vmul.f32 %v2536, 1.442695
    %v2602 = vpow.pop %v2601
    %v2603 = vmul.f32 %v2537, 1.442695
    %v2604 = vpow.pop %v2603
    %v2605 = vmul.f32 %v2538, 1.442695
    %v2606 = vpow.pop %v2605
    %v2607 = vmul.f32 %v2539, 1.442695
    %v2608 = vpow.pop %v2607
    %v2609 = vmul.f32 %v2540, 1.442695
    %v2610 = vpow.pop %v2609
    %v2611 = vmul.f32 %v2541, 1.442695
    %v2612 = vpow.pop %v2611
    %v2613 = vmul.f32 %v2542, 1.442695
    %v2614 = vpow.pop %v2613
    %v2615 = vmul.f32 %v2543, 1.442695
    %v2616 = vpow.pop %v2615
    %v2617 = vmul.f32 %v2544, 1.442695
    %v2618 = vpow.pop %v2617
    %v2619 = vmul.f32 %v2545, 1.442695
    %v2620 = vpow.pop %v2619
    %v2621 = vmul.f32 %v2546, 1.442695
    %v2622 = vpow.pop %v2621
    %v2623 = vmul.f32 %v2547, 1.442695
    %v2624 = vpow.pop %v2623
    %v2625 = vmul.f32 %v2548, 1.442695
    %v2626 = vpow.pop %v2625
    %v2627 = vmul.f32 %v2549, 1.442695
    %v2628 = vpow.pop %v2627
    %v2629 = vmul.f32 %v2550, 1.442695
    %v2630 = vpow.pop %v2629
    %v2631 = vmul.f32 %v2551, 1.442695
    %v2632 = vpow.pop %v2631
    %v2633 = vmul.f32 %v2552, 1.442695
    %v2634 = vpow.pop %v2633
    %v2635 = vmul.f32 %v2553, 1.442695
    %v2636 = vpow.pop %v2635
    %v2637 = vmul.f32 %v2554, 1.442695
    %v2638 = vpow.pop %v2637
    %v2639 = vmul.f32 %v2555, 1.442695
    %v2640 = vpow.pop %v2639
    %v2641 = vmul.f32 %v2556, 1.442695
    %v2642 = vpow.pop %v2641
    %v2643 = vmul.f32 %v2557, 1.442695
    %v2644 = vpow.pop %v2643
    %v2645 = vmul.f32 %v2558, 1.442695
    %v2646 = vpow.pop %v2645
    %v2647 = vmul.f32 %v2559, 1.442695
    %v2648 = vpow.pop %v2647
    %v2649 = vmul.f32 %v2560, 1.442695
    %v2650 = vpow.pop %v2649
    %v2651 = vmul.f32 %v2561, 1.442695
    %v2652 = vpow.pop %v2651
    %v2653 = vmul.f32 %v2562, 1.442695
    %v2654 = vpow.pop %v2653
    %v2655 = vmul.f32 %v2563, 1.442695
    %v2656 = vpow.pop %v2655
    %v2657 = vmul.f32 %v2564, 1.442695
    %v2658 = vpow.pop %v2657
    %v2659 = vmul.f32 %v2565, 1.442695
    %v2660 = vpow.pop %v2659
    %v2661 = vmul.f32 %v2566, 1.442695
    %v2662 = vpow.pop %v2661
    %v2663 = vadd.f32 %v2568, 1.0
    %v2664 = vadd.f32 %v2570, 1.0
    %v2665 = vadd.f32 %v2572, 1.0
    %v2666 = vadd.f32 %v2574, 1.0
    %v2667 = vadd.f32 %v2576, 1.0
    %v2668 = vadd.f32 %v2578, 1.0
    %v2669 = vadd.f32 %v2580, 1.0
    %v2670 = vadd.f32 %v2582, 1.0
    %v2671 = vadd.f32 %v2584, 1.0
    %v2672 = vadd.f32 %v2586, 1.0
    %v2673 = vadd.f32 %v2588, 1.0
    %v2674 = vadd.f32 %v2590, 1.0
    %v2675 = vadd.f32 %v2592, 1.0
    %v2676 = vadd.f32 %v2594, 1.0
    %v2677 = vadd.f32 %v2596, 1.0
    %v2678 = vadd.f32 %v2598, 1.0
    %v2679 = vadd.f32 %v2600, 1.0
    %v2680 = vadd.f32 %v2602, 1.0
    %v2681 = vadd.f32 %v2604, 1.0
    %v2682 = vadd.f32 %v2606, 1.0
    %v2683 = vadd.f32 %v2608, 1.0
    %v2684 = vadd.f32 %v2610, 1.0
    %v2685 = vadd.f32 %v2612, 1.0
    %v2686 = vadd.f32 %v2614, 1.0
    %v2687 = vadd.f32 %v2616, 1.0
    %v2688 = vadd.f32 %v2618, 1.0
    %v2689 = vadd.f32 %v2620, 1.0
    %v2690 = vadd.f32 %v2622, 1.0
    %v2691 = vadd.f32 %v2624, 1.0
    %v2692 = vadd.f32 %v2626, 1.0
    %v2693 = vadd.f32 %v2628, 1.0
    %v2694 = vadd.f32 %v2630, 1.0
    %v2695 = vadd.f32 %v2632, 1.0
    %v2696 = vadd.f32 %v2634, 1.0
    %v2697 = vadd.f32 %v2636, 1.0
    %v2698 = vadd.f32 %v2638, 1.0
    %v2699 = vadd.f32 %v2640, 1.0
    %v2700 = vadd.f32 %v2642, 1.0
    %v2701 = vadd.f32 %v2644, 1.0
    %v2702 = vadd.f32 %v2646, 1.0
    %v2703 = vadd.f32 %v2648, 1.0
    %v2704 = vadd.f32 %v2650, 1.0
    %v2705 = vadd.f32 %v2652, 1.0
    %v2706 = vadd.f32 %v2654, 1.0
    %v2707 = vadd.f32 %v2656, 1.0
    %v2708 = vadd.f32 %v2658, 1.0
    %v2709 = vadd.f32 %v2660, 1.0
    %v2710 = vadd.f32 %v2662, 1.0
    %v2711 = vrcp.pop %v2663
    %v2712 = vmul.f32 1.0, %v2711
    %v2713 = vrcp.pop %v2664
    %v2714 = vmul.f32 1.0, %v2713
    %v2715 = vrcp.pop %v2665
    %v2716 = vmul.f32 1.0, %v2715
    %v2717 = vrcp.pop %v2666
    %v2718 = vmul.f32 1.0, %v2717
    %v2719 = vrcp.pop %v2667
    %v2720 = vmul.f32 1.0, %v2719
    %v2721 = vrcp.pop %v2668
    %v2722 = vmul.f32 1.0, %v2721
    %v2723 = vrcp.pop %v2669
    %v2724 = vmul.f32 1.0, %v2723
    %v2725 = vrcp.pop %v2670
    %v2726 = vmul.f32 1.0, %v2725
    %v2727 = vrcp.pop %v2671
    %v2728 = vmul.f32 1.0, %v2727
    %v2729 = vrcp.pop %v2672
    %v2730 = vmul.f32 1.0, %v2729
    %v2731 = vrcp.pop %v2673
    %v2732 = vmul.f32 1.0, %v2731
    %v2733 = vrcp.pop %v2674
    %v2734 = vmul.f32 1.0, %v2733
    %v2735 = vrcp.pop %v2675
    %v2736 = vmul.f32 1.0, %v2735
    %v2737 = vrcp.pop %v2676
    %v2738 = vmul.f32 1.0, %v2737
    %v2739 = vrcp.pop %v2677
    %v2740 = vmul.f32 1.0, %v2739
    %v2741 = vrcp.pop %v2678
    %v2742 = vmul.f32 1.0, %v2741
    %v2743 = vrcp.pop %v2679
    %v2744 = vmul.f32 1.0, %v2743
    %v2745 = vrcp.pop %v2680
    %v2746 = vmul.f32 1.0, %v2745
    %v2747 = vrcp.pop %v2681
    %v2748 = vmul.f32 1.0, %v2747
    %v2749 = vrcp.pop %v2682
    %v2750 = vmul.f32 1.0, %v2749
    %v2751 = vrcp.pop %v2683
    %v2752 = vmul.f32 1.0, %v2751
    %v2753 = vrcp.pop %v2684
    %v2754 = vmul.f32 1.0, %v2753
    %v2755 = vrcp.pop %v2685
    %v2756 = vmul.f32 1.0, %v2755
    %v2757 = vrcp.pop %v2686
    %v2758 = vmul.f32 1.0, %v2757
    %v2759 = vrcp.pop %v2687
    %v2760 = vmul.f32 1.0, %v2759
    %v2761 = vrcp.pop %v2688
    %v2762 = vmul.f32 1.0, %v2761
    %v2763 = vrcp.pop %v2689
    %v2764 = vmul.f32 1.0, %v2763
    %v2765 = vrcp.pop %v2690
    %v2766 = vmul.f32 1.0, %v2765
    %v2767 = vrcp.pop %v2691
    %v2768 = vmul.f32 1.0, %v2767
    %v2769 = vrcp.pop %v2692
    %v2770 = vmul.f32 1.0, %v2769
    %v2771 = vrcp.pop %v2693
    %v2772 = vmul.f32 1.0, %v2771
    %v2773 = vrcp.pop %v2694
    %v2774 = vmul.f32 1.0, %v2773
    %v2775 = vrcp.pop %v2695
    %v2776 = vmul.f32 1.0, %v2775
    %v2777 = vrcp.pop %v2696
    %v2778 = vmul.f32 1.0, %v2777
    %v2779 = vrcp.pop %v2697
    %v2780 = vmul.f32 1.0, %v2779
    %v2781 = vrcp.pop %v2698
    %v2782 = vmul.f32 1.0, %v2781
    %v2783 = vrcp.pop %v2699
    %v2784 = vmul.f32 1.0, %v2783
    %v2785 = vrcp.pop %v2700
    %v2786 = vmul.f32 1.0, %v2785
    %v2787 = vrcp.pop %v2701
    %v2788 = vmul.f32 1.0, %v2787
    %v2789 = vrcp.pop %v2702
    %v2790 = vmul.f32 1.0, %v2789
    %v2791 = vrcp.pop %v2703
    %v2792 = vmul.f32 1.0, %v2791
    %v2793 = vrcp.pop %v2704
    %v2794 = vmul.f32 1.0, %v2793
    %v2795 = vrcp.pop %v2705
    %v2796 = vmul.f32 1.0, %v2795
    %v2797 = vrcp.pop %v2706
    %v2798 = vmul.f32 1.0, %v2797
    %v2799 = vrcp.pop %v2707
    %v2800 = vmul.f32 1.0, %v2799
    %v2801 = vrcp.pop %v2708
    %v2802 = vmul.f32 1.0, %v2801
    %v2803 = vrcp.pop %v2709
    %v2804 = vmul.f32 1.0, %v2803
    %v2805 = vrcp.pop %v2710
    %v2806 = vmul.f32 1.0, %v2805
    %v2807 = vadd.f32 %v2712, %v2744
    %v2808 = vadd.f32 %v2714, %v2746
    %v2809 = vadd.f32 %v2716, %v2748
    %v2810 = vadd.f32 %v2718, %v2750
    %v2811 = vadd.f32 %v2720, %v2752
    %v2812 = vadd.f32 %v2722, %v2754
    %v2813 = vadd.f32 %v2724, %v2756
    %v2814 = vadd.f32 %v2726, %v2758
    %v2815 = vadd.f32 %v2728, %v2760
    %v2816 = vadd.f32 %v2730, %v2762
    %v2817 = vadd.f32 %v2732, %v2764
    %v2818 = vadd.f32 %v2734, %v2766
    %v2819 = vadd.f32 %v2736, %v2768
    %v2820 = vadd.f32 %v2738, %v2770
    %v2821 = vadd.f32 %v2740, %v2772
    %v2822 = vadd.f32 %v2742, %v2774
    %v2823 = vadd.f32 %v2807, %v2776
    %v2824 = vadd.f32 %v2808, %v2778
    %v2825 = vadd.f32 %v2809, %v2780
    %v2826 = vadd.f32 %v2810, %v2782
    %v2827 = vadd.f32 %v2811, %v2784
    %v2828 = vadd.f32 %v2812, %v2786
    %v2829 = vadd.f32 %v2813, %v2788
    %v2830 = vadd.f32 %v2814, %v2790
    %v2831 = vadd.f32 %v2815, %v2792
    %v2832 = vadd.f32 %v2816, %v2794
    %v2833 = vadd.f32 %v2817, %v2796
    %v2834 = vadd.f32 %v2818, %v2798
    %v2835 = vadd.f32 %v2819, %v2800
    %v2836 = vadd.f32 %v2820, %v2802
    %v2837 = vadd.f32 %v2821, %v2804
    %v2838 = vadd.f32 %v2822, %v2806
    %v2839 = vmul.f32 %v39, %v2823
    %v2840 = vmul.f32 %v40, %v2824
    %v2841 = vmul.f32 %v41, %v2825
    %v2842 = vmul.f32 %v42, %v2826
    %v2843 = vmul.f32 %v43, %v2827
    %v2844 = vmul.f32 %v44, %v2828
    %v2845 = vmul.f32 %v45, %v2829
    %v2846 = vmul.f32 %v46, %v2830
    %v2847 = vmul.f32 %v47, %v2831
    %v2848 = vmul.f32 %v48, %v2832
    %v2849 = vmul.f32 %v49, %v2833
    %v2850 = vmul.f32 %v50, %v2834
    %v2851 = vmul.f32 %v51, %v2835
    %v2852 = vmul.f32 %v52, %v2836
    %v2853 = vmul.f32 %v53, %v2837
    %v2854 = vmul.f32 %v54, %v2838
    %2855 = vst [vmem:[#allocation2] sm:$0xff] %v2839
    %2856 = vst [vmem:[#allocation2 + $0x8] sm:$0xff] %v2840
    %2857 = vst [vmem:[#allocation2 + $0x10] sm:$0xff] %v2841
    %2858 = vst [vmem:[#allocation2 + $0x18] sm:$0xff] %v2842
    %2859 = vst [vmem:[#allocation2 + $0x20] sm:$0xff] %v2843
    %2860 = vst [vmem:[#allocation2 + $0x28] sm:$0xff] %v2844
    %2861 = vst [vmem:[#allocation2 + $0x30] sm:$0xff] %v2845
    %2862 = vst [vmem:[#allocation2 + $0x38] sm:$0xff] %v2846
    %2863 = vst [vmem:[#allocation2 + $0x40] sm:$0xff] %v2847
    %2864 = vst [vmem:[#allocation2 + $0x48] sm:$0xff] %v2848
    %2865 = vst [vmem:[#allocation2 + $0x50] sm:$0xff] %v2849
    %2866 = vst [vmem:[#allocation2 + $0x58] sm:$0xff] %v2850
    %2867 = vst [vmem:[#allocation2 + $0x60] sm:$0xff] %v2851
    %2868 = vst [vmem:[#allocation2 + $0x68] sm:$0xff] %v2852
    %2869 = vst [vmem:[#allocation2 + $0x70] sm:$0xff] %v2853
    %2870 = vst [vmem:[#allocation2 + $0x78] sm:$0xff] %v2854
    // Predicated region
    $region46: #{tpu_custom_call.1} parent=1 // pred_check
      _
    $region47: #{tpu_custom_call.1} parent=1 // pred_check_branch
      %2872 = sbr.rel (0) target = $region49
    $region48: #{tpu_custom_call.1} parent=1 // pred_region
      %s2874 = ssub.s32 2048, 2048
      %2875 = vsyncadd [#allocation3], %s2874
      %s2876 = sshll.u32 [#allocation2], 4
      %s2877 = int_to_ptr.vmem [resolvable:$true] %s2876
      %2882 = dma.vmem_to_hbm [thread:$0]  %s2877, 2048, %s11, [#allocation3], 512, 512, 32
    $region49: #{tpu_custom_call.1} parent=1 // pred_fallthru
      _
    // Predicated region
    $region50: #{tpu_custom_call.1} parent=1 // pred_check
      _
    $region51: #{tpu_custom_call.1} parent=1 // pred_check_branch
      %2884 = sbr.rel (0) target = $region53
    $region52: #{tpu_custom_call.1} parent=1 // pred_region
      %2885 = dma.done [#allocation3], 2048
    $region53: #{tpu_custom_call.1} parent=1 // pred_fallthru
      _
    %2886 = vsyncpa [#allocation3], 1

</llo_original>
